<compile_context>
chip_gen: v6e
topology: v6e:2x2x1
jax: 0.10.0
libtpu: 0.0.40
codegen_flags: <defaults>
</compile_context>

<pallas_src>
import functools

import jax
import jax.numpy as jnp
import numpy as np
from jax import lax
from jax.experimental import pallas as pl
from jax.experimental.pallas import tpu as pltpu


def _round_up(x, m):
    return (x + m - 1) // m * m


# ----------------------------- Pallas kernels ------------------------------

def _mm_bias_kernel(x_ref, w_ref, b_ref, o_ref, *, relu):
    """o = act(x @ w + b).  Grid = (M-tiles,); full-K single pass, f32 MXU acc."""
    acc = jnp.dot(x_ref[...], w_ref[...], preferred_element_type=jnp.float32)
    r = acc + b_ref[...]
    if relu:
        r = jnp.maximum(r, 0.0)
    o_ref[...] = r.astype(o_ref.dtype)


def _conv3_res_kernel(p3_ref, w3c_ref, b3_ref, mask_ref, rw3_ref, rw1_ref,
                      o_ref, cur_ref, t_ref, *, n_layers, deltas, guard,
                      pp, c, rh, oh, ow, wp):
    """conv3 (as a patch matmul) + whole residual stack, fully VMEM-resident.

    Grid = (batch,): each step handles one image.  The conv3 output is
    scattered into the padded-rows layout (pp = (oh+2)*(ow+2) rows, c lanes);
    halo rows act as the 3x3 conv's zero padding and are re-zeroed every layer
    via the mask.  The 3x3 conv is one deep matmul against 9 concatenated
    row-shifted windows; all ReLUs / the residual add are fused, weights (bf16)
    are read once, accumulations are f32.
    """
    # conv3: (rows_pad, K3) @ (K3, c) + bias  (no ReLU before the stack)
    y = jnp.dot(p3_ref[0], w3c_ref[...],
                preferred_element_type=jnp.float32) + b3_ref[...]

    # scatter conv3 rows into the interior of the padded-rows map; halos = 0
    cur_ref[...] = jnp.zeros_like(cur_ref)
    for r in range(oh):
        dst = (r + 1) * wp + 1
        cur_ref[dst:dst + ow, :] = y[r * ow:(r + 1) * ow, :]

    t_ref[...] = jnp.zeros_like(t_ref)                 # zero guard rows once
    # hoist halo-mask broadcast out of the unrolled layer loop
    mask_b = jnp.broadcast_to(mask_ref[...], (pp, c)).astype(jnp.bfloat16)

    def layer(_, carry):
        # masked ReLU of current map, staged once as bf16 (halo rows -> 0)
        t_ref[guard:guard + pp, :] = (
            jnp.maximum(cur_ref[...], 0.0).astype(jnp.bfloat16) * mask_b)
        # 9 statically row-shifted windows -> one (pp, 9*c) operand -> one
        # deep K = 9*c matmul on the MXU.
        wins = jnp.concatenate(
            [t_ref[guard + d:guard + d + pp, :] for d in deltas], axis=-1)
        h1 = jnp.dot(wins, rw3_ref[...], preferred_element_type=jnp.float32)
        h2 = jnp.maximum(h1, 0.0).astype(jnp.bfloat16)
        cur_ref[...] = cur_ref[...] + jnp.dot(h2, rw1_ref[...],
                                              preferred_element_type=jnp.float32)
        return carry

    lax.fori_loop(0, n_layers, layer, 0, unroll=True)

    out = jnp.maximum(cur_ref[...], 0.0)               # final ReLU of the stack
    o_ref[0] = jnp.concatenate(
        [out[(r + 1) * wp + 1:(r + 1) * wp + 1 + ow, :] for r in range(oh)],
        axis=0)


# ----------------------------- Pallas wrappers -----------------------------

def pallas_matmul_bias(x, w, b, *, relu, out_dtype=jnp.float32):
    """act(x @ w + b) on the MXU: bf16 operands, f32 accumulate + epilogue.

    M is tiled ("parallel": both v7x TensorCores), K is a single full-extent
    block (no zero padding, no accumulator round trip), N is zero-padded to a
    lane-dense multiple of 128 (unmasked vst).
    """
    M, K = x.shape
    N = w.shape[1]

    n_pad = _round_up(N, 128)
    # 256 fills the 256-deep MXU on v6e/v7x; on v5e it is just two 128-row
    # passes, so a single default is fine.
    tm = min(256, _round_up(M, 8))
    m_pad = _round_up(M, tm)

    xb = x.astype(jnp.bfloat16)
    if m_pad != M:
        xb = jnp.pad(xb, ((0, m_pad - M), (0, 0)))
    wb = jnp.pad(w.astype(jnp.bfloat16), ((0, 0), (0, n_pad - N)))
    bb = jnp.pad(b.astype(jnp.float32), (0, n_pad - N)).reshape(1, n_pad)

    out = pl.pallas_call(
        functools.partial(_mm_bias_kernel, relu=relu),
        out_shape=jax.ShapeDtypeStruct((m_pad, n_pad), out_dtype),
        grid=(m_pad // tm,),
        in_specs=[pl.BlockSpec((tm, K), lambda i: (i, 0)),
                  pl.BlockSpec((K, n_pad), lambda i: (0, 0)),
                  pl.BlockSpec((1, n_pad), lambda i: (0, 0))],
        out_specs=pl.BlockSpec((tm, n_pad), lambda i: (i, 0)),
        compiler_params=pltpu.CompilerParams(
            dimension_semantics=("parallel",)),
    )(xb, wb, bb)
    return out[:M, :N]


def _im2col(x_nhwc, kh, kw, stride):
    """Extract conv patches (valid padding). Returns ([N*OH*OW, kh*kw*C], dims)."""
    n, h, w, c = x_nhwc.shape
    oh = (h - kh) // stride + 1
    ow = (w - kw) // stride + 1
    cols = [x_nhwc[:, i:i + stride * oh:stride, j:j + stride * ow:stride, :]
            for i in range(kh) for j in range(kw)]
    patches = jnp.concatenate(cols, axis=-1)              # (n, oh, ow, kh*kw*c)
    return patches.reshape(n * oh * ow, kh * kw * c), (n, oh, ow)


def conv2d_pallas(x_nhwc, w_hwio, b, *, stride, relu, out_dtype=jnp.bfloat16):
    kh, kw, ic, oc = w_hwio.shape
    cols, (n, oh, ow) = _im2col(x_nhwc, kh, kw, stride)    # bf16 patches
    out = pallas_matmul_bias(cols, w_hwio.reshape(kh * kw * ic, oc), b,
                             relu=relu, out_dtype=out_dtype)
    return out.reshape(n, oh, ow, oc)


def conv3_res_stack_pallas(x_nhwc, w3_hwio, b3, rw3_hwio, rw1_io, n_res_layers):
    """Fused conv3 (3x3, stride 2) + residual stack in one pallas_call."""
    kh, kw, ic, c = w3_hwio.shape                          # 3, 3, 32, 64
    rh = rw3_hwio.shape[-1]
    cols, (n, oh, ow) = _im2col(x_nhwc, kh, kw, 2)         # bf16, (n*oh*ow, 9*ic)
    k3 = kh * kw * ic
    rows = oh * ow
    rows_pad = _round_up(rows, 8)
    p3 = jnp.pad(cols.reshape(n, rows, k3),
                 ((0, 0), (0, rows_pad - rows), (0, 0)))   # bf16

    hp, wp = oh + 2, ow + 2
    pp = hp * wp
    guard = max(8, _round_up(wp + 1, 8))
    # halo mask for ONE image in padded-rows layout
    ii = (jnp.arange(hp) >= 1) & (jnp.arange(hp) <= oh)
    jj = (jnp.arange(wp) >= 1) & (jnp.arange(wp) <= ow)
    mask = (ii[:, None] & jj[None, :]).reshape(pp, 1).astype(jnp.float32)

    w3c = w3_hwio.reshape(k3, c).astype(jnp.bfloat16)
    b3_2d = b3.astype(jnp.float32).reshape(1, c)
    rw3 = rw3_hwio.reshape(9 * c, rh).astype(jnp.bfloat16)  # rows ordered (tap, ic)
    rw1 = rw1_io.astype(jnp.bfloat16)                       # (rh, c)
    # row shift for tap (di, dj) in the padded-rows layout
    deltas = tuple((di - 1) * wp + (dj - 1)
                   for di in range(3) for dj in range(3))

    out = pl.pallas_call(
        functools.partial(_conv3_res_kernel, n_layers=n_res_layers,
                          deltas=deltas, guard=guard, pp=pp, c=c, rh=rh,
                          oh=oh, ow=ow, wp=wp),
        out_shape=jax.ShapeDtypeStruct((n, rows, c), jnp.float32),
        grid=(n,),
        in_specs=[pl.BlockSpec((1, rows_pad, k3), lambda b: (b, 0, 0)),
                  pl.BlockSpec((k3, c), lambda b: (0, 0)),
                  pl.BlockSpec((1, c), lambda b: (0, 0)),
                  pl.BlockSpec((pp, 1), lambda b: (0, 0)),
                  pl.BlockSpec((9 * c, rh), lambda b: (0, 0)),
                  pl.BlockSpec((rh, c), lambda b: (0, 0))],
        out_specs=pl.BlockSpec((1, rows, c), lambda b: (b, 0, 0)),
        scratch_shapes=[pltpu.VMEM((pp, c), jnp.float32),
                        pltpu.VMEM((pp + 2 * guard, c), jnp.bfloat16)],
        compiler_params=pltpu.CompilerParams(
            dimension_semantics=("parallel",)),
    )(p3, w3c, b3_2d, mask, rw3, rw1)
    return out.reshape(n, oh, ow, c)


# --------------------------------- glue ------------------------------------

@functools.partial(jax.jit, static_argnames=("n_res_layers",))
def encoder_forward(params, x_nchw, n_res_layers):
    x = jnp.transpose(x_nchw, (0, 2, 3, 1)).astype(jnp.bfloat16)   # NCHW -> NHWC
    x = conv2d_pallas(x, params["w1"], params["b1"], stride=4, relu=True)
    x = conv2d_pallas(x, params["w2"], params["b2"], stride=2, relu=True)
    x = conv3_res_stack_pallas(x, params["w3"], params["b3"],
                               params["rw3"], params["rw1"], n_res_layers)
    return jnp.transpose(x, (0, 3, 1, 2))                          # NHWC -> NCHW


# --------------------------- parameter init --------------------------------

def init_params(key, in_dim, res_h_dim):
    ks = jax.random.split(key, 8)

    def conv_w(k, kh, kw, ic, oc):
        fan_in = kh * kw * ic
        return jax.random.normal(k, (kh, kw, ic, oc), jnp.float32) / jnp.sqrt(fan_in)

    return dict(
        w1=conv_w(ks[0], 8, 8, in_dim, 32),
        b1=0.01 * jax.random.normal(ks[1], (32,), jnp.float32),
        w2=conv_w(ks[2], 4, 4, 32, 32),
        b2=0.01 * jax.random.normal(ks[3], (32,), jnp.float32),
        w3=conv_w(ks[4], 3, 3, 32, 64),
        b3=0.01 * jax.random.normal(ks[5], (64,), jnp.float32),
        # one shared ResidualLayer (matches `[ResidualLayer(...)] * n` in PyTorch)
        rw3=conv_w(ks[6], 3, 3, 64, res_h_dim),                         # 3x3, no bias
        rw1=conv_w(ks[7], 1, 1, res_h_dim, 64).reshape(res_h_dim, 64),  # 1x1, no bias
    )


# ------------------------- pure-JAX reference ------------------------------

def _ref_conv(x_nchw, w_hwio, b, stride, pad):
    w_oihw = jnp.transpose(w_hwio, (3, 2, 0, 1))
    out = lax.conv_general_dilated(
        x_nchw, w_oihw, (stride, stride), [(pad, pad), (pad, pad)],
        dimension_numbers=("NCHW", "OIHW", "NCHW"))
    return out + b.reshape(1, -1, 1, 1)


def encoder_ref(params, x, n_res_layers):
    h = jax.nn.relu(_ref_conv(x, params["w1"], params["b1"], 4, 0))
    h = jax.nn.relu(_ref_conv(h, params["w2"], params["b2"], 2, 0))
    h = _ref_conv(h, params["w3"], params["b3"], 2, 0)
    rh = params["rw3"].shape[-1]
    zero_rh = jnp.zeros((rh,), jnp.float32)
    zero_64 = jnp.zeros((64,), jnp.float32)
    w1_hwio = params["rw1"].reshape(1, 1, rh, 64)
    for _ in range(n_res_layers):
        t = jax.nn.relu(h)
        t = jax.nn.relu(_ref_conv(t, params["rw3"], zero_rh, 1, 1))
        t = _ref_conv(t, w1_hwio, zero_64, 1, 0)
        h = h + t
    return jax.nn.relu(h)


# --------------------------------- main -------------------------------------

if __name__ == "__main__":
    in_dim, h_dim, res_h_dim, n_res_layers = 3, 64, 32, 2
    key = jax.random.PRNGKey(0)
    kp, kx = jax.random.split(key)
    params = init_params(kp, in_dim, res_h_dim)

    # 64x64 input: 64 -> 15 (k8,s4) -> 6 (k4,s2) -> 2 (k3,s2)
    x = jax.random.normal(kx, (2, in_dim, 64, 64), jnp.float32)

    out = encoder_forward(params, x, n_res_layers=n_res_layers)
    out = jax.block_until_ready(out)
    assert out.shape == (2, 64, 2, 2), out.shape

    ref = encoder_ref(params, x, n_res_layers)
    np.testing.assert_allclose(np.asarray(out), np.asarray(ref),
                               rtol=2e-2, atol=2e-2)
    print("KERNEL_OK")
</pallas_src>

<mosaic_0001>
module attributes {stable_mosaic.version = 11 : i64} {
  func.func @_mm_bias_kernel(%arg0: i32, %arg1: memref<256x192xbf16, #tpu.memory_space<vmem>>, %arg2: memref<192x128xbf16, #tpu.memory_space<vmem>>, %arg3: memref<1x128xf32, #tpu.memory_space<vmem>>, %arg4: memref<256x128xbf16, #tpu.memory_space<vmem>>) attributes {dimension_semantics = [#tpu.dimension_semantics<parallel>], iteration_bounds = array<i64: 2>, scalar_prefetch = 0 : i64, scratch_operands = 0 : i64, tpu.core_type = #tpu.core_type<tc>, window_params = [{transform_indices = @transform_0, window_bounds = array<i64: 256, 192>}, {pipeline_mode = #tpu.pipeline_mode<synchronous>, transform_indices = @transform_1, window_bounds = array<i64: 192, 128>}, {pipeline_mode = #tpu.pipeline_mode<synchronous>, transform_indices = @transform_2, window_bounds = array<i64: 1, 128>}, {transform_indices = @transform_3, window_bounds = array<i64: 256, 128>}]} {
    %c0 = arith.constant 0 : index
    %c0_0 = arith.constant 0 : index
    %0 = vector.load %arg1[%c0, %c0_0] : memref<256x192xbf16, #tpu.memory_space<vmem>>, vector<256x192xbf16>
    %c0_1 = arith.constant 0 : index
    %c0_2 = arith.constant 0 : index
    %1 = vector.load %arg2[%c0_1, %c0_2] : memref<192x128xbf16, #tpu.memory_space<vmem>>, vector<192x128xbf16>
    %cst = arith.constant dense<0.000000e+00> : vector<256x128xf32>
    %2 = tpu.matmul %0, %1, %cst {dimension_numbers = #tpu.dot_dimension_numbers<[1], [0], [0], [1], [0, 0, 1, 1], [], []>} : vector<256x192xbf16>, vector<192x128xbf16>, vector<256x128xf32> -> vector<256x128xf32>
    %c0_3 = arith.constant 0 : index
    %c0_4 = arith.constant 0 : index
    %3 = vector.load %arg3[%c0_3, %c0_4] : memref<1x128xf32, #tpu.memory_space<vmem>>, vector<1x128xf32>
    %4 = vector.broadcast %3 : vector<1x128xf32> to vector<256x128xf32>
    %5 = arith.addf %2, %4 : vector<256x128xf32>
    %cst_5 = arith.constant 0.000000e+00 : f32
    %6 = vector.broadcast %cst_5 : f32 to vector<256x128xf32>
    %7 = arith.maximumf %5, %6 : vector<256x128xf32>
    %8 = arith.truncf %7 : vector<256x128xf32> to vector<256x128xbf16>
    %c0_6 = arith.constant 0 : index
    %c0_7 = arith.constant 0 : index
    %9 = vector.load %arg4[%c0_6, %c0_7] : memref<256x128xbf16, #tpu.memory_space<vmem>>, vector<256x128xbf16>
    tpu.vector_store %arg4[%c0_6, %c0_7], %8 {strides = array<i32>} : memref<256x128xbf16, #tpu.memory_space<vmem>>, vector<256x128xbf16>,
    return
  }
  func.func @transform_0(%arg0: i32) -> (i32, i32) {
    %c0_i32 = arith.constant 0 : i32
    %c0_i32_0 = arith.constant 0 : i32
    return %arg0, %c0_i32 : i32, i32
  }
  func.func @transform_1(%arg0: i32) -> (i32, i32) {
    %c0_i32 = arith.constant 0 : i32
    %c0_i32_0 = arith.constant 0 : i32
    %c0_i32_1 = arith.constant 0 : i32
    return %c0_i32, %c0_i32_0 : i32, i32
  }
  func.func @transform_2(%arg0: i32) -> (i32, i32) {
    %c0_i32 = arith.constant 0 : i32
    %c0_i32_0 = arith.constant 0 : i32
    %c0_i32_1 = arith.constant 0 : i32
    return %c0_i32, %c0_i32_0 : i32, i32
  }
  func.func @transform_3(%arg0: i32) -> (i32, i32) {
    %c0_i32 = arith.constant 0 : i32
    %c0_i32_0 = arith.constant 0 : i32
    return %arg0, %c0_i32 : i32, i32
  }
}

module attributes {stable_mosaic.version = 11 : i64} {
  func.func @_mm_bias_kernel(%arg0: i32, %arg1: memref<72x512xbf16, #tpu.memory_space<vmem>>, %arg2: memref<512x128xbf16, #tpu.memory_space<vmem>>, %arg3: memref<1x128xf32, #tpu.memory_space<vmem>>, %arg4: memref<72x128xbf16, #tpu.memory_space<vmem>>) attributes {dimension_semantics = [#tpu.dimension_semantics<parallel>], iteration_bounds = array<i64: 1>, scalar_prefetch = 0 : i64, scratch_operands = 0 : i64, tpu.core_type = #tpu.core_type<tc>, window_params = [{transform_indices = @transform_0, window_bounds = array<i64: 72, 512>}, {pipeline_mode = #tpu.pipeline_mode<synchronous>, transform_indices = @transform_1, window_bounds = array<i64: 512, 128>}, {pipeline_mode = #tpu.pipeline_mode<synchronous>, transform_indices = @transform_2, window_bounds = array<i64: 1, 128>}, {transform_indices = @transform_3, window_bounds = array<i64: 72, 128>}]} {
    %c0 = arith.constant 0 : index
    %c0_0 = arith.constant 0 : index
    %0 = vector.load %arg1[%c0, %c0_0] : memref<72x512xbf16, #tpu.memory_space<vmem>>, vector<72x512xbf16>
    %c0_1 = arith.constant 0 : index
    %c0_2 = arith.constant 0 : index
    %1 = vector.load %arg2[%c0_1, %c0_2] : memref<512x128xbf16, #tpu.memory_space<vmem>>, vector<512x128xbf16>
    %cst = arith.constant dense<0.000000e+00> : vector<72x128xf32>
    %2 = tpu.matmul %0, %1, %cst {dimension_numbers = #tpu.dot_dimension_numbers<[1], [0], [0], [1], [0, 0, 1, 1], [], []>} : vector<72x512xbf16>, vector<512x128xbf16>, vector<72x128xf32> -> vector<72x128xf32>
    %c0_3 = arith.constant 0 : index
    %c0_4 = arith.constant 0 : index
    %3 = vector.load %arg3[%c0_3, %c0_4] : memref<1x128xf32, #tpu.memory_space<vmem>>, vector<1x128xf32>
    %4 = vector.broadcast %3 : vector<1x128xf32> to vector<72x128xf32>
    %5 = arith.addf %2, %4 : vector<72x128xf32>
    %cst_5 = arith.constant 0.000000e+00 : f32
    %6 = vector.broadcast %cst_5 : f32 to vector<72x128xf32>
    %7 = arith.maximumf %5, %6 : vector<72x128xf32>
    %8 = arith.truncf %7 : vector<72x128xf32> to vector<72x128xbf16>
    %c0_6 = arith.constant 0 : index
    %c0_7 = arith.constant 0 : index
    %9 = vector.load %arg4[%c0_6, %c0_7] : memref<72x128xbf16, #tpu.memory_space<vmem>>, vector<72x128xbf16>
    tpu.vector_store %arg4[%c0_6, %c0_7], %8 {strides = array<i32>} : memref<72x128xbf16, #tpu.memory_space<vmem>>, vector<72x128xbf16>,
    return
  }
  func.func @transform_0(%arg0: i32) -> (i32, i32) {
    %c0_i32 = arith.constant 0 : i32
    %c0_i32_0 = arith.constant 0 : i32
    return %arg0, %c0_i32 : i32, i32
  }
  func.func @transform_1(%arg0: i32) -> (i32, i32) {
    %c0_i32 = arith.constant 0 : i32
    %c0_i32_0 = arith.constant 0 : i32
    %c0_i32_1 = arith.constant 0 : i32
    return %c0_i32, %c0_i32_0 : i32, i32
  }
  func.func @transform_2(%arg0: i32) -> (i32, i32) {
    %c0_i32 = arith.constant 0 : i32
    %c0_i32_0 = arith.constant 0 : i32
    %c0_i32_1 = arith.constant 0 : i32
    return %c0_i32, %c0_i32_0 : i32, i32
  }
  func.func @transform_3(%arg0: i32) -> (i32, i32) {
    %c0_i32 = arith.constant 0 : i32
    %c0_i32_0 = arith.constant 0 : i32
    return %arg0, %c0_i32 : i32, i32
  }
}

module attributes {stable_mosaic.version = 11 : i64} {
  func.func @_conv3_res_kernel(%arg0: i32, %arg1: memref<1x8x288xbf16, #tpu.memory_space<vmem>>, %arg2: memref<288x64xbf16, #tpu.memory_space<vmem>>, %arg3: memref<1x64xf32, #tpu.memory_space<vmem>>, %arg4: memref<16x1xf32, #tpu.memory_space<vmem>>, %arg5: memref<576x32xbf16, #tpu.memory_space<vmem>>, %arg6: memref<32x64xbf16, #tpu.memory_space<vmem>>, %arg7: memref<1x4x64xf32, #tpu.memory_space<vmem>>, %arg8: memref<16x64xf32, #tpu.memory_space<vmem>>, %arg9: memref<32x64xbf16, #tpu.memory_space<vmem>>) attributes {dimension_semantics = [#tpu.dimension_semantics<parallel>], iteration_bounds = array<i64: 2>, scalar_prefetch = 0 : i64, scratch_operands = 2 : i64, tpu.core_type = #tpu.core_type<tc>, window_params = [{transform_indices = @transform_0, window_bounds = array<i64: 1, 8, 288>}, {pipeline_mode = #tpu.pipeline_mode<synchronous>, transform_indices = @transform_1, window_bounds = array<i64: 288, 64>}, {pipeline_mode = #tpu.pipeline_mode<synchronous>, transform_indices = @transform_2, window_bounds = array<i64: 1, 64>}, {pipeline_mode = #tpu.pipeline_mode<synchronous>, transform_indices = @transform_3, window_bounds = array<i64: 16, 1>}, {pipeline_mode = #tpu.pipeline_mode<synchronous>, transform_indices = @transform_4, window_bounds = array<i64: 576, 32>}, {pipeline_mode = #tpu.pipeline_mode<synchronous>, transform_indices = @transform_5, window_bounds = array<i64: 32, 64>}, {transform_indices = @transform_6, window_bounds = array<i64: 1, 4, 64>}]} {
    %c0 = arith.constant 0 : index
    %c0_0 = arith.constant 0 : index
    %c0_1 = arith.constant 0 : index
    %0 = vector.load %arg1[%c0, %c0_0, %c0_1] : memref<1x8x288xbf16, #tpu.memory_space<vmem>>, vector<1x8x288xbf16>
    %1 = vector.shape_cast %0 : vector<1x8x288xbf16> to vector<8x288xbf16>
    %c0_2 = arith.constant 0 : index
    %c0_3 = arith.constant 0 : index
    %2 = vector.load %arg2[%c0_2, %c0_3] : memref<288x64xbf16, #tpu.memory_space<vmem>>, vector<288x64xbf16>
    %cst = arith.constant dense<0.000000e+00> : vector<8x64xf32>
    %3 = tpu.matmul %1, %2, %cst {dimension_numbers = #tpu.dot_dimension_numbers<[1], [0], [0], [1], [0, 0, 1, 1], [], []>} : vector<8x288xbf16>, vector<288x64xbf16>, vector<8x64xf32> -> vector<8x64xf32>
    %c0_4 = arith.constant 0 : index
    %c0_5 = arith.constant 0 : index
    %4 = vector.load %arg3[%c0_4, %c0_5] : memref<1x64xf32, #tpu.memory_space<vmem>>, vector<1x64xf32>
    %5 = vector.broadcast %4 : vector<1x64xf32> to vector<8x64xf32>
    %6 = arith.addf %3, %5 : vector<8x64xf32>
    %cst_6 = arith.constant 0.000000e+00 : f32
    %7 = vector.broadcast %cst_6 : f32 to vector<16x64xf32>
    %c0_7 = arith.constant 0 : index
    %c0_8 = arith.constant 0 : index
    %8 = vector.load %arg8[%c0_7, %c0_8] : memref<16x64xf32, #tpu.memory_space<vmem>>, vector<16x64xf32>
    tpu.vector_store %arg8[%c0_7, %c0_8], %7 {strides = array<i32>} : memref<16x64xf32, #tpu.memory_space<vmem>>, vector<16x64xf32>,
    %9 = vector.extract_strided_slice %6 {offsets = [0, 0], sizes = [2, 64], strides = [1, 1]} : vector<8x64xf32> to vector<2x64xf32>
    %c5 = arith.constant 5 : index
    %c0_9 = arith.constant 0 : index
    %10 = vector.load %arg8[%c5, %c0_9] : memref<16x64xf32, #tpu.memory_space<vmem>>, vector<2x64xf32>
    tpu.vector_store %arg8[%c5, %c0_9], %9 {strides = array<i32>} : memref<16x64xf32, #tpu.memory_space<vmem>>, vector<2x64xf32>,
    %11 = vector.extract_strided_slice %6 {offsets = [2, 0], sizes = [2, 64], strides = [1, 1]} : vector<8x64xf32> to vector<2x64xf32>
    %c9 = arith.constant 9 : index
    %c0_10 = arith.constant 0 : index
    %12 = vector.load %arg8[%c9, %c0_10] : memref<16x64xf32, #tpu.memory_space<vmem>>, vector<2x64xf32>
    tpu.vector_store %arg8[%c9, %c0_10], %11 {strides = array<i32>} : memref<16x64xf32, #tpu.memory_space<vmem>>, vector<2x64xf32>,
    %cst_11 = arith.constant 0.000000e+00 : bf16
    %13 = vector.broadcast %cst_11 : bf16 to vector<32x64xbf16>
    %c0_12 = arith.constant 0 : index
    %c0_13 = arith.constant 0 : index
    %14 = vector.load %arg9[%c0_12, %c0_13] : memref<32x64xbf16, #tpu.memory_space<vmem>>, vector<32x64xbf16>
    tpu.vector_store %arg9[%c0_12, %c0_13], %13 {strides = array<i32>} : memref<32x64xbf16, #tpu.memory_space<vmem>>, vector<32x64xbf16>,
    %c0_14 = arith.constant 0 : index
    %c0_15 = arith.constant 0 : index
    %15 = vector.load %arg4[%c0_14, %c0_15] : memref<16x1xf32, #tpu.memory_space<vmem>>, vector<16x1xf32>
    %16 = vector.shape_cast %15 : vector<16x1xf32> to vector<16x1xf32>
    %17 = vector.broadcast %16 : vector<16x1xf32> to vector<16x64xf32>
    %18 = arith.truncf %17 : vector<16x64xf32> to vector<16x64xbf16>
    %c0_i32 = arith.constant 0 : i32
    %c0_16 = arith.constant 0 : index
    %c0_17 = arith.constant 0 : index
    %19 = vector.load %arg8[%c0_16, %c0_17] : memref<16x64xf32, #tpu.memory_space<vmem>>, vector<16x64xf32>
    %cst_18 = arith.constant 0.000000e+00 : f32
    %20 = vector.broadcast %cst_18 : f32 to vector<16x64xf32>
    %21 = arith.maximumf %19, %20 : vector<16x64xf32>
    %22 = arith.truncf %21 : vector<16x64xf32> to vector<16x64xbf16>
    %23 = arith.mulf %22, %18 : vector<16x64xbf16>
    %c8 = arith.constant 8 : index
    %c0_19 = arith.constant 0 : index
    %24 = vector.load %arg9[%c8, %c0_19] : memref<32x64xbf16, #tpu.memory_space<vmem>>, vector<16x64xbf16>
    tpu.vector_store %arg9[%c8, %c0_19], %23 {strides = array<i32>} : memref<32x64xbf16, #tpu.memory_space<vmem>>, vector<16x64xbf16>,
    %c3 = arith.constant 3 : index
    %c0_20 = arith.constant 0 : index
    %25 = vector.load %arg9[%c3, %c0_20] : memref<32x64xbf16, #tpu.memory_space<vmem>>, vector<16x64xbf16>
    %c4 = arith.constant 4 : index
    %c0_21 = arith.constant 0 : index
    %26 = vector.load %arg9[%c4, %c0_21] : memref<32x64xbf16, #tpu.memory_space<vmem>>, vector<16x64xbf16>
    %c5_22 = arith.constant 5 : index
    %c0_23 = arith.constant 0 : index
    %27 = vector.load %arg9[%c5_22, %c0_23] : memref<32x64xbf16, #tpu.memory_space<vmem>>, vector<16x64xbf16>
    %c7 = arith.constant 7 : index
    %c0_24 = arith.constant 0 : index
    %28 = vector.load %arg9[%c7, %c0_24] : memref<32x64xbf16, #tpu.memory_space<vmem>>, vector<16x64xbf16>
    %c8_25 = arith.constant 8 : index
    %c0_26 = arith.constant 0 : index
    %29 = vector.load %arg9[%c8_25, %c0_26] : memref<32x64xbf16, #tpu.memory_space<vmem>>, vector<16x64xbf16>
    %c9_27 = arith.constant 9 : index
    %c0_28 = arith.constant 0 : index
    %30 = vector.load %arg9[%c9_27, %c0_28] : memref<32x64xbf16, #tpu.memory_space<vmem>>, vector<16x64xbf16>
    %c11 = arith.constant 11 : index
    %c0_29 = arith.constant 0 : index
    %31 = vector.load %arg9[%c11, %c0_29] : memref<32x64xbf16, #tpu.memory_space<vmem>>, vector<16x64xbf16>
    %c12 = arith.constant 12 : index
    %c0_30 = arith.constant 0 : index
    %32 = vector.load %arg9[%c12, %c0_30] : memref<32x64xbf16, #tpu.memory_space<vmem>>, vector<16x64xbf16>
    %c13 = arith.constant 13 : index
    %c0_31 = arith.constant 0 : index
    %33 = vector.load %arg9[%c13, %c0_31] : memref<32x64xbf16, #tpu.memory_space<vmem>>, vector<16x64xbf16>
    %34 = tpu.concatenate %25, %26, %27, %28, %29, %30, %31, %32, %33 in 1 : vector<16x64xbf16>, vector<16x64xbf16>, vector<16x64xbf16>, vector<16x64xbf16>, vector<16x64xbf16>, vector<16x64xbf16>, vector<16x64xbf16>, vector<16x64xbf16>, vector<16x64xbf16> -> vector<16x576xbf16>
    %c0_32 = arith.constant 0 : index
    %c0_33 = arith.constant 0 : index
    %35 = vector.load %arg5[%c0_32, %c0_33] : memref<576x32xbf16, #tpu.memory_space<vmem>>, vector<576x32xbf16>
    %cst_34 = arith.constant dense<0.000000e+00> : vector<16x32xf32>
    %36 = tpu.matmul %34, %35, %cst_34 {dimension_numbers = #tpu.dot_dimension_numbers<[1], [0], [0], [1], [0, 0, 1, 1], [], []>} : vector<16x576xbf16>, vector<576x32xbf16>, vector<16x32xf32> -> vector<16x32xf32>
    %cst_35 = arith.constant 0.000000e+00 : f32
    %37 = vector.broadcast %cst_35 : f32 to vector<16x32xf32>
    %38 = arith.maximumf %36, %37 : vector<16x32xf32>
    %39 = arith.truncf %38 : vector<16x32xf32> to vector<16x32xbf16>
    %c0_36 = arith.constant 0 : index
    %c0_37 = arith.constant 0 : index
    %40 = vector.load %arg8[%c0_36, %c0_37] : memref<16x64xf32, #tpu.memory_space<vmem>>, vector<16x64xf32>
    %c0_38 = arith.constant 0 : index
    %c0_39 = arith.constant 0 : index
    %41 = vector.load %arg6[%c0_38, %c0_39] : memref<32x64xbf16, #tpu.memory_space<vmem>>, vector<32x64xbf16>
    %cst_40 = arith.constant dense<0.000000e+00> : vector<16x64xf32>
    %42 = tpu.matmul %39, %41, %cst_40 {dimension_numbers = #tpu.dot_dimension_numbers<[1], [0], [0], [1], [0, 0, 1, 1], [], []>} : vector<16x32xbf16>, vector<32x64xbf16>, vector<16x64xf32> -> vector<16x64xf32>
    %43 = arith.addf %40, %42 : vector<16x64xf32>
    %c0_41 = arith.constant 0 : index
    %c0_42 = arith.constant 0 : index
    %44 = vector.load %arg8[%c0_41, %c0_42] : memref<16x64xf32, #tpu.memory_space<vmem>>, vector<16x64xf32>
    tpu.vector_store %arg8[%c0_41, %c0_42], %43 {strides = array<i32>} : memref<16x64xf32, #tpu.memory_space<vmem>>, vector<16x64xf32>,
    %c1_i32 = arith.constant 1 : i32
    %c0_43 = arith.constant 0 : index
    %c0_44 = arith.constant 0 : index
    %45 = vector.load %arg8[%c0_43, %c0_44] : memref<16x64xf32, #tpu.memory_space<vmem>>, vector<16x64xf32>
    %cst_45 = arith.constant 0.000000e+00 : f32
    %46 = vector.broadcast %cst_45 : f32 to vector<16x64xf32>
    %47 = arith.maximumf %45, %46 : vector<16x64xf32>
    %48 = arith.truncf %47 : vector<16x64xf32> to vector<16x64xbf16>
    %49 = arith.mulf %48, %18 : vector<16x64xbf16>
    %c8_46 = arith.constant 8 : index
    %c0_47 = arith.constant 0 : index
    %50 = vector.load %arg9[%c8_46, %c0_47] : memref<32x64xbf16, #tpu.memory_space<vmem>>, vector<16x64xbf16>
    tpu.vector_store %arg9[%c8_46, %c0_47], %49 {strides = array<i32>} : memref<32x64xbf16, #tpu.memory_space<vmem>>, vector<16x64xbf16>,
    %c3_48 = arith.constant 3 : index
    %c0_49 = arith.constant 0 : index
    %51 = vector.load %arg9[%c3_48, %c0_49] : memref<32x64xbf16, #tpu.memory_space<vmem>>, vector<16x64xbf16>
    %c4_50 = arith.constant 4 : index
    %c0_51 = arith.constant 0 : index
    %52 = vector.load %arg9[%c4_50, %c0_51] : memref<32x64xbf16, #tpu.memory_space<vmem>>, vector<16x64xbf16>
    %c5_52 = arith.constant 5 : index
    %c0_53 = arith.constant 0 : index
    %53 = vector.load %arg9[%c5_52, %c0_53] : memref<32x64xbf16, #tpu.memory_space<vmem>>, vector<16x64xbf16>
    %c7_54 = arith.constant 7 : index
    %c0_55 = arith.constant 0 : index
    %54 = vector.load %arg9[%c7_54, %c0_55] : memref<32x64xbf16, #tpu.memory_space<vmem>>, vector<16x64xbf16>
    %c8_56 = arith.constant 8 : index
    %c0_57 = arith.constant 0 : index
    %55 = vector.load %arg9[%c8_56, %c0_57] : memref<32x64xbf16, #tpu.memory_space<vmem>>, vector<16x64xbf16>
    %c9_58 = arith.constant 9 : index
    %c0_59 = arith.constant 0 : index
    %56 = vector.load %arg9[%c9_58, %c0_59] : memref<32x64xbf16, #tpu.memory_space<vmem>>, vector<16x64xbf16>
    %c11_60 = arith.constant 11 : index
    %c0_61 = arith.constant 0 : index
    %57 = vector.load %arg9[%c11_60, %c0_61] : memref<32x64xbf16, #tpu.memory_space<vmem>>, vector<16x64xbf16>
    %c12_62 = arith.constant 12 : index
    %c0_63 = arith.constant 0 : index
    %58 = vector.load %arg9[%c12_62, %c0_63] : memref<32x64xbf16, #tpu.memory_space<vmem>>, vector<16x64xbf16>
    %c13_64 = arith.constant 13 : index
    %c0_65 = arith.constant 0 : index
    %59 = vector.load %arg9[%c13_64, %c0_65] : memref<32x64xbf16, #tpu.memory_space<vmem>>, vector<16x64xbf16>
    %60 = tpu.concatenate %51, %52, %53, %54, %55, %56, %57, %58, %59 in 1 : vector<16x64xbf16>, vector<16x64xbf16>, vector<16x64xbf16>, vector<16x64xbf16>, vector<16x64xbf16>, vector<16x64xbf16>, vector<16x64xbf16>, vector<16x64xbf16>, vector<16x64xbf16> -> vector<16x576xbf16>
    %c0_66 = arith.constant 0 : index
    %c0_67 = arith.constant 0 : index
    %61 = vector.load %arg5[%c0_66, %c0_67] : memref<576x32xbf16, #tpu.memory_space<vmem>>, vector<576x32xbf16>
    %cst_68 = arith.constant dense<0.000000e+00> : vector<16x32xf32>
    %62 = tpu.matmul %60, %61, %cst_68 {dimension_numbers = #tpu.dot_dimension_numbers<[1], [0], [0], [1], [0, 0, 1, 1], [], []>} : vector<16x576xbf16>, vector<576x32xbf16>, vector<16x32xf32> -> vector<16x32xf32>
    %cst_69 = arith.constant 0.000000e+00 : f32
    %63 = vector.broadcast %cst_69 : f32 to vector<16x32xf32>
    %64 = arith.maximumf %62, %63 : vector<16x32xf32>
    %65 = arith.truncf %64 : vector<16x32xf32> to vector<16x32xbf16>
    %c0_70 = arith.constant 0 : index
    %c0_71 = arith.constant 0 : index
    %66 = vector.load %arg8[%c0_70, %c0_71] : memref<16x64xf32, #tpu.memory_space<vmem>>, vector<16x64xf32>
    %c0_72 = arith.constant 0 : index
    %c0_73 = arith.constant 0 : index
    %67 = vector.load %arg6[%c0_72, %c0_73] : memref<32x64xbf16, #tpu.memory_space<vmem>>, vector<32x64xbf16>
    %cst_74 = arith.constant dense<0.000000e+00> : vector<16x64xf32>
    %68 = tpu.matmul %65, %67, %cst_74 {dimension_numbers = #tpu.dot_dimension_numbers<[1], [0], [0], [1], [0, 0, 1, 1], [], []>} : vector<16x32xbf16>, vector<32x64xbf16>, vector<16x64xf32> -> vector<16x64xf32>
    %69 = arith.addf %66, %68 : vector<16x64xf32>
    %c0_75 = arith.constant 0 : index
    %c0_76 = arith.constant 0 : index
    %70 = vector.load %arg8[%c0_75, %c0_76] : memref<16x64xf32, #tpu.memory_space<vmem>>, vector<16x64xf32>
    tpu.vector_store %arg8[%c0_75, %c0_76], %69 {strides = array<i32>} : memref<16x64xf32, #tpu.memory_space<vmem>>, vector<16x64xf32>,
    %c0_77 = arith.constant 0 : index
    %c0_78 = arith.constant 0 : index
    %71 = vector.load %arg8[%c0_77, %c0_78] : memref<16x64xf32, #tpu.memory_space<vmem>>, vector<16x64xf32>
    %cst_79 = arith.constant 0.000000e+00 : f32
    %72 = vector.broadcast %cst_79 : f32 to vector<16x64xf32>
    %73 = arith.maximumf %71, %72 : vector<16x64xf32>
    %74 = vector.extract_strided_slice %73 {offsets = [5, 0], sizes = [2, 64], strides = [1, 1]} : vector<16x64xf32> to vector<2x64xf32>
    %75 = vector.extract_strided_slice %73 {offsets = [9, 0], sizes = [2, 64], strides = [1, 1]} : vector<16x64xf32> to vector<2x64xf32>
    %76 = tpu.concatenate %74, %75 in 0 : vector<2x64xf32>, vector<2x64xf32> -> vector<4x64xf32>
    %c0_80 = arith.constant 0 : index
    %c0_81 = arith.constant 0 : index
    %c0_82 = arith.constant 0 : index
    %77 = vector.load %arg7[%c0_80, %c0_81, %c0_82] : memref<1x4x64xf32, #tpu.memory_space<vmem>>, vector<1x4x64xf32>
    %78 = vector.shape_cast %77 : vector<1x4x64xf32> to vector<4x64xf32>
    %79 = vector.shape_cast %76 : vector<4x64xf32> to vector<1x4x64xf32>
    tpu.vector_store %arg7[%c0_80, %c0_81, %c0_82], %79 {strides = array<i32>} : memref<1x4x64xf32, #tpu.memory_space<vmem>>, vector<1x4x64xf32>,
    return
  }
  func.func @transform_0(%arg0: i32) -> (i32, i32, i32) {
    %c0_i32 = arith.constant 0 : i32
    %c0_i32_0 = arith.constant 0 : i32
    %c0_i32_1 = arith.constant 0 : i32
    return %arg0, %c0_i32, %c0_i32_0 : i32, i32, i32
  }
  func.func @transform_1(%arg0: i32) -> (i32, i32) {
    %c0_i32 = arith.constant 0 : i32
    %c0_i32_0 = arith.constant 0 : i32
    %c0_i32_1 = arith.constant 0 : i32
    return %c0_i32, %c0_i32_0 : i32, i32
  }
  func.func @transform_2(%arg0: i32) -> (i32, i32) {
    %c0_i32 = arith.constant 0 : i32
    %c0_i32_0 = arith.constant 0 : i32
    %c0_i32_1 = arith.constant 0 : i32
    return %c0_i32, %c0_i32_0 : i32, i32
  }
  func.func @transform_3(%arg0: i32) -> (i32, i32) {
    %c0_i32 = arith.constant 0 : i32
    %c0_i32_0 = arith.constant 0 : i32
    %c0_i32_1 = arith.constant 0 : i32
    return %c0_i32, %c0_i32_0 : i32, i32
  }
  func.func @transform_4(%arg0: i32) -> (i32, i32) {
    %c0_i32 = arith.constant 0 : i32
    %c0_i32_0 = arith.constant 0 : i32
    %c0_i32_1 = arith.constant 0 : i32
    return %c0_i32, %c0_i32_0 : i32, i32
  }
  func.func @transform_5(%arg0: i32) -> (i32, i32) {
    %c0_i32 = arith.constant 0 : i32
    %c0_i32_0 = arith.constant 0 : i32
    %c0_i32_1 = arith.constant 0 : i32
    return %c0_i32, %c0_i32_0 : i32, i32
  }
  func.func @transform_6(%arg0: i32) -> (i32, i32, i32) {
    %c0_i32 = arith.constant 0 : i32
    %c0_i32_0 = arith.constant 0 : i32
    %c0_i32_1 = arith.constant 0 : i32
    return %arg0, %c0_i32, %c0_i32_0 : i32, i32, i32
  }
}

</mosaic_0001>

<llo_original>
// kernel: encoder_forward.3
$region0: #{encoder_forward.3}
  #allocation0 [shape = 'u32[]', space=smem, size = 0x4, offset = 0x4, fixed_abs, tag = 'smem constant byte address 0x4 - core index']
  #allocation1 [shape = 'u32[144,128]{1,0:T(1,128)}', space=vmem, size = 0x12000, scoped, tag = 'internal scratch']
  %s0 = inlined_call_operand.vmem [shape: bf16[512,192], index: 0, kind: input, shape index: {}]
  %s1 = inlined_call_operand.vmem [shape: bf16[192,128], index: 1, kind: input, shape index: {}]
  %s2 = inlined_call_operand.vmem [shape: f32[1,128], index: 2, kind: input, shape index: {}]
  %s3 = inlined_call_operand.vmem [shape: bf16[512,128], index: 3, kind: output, shape index: {}]
  %s4 = sld [smem:[#allocation0]]
  $region45: #{encoder_forward.3} parent=0
    _
  %s6 = ssub.s32 1, %s4
  %s7 = scalar_select 0, %s6, %s4
  loop: start=0, step=1, limit=4
  $region2: #{encoder_forward.3} parent=0 // loop_pre_header
    _
  $region3: #{encoder_forward.3} parent=0 // loop_header
    %s9 = sphi 0, %s13
    %p10 = scmp.ge.s32.totalorder %s9, 4
    %s19 = sphi 0, %s21
    %s22 = sphi 0, %s19
    %s23 = sphi 0, %s22
    %s39 = sphi 0, %s23
    %s43 = sphi 0, %s43
    %s45 = sphi 0, %s43
    %s46 = sphi 0, %s45
    %s60 = sphi 0, %s46
    %s64 = sphi 0, %s64
    %s66 = sphi 0, %s64
    %s67 = sphi 0, %s66
    %s81 = sphi 0, %s67
    %s87 = sphi 0, %s89
    %s90 = sphi 0, %s87
    %s91 = sphi 0, %s90
    %s107 = sphi 0, %s91
  $region4: #{encoder_forward.3} parent=0 // loop_header_branch
    %12 = sbr.rel (%p10) target = $region8
  $region5: #{encoder_forward.3} parent=0 // loop_body
    %s14 = ssub.s32 %s9, 1
    %s15 = ssub.s32 %s9, 2
    %s16 = sadd.s32 %s9, 1
    %s17 = ssub.s32 %s9, %s16
    %p18 = scmp.eq.s32.totalorder %s17, 0
    %s20 = sadd.s32 %s19, 1
    %s21 = scalar_select %p18, %s19, %s20
    %p24 = pneg %p18
    %p25 = scmp.eq.s32.totalorder %s9, 1
    %p26 = por %p24, %p25
    %p27 = scmp.ne.s32.totalorder %s19, %s22
    %p28 = scmp.eq.s32.totalorder %s9, 0
    %p29 = por %p27, %p28
    %p30 = scmp.ne.s32.totalorder %s19, %s22
    %p31 = scmp.eq.s32.totalorder %s14, 1
    %p32 = por %p30, %p31
    %p33 = scmp.ne.s32.totalorder %s22, %s23
    %p34 = scmp.eq.s32.totalorder %s14, 0
    %p35 = por %p33, %p34
    %p36 = scmp.ne.s32.totalorder %s22, %s23
    %p37 = scmp.eq.s32.totalorder %s15, 1
    %p38 = por %p36, %p37
    %p40 = scmp.ne.s32.totalorder %s23, %s39
    %p41 = scmp.eq.s32.totalorder %s15, 0
    %p42 = por %p40, %p41
    %s44 = sadd.s32 %s43, 1
    %p47 = scmp.eq.s32.totalorder %s9, 1
    %p48 = scmp.ne.s32.totalorder %s43, %s45
    %p49 = scmp.eq.s32.totalorder %s9, 0
    %p50 = por %p48, %p49
    %p51 = scmp.ne.s32.totalorder %s43, %s45
    %p52 = scmp.eq.s32.totalorder %s14, 1
    %p53 = por %p51, %p52
    %p54 = scmp.ne.s32.totalorder %s45, %s46
    %p55 = scmp.eq.s32.totalorder %s14, 0
    %p56 = por %p54, %p55
    %p57 = scmp.ne.s32.totalorder %s45, %s46
    %p58 = scmp.eq.s32.totalorder %s15, 1
    %p59 = por %p57, %p58
    %p61 = scmp.ne.s32.totalorder %s46, %s60
    %p62 = scmp.eq.s32.totalorder %s15, 0
    %p63 = por %p61, %p62
    %s65 = sadd.s32 %s64, 1
    %p68 = scmp.eq.s32.totalorder %s9, 1
    %p69 = scmp.ne.s32.totalorder %s64, %s66
    %p70 = scmp.eq.s32.totalorder %s9, 0
    %p71 = por %p69, %p70
    %p72 = scmp.ne.s32.totalorder %s64, %s66
    %p73 = scmp.eq.s32.totalorder %s14, 1
    %p74 = por %p72, %p73
    %p75 = scmp.ne.s32.totalorder %s66, %s67
    %p76 = scmp.eq.s32.totalorder %s14, 0
    %p77 = por %p75, %p76
    %p78 = scmp.ne.s32.totalorder %s66, %s67
    %p79 = scmp.eq.s32.totalorder %s15, 1
    %p80 = por %p78, %p79
    %p82 = scmp.ne.s32.totalorder %s67, %s81
    %p83 = scmp.eq.s32.totalorder %s15, 0
    %p84 = por %p82, %p83
    %s85 = ssub.s32 %s9, %s16
    %p86 = scmp.eq.s32.totalorder %s85, 0
    %s88 = sadd.s32 %s87, 1
    %s89 = scalar_select %p86, %s87, %s88
    %p92 = pneg %p86
    %p93 = scmp.eq.s32.totalorder %s9, 1
    %p94 = por %p92, %p93
    %p95 = scmp.ne.s32.totalorder %s87, %s90
    %p96 = scmp.eq.s32.totalorder %s9, 0
    %p97 = por %p95, %p96
    %p98 = scmp.ne.s32.totalorder %s87, %s90
    %p99 = scmp.eq.s32.totalorder %s14, 1
    %p100 = por %p98, %p99
    %p101 = scmp.ne.s32.totalorder %s90, %s91
    %p102 = scmp.eq.s32.totalorder %s14, 0
    %p103 = por %p101, %p102
    %p104 = scmp.ne.s32.totalorder %s90, %s91
    %p105 = scmp.eq.s32.totalorder %s15, 1
    %p106 = por %p104, %p105
    %p108 = scmp.ne.s32.totalorder %s91, %s107
    %p109 = scmp.eq.s32.totalorder %s15, 0
    %p110 = por %p108, %p109
    %p111 = scmp.le.s32.totalorder 1, %s9
    %p112 = scmp.lt.s32.totalorder %s9, 3
    %p113 = pnand %p111, %p112
    %p114 = pneg %p113
    // Predicated region
    $region9: #{encoder_forward.3} parent=5 // pred_check
      _
    $region10: #{encoder_forward.3} parent=5 // pred_check_branch
      %116 = sbr.rel (%p113) target = $region12
    $region11: #{encoder_forward.3} parent=5 // pred_region
      %s117 = ssub.s32 %s9, 1
      // Predicated region
      $region13: #{encoder_forward.3} parent=11 // pred_check
        %p118 = pneg %p56
      $region14: #{encoder_forward.3} parent=11 // pred_check_branch
        %120 = sbr.rel (%p118) target = $region16
      $region15: #{encoder_forward.3} parent=11 // pred_region
        _
      $region16: #{encoder_forward.3} parent=11 // pred_fallthru
        _
      // Predicated region
      $region17: #{encoder_forward.3} parent=11 // pred_check
        %p121 = pneg %p77
      $region18: #{encoder_forward.3} parent=11 // pred_check_branch
        %123 = sbr.rel (%p121) target = $region20
      $region19: #{encoder_forward.3} parent=11 // pred_region
        _
      $region20: #{encoder_forward.3} parent=11 // pred_fallthru
        _
    $region12: #{encoder_forward.3} parent=5 // pred_fallthru
      _
    %p124 = scmp.lt.s32.totalorder %s9, 2
    // Predicated region
    $region21: #{encoder_forward.3} parent=5 // pred_check
      %p125 = pneg %p124
    $region22: #{encoder_forward.3} parent=5 // pred_check_branch
      %127 = sbr.rel (%p125) target = $region24
    $region23: #{encoder_forward.3} parent=5 // pred_region
      // Predicated region
      $region25: #{encoder_forward.3} parent=23 // pred_check
        %p128 = pneg %p29
      $region26: #{encoder_forward.3} parent=23 // pred_check_branch
        %130 = sbr.rel (%p128) target = $region28
      $region27: #{encoder_forward.3} parent=23 // pred_region
        %s131 = smul.u32 32, %s9
        %p132 = scmp.lt.s32.totalorder %s131, 63
        %s133 = scalar_select %p132, %s131, 63
        %s134 = smul.addr %s133, 2
        %s135 = smul.addr %s134, 4
        %s136 = scalar_lea.vmem %s0, %s135
        %s137 = smul.u32 32, %s9
      $region28: #{encoder_forward.3} parent=23 // pred_fallthru
        _
    $region24: #{encoder_forward.3} parent=5 // pred_fallthru
      _
    %p138 = scmp.le.s32.totalorder 1, %s9
    %p139 = scmp.lt.s32.totalorder %s9, 3
    %p140 = pnand %p138, %p139
    %p141 = pneg %p140
    // Predicated region
    $region29: #{encoder_forward.3} parent=5 // pred_check
      _
    $region30: #{encoder_forward.3} parent=5 // pred_check_branch
      %143 = sbr.rel (%p140) target = $region32
    $region31: #{encoder_forward.3} parent=5 // pred_region
      %s144 = ssub.s32 %s9, 1
      %s145 = smul.u32 32, %s14
      %p146 = scmp.lt.s32.totalorder %s145, 63
      %s147 = scalar_select %p146, %s145, 63
      %s148 = smul.addr %s147, 2
      %s149 = smul.addr %s148, 4
      %s150 = scalar_lea.vmem %s0, %s149
      %p151 = pneg %p35
      %p152 = pneg %p32
      %p153 = pneg %p56
      %p154 = pneg %p53
      %p155 = pneg %p77
      %p156 = pneg %p74
      %p157 = pneg %p103
      %p158 = pneg %p100
      %s159 = smul.u32 32, %s14
      %p160 = scmp.lt.s32.totalorder %s159, 63
      %s161 = scalar_select %p160, %s159, 63
      %s162 = smul.addr %s161, 4
      %s163 = scalar_lea.vmem %s3, %s162
      %s164 = smul.u32 32, %s14
      %p165 = scmp.lt.s32.totalorder %s164, 63
      %s166 = scalar_select %p165, %s164, 63
      %s167 = smul.addr %s166, 2
      %s168 = smul.addr %s167, 4
      %s169 = scalar_lea.vmem %s0, %s168
      %s170 = smul.u32 32, %s14
      %s171 = smul.u32 32, %s14
      %p172 = scmp.lt.s32.totalorder %s171, 63
      %s173 = scalar_select %p172, %s171, 63
      %s174 = smul.addr %s173, 4
      %s175 = scalar_lea.vmem %s3, %s174
      %s176 = smul.u32 32, %s14
      %v178 = vld [vmem:[%s169] sm:$0xff]
      %v179 = vld [vmem:[%s169 + $0x8] sm:$0xff]
      %v180 = vld [vmem:[%s169 + $0x10] sm:$0xff]
      %v181 = vld [vmem:[%s169 + $0x18] sm:$0xff]
      %v182 = vld [vmem:[%s169 + $0x20] sm:$0xff]
      %v183 = vld [vmem:[%s169 + $0x28] sm:$0xff]
      %v184 = vld [vmem:[%s169 + $0x30] sm:$0xff]
      %v185 = vld [vmem:[%s169 + $0x38] sm:$0xff]
      %v186 = vld [vmem:[%s169 + $0x40] sm:$0xff]
      %v187 = vld [vmem:[%s169 + $0x48] sm:$0xff]
      %v188 = vld [vmem:[%s169 + $0x50] sm:$0xff]
      %v189 = vld [vmem:[%s169 + $0x58] sm:$0xff]
      %v190 = vld [vmem:[%s169 + $0x60] sm:$0xff]
      %v191 = vld [vmem:[%s169 + $0x68] sm:$0xff]
      %v192 = vld [vmem:[%s169 + $0x70] sm:$0xff]
      %v193 = vld [vmem:[%s169 + $0x78] sm:$0xff]
      %v194 = vld [vmem:[%s169 + $0x80] sm:$0xff]
      %v195 = vld [vmem:[%s169 + $0x88] sm:$0xff]
      %v196 = vld [vmem:[%s169 + $0x90] sm:$0xff]
      %v197 = vld [vmem:[%s169 + $0x98] sm:$0xff]
      %v198 = vld [vmem:[%s169 + $0xa0] sm:$0xff]
      %v199 = vld [vmem:[%s169 + $0xa8] sm:$0xff]
      %v200 = vld [vmem:[%s169 + $0xb0] sm:$0xff]
      %v201 = vld [vmem:[%s169 + $0xb8] sm:$0xff]
      %v202 = vld [vmem:[%s169 + $0xc0] sm:$0xff]
      %v203 = vld [vmem:[%s169 + $0xc8] sm:$0xff]
      %v204 = vld [vmem:[%s169 + $0xd0] sm:$0xff]
      %v205 = vld [vmem:[%s169 + $0xd8] sm:$0xff]
      %v206 = vld [vmem:[%s169 + $0xe0] sm:$0xff]
      %v207 = vld [vmem:[%s169 + $0xe8] sm:$0xff]
      %v208 = vld [vmem:[%s169 + $0xf0] sm:$0xff]
      %v209 = vld [vmem:[%s169 + $0xf8] sm:$0xff]
      %v210 = vld [vmem:[%s1] sm:$0xf]
      %v211 = vld [vmem:[%s1 + $0x4] sm:$0xf]
      %v212 = vld [vmem:[%s1 + $0x8] sm:$0xf]
      %v213 = vld [vmem:[%s1 + $0xc] sm:$0xf]
      %v214 = vld [vmem:[%s1 + $0x10] sm:$0xf]
      %v215 = vld [vmem:[%s1 + $0x14] sm:$0xf]
      %v216 = vld [vmem:[%s1 + $0x18] sm:$0xf]
      %v217 = vld [vmem:[%s1 + $0x1c] sm:$0xf]
      %v218 = vld [vmem:[%s1 + $0x20] sm:$0xf]
      %v219 = vld [vmem:[%s1 + $0x24] sm:$0xf]
      %v220 = vld [vmem:[%s1 + $0x28] sm:$0xf]
      %v221 = vld [vmem:[%s1 + $0x2c] sm:$0xf]
      %v222 = vld [vmem:[%s1 + $0x30] sm:$0xf]
      %v223 = vld [vmem:[%s1 + $0x34] sm:$0xf]
      %v224 = vld [vmem:[%s1 + $0x38] sm:$0xf]
      %v225 = vld [vmem:[%s1 + $0x3c] sm:$0xf]
      %v226 = vld [vmem:[%s1 + $0x40] sm:$0xf]
      %v227 = vld [vmem:[%s1 + $0x44] sm:$0xf]
      %v228 = vld [vmem:[%s1 + $0x48] sm:$0xf]
      %v229 = vld [vmem:[%s1 + $0x4c] sm:$0xf]
      %v230 = vld [vmem:[%s1 + $0x50] sm:$0xf]
      %v231 = vld [vmem:[%s1 + $0x54] sm:$0xf]
      %v232 = vld [vmem:[%s1 + $0x58] sm:$0xf]
      %v233 = vld [vmem:[%s1 + $0x5c] sm:$0xf]
      %v234 = vld [vmem:[%s2] sm:$0x1]
      %v236 = vlaneseq
      %v237 = vshrl.u32 %v236, 7
      %v238 = vsub.s32 0, %v237
      %v239 = vrot.slane %v234, %v238
      %v273 = vunpack.c.l.b16 %v178
      %v274 = vunpack.c.h.b16 %v178
      %v275 = vunpack.c.l.b16 %v179
      %v276 = vunpack.c.h.b16 %v179
      %v277 = vunpack.c.l.b16 %v180
      %v278 = vunpack.c.h.b16 %v180
      %v279 = vunpack.c.l.b16 %v181
      %v280 = vunpack.c.h.b16 %v181
      %v281 = vunpack.c.l.b16 %v182
      %v282 = vunpack.c.h.b16 %v182
      %v283 = vunpack.c.l.b16 %v183
      %v284 = vunpack.c.h.b16 %v183
      %v285 = vunpack.c.l.b16 %v184
      %v286 = vunpack.c.h.b16 %v184
      %v287 = vunpack.c.l.b16 %v185
      %v288 = vunpack.c.h.b16 %v185
      %v289 = vunpack.c.l.b16 %v186
      %v290 = vunpack.c.h.b16 %v186
      %v291 = vunpack.c.l.b16 %v187
      %v292 = vunpack.c.h.b16 %v187
      %v293 = vunpack.c.l.b16 %v188
      %v294 = vunpack.c.h.b16 %v188
      %v295 = vunpack.c.l.b16 %v189
      %v296 = vunpack.c.h.b16 %v189
      %v297 = vunpack.c.l.b16 %v190
      %v298 = vunpack.c.h.b16 %v190
      %v299 = vunpack.c.l.b16 %v191
      %v300 = vunpack.c.h.b16 %v191
      %v301 = vunpack.c.l.b16 %v192
      %v302 = vunpack.c.h.b16 %v192
      %v303 = vunpack.c.l.b16 %v193
      %v304 = vunpack.c.h.b16 %v193
      %v305 = vunpack.c.l.b16 %v194
      %v306 = vunpack.c.h.b16 %v194
      %v307 = vunpack.c.l.b16 %v195
      %v308 = vunpack.c.h.b16 %v195
      %v309 = vunpack.c.l.b16 %v196
      %v310 = vunpack.c.h.b16 %v196
      %v311 = vunpack.c.l.b16 %v197
      %v312 = vunpack.c.h.b16 %v197
      %v313 = vunpack.c.l.b16 %v198
      %v314 = vunpack.c.h.b16 %v198
      %v315 = vunpack.c.l.b16 %v199
      %v316 = vunpack.c.h.b16 %v199
      %v317 = vunpack.c.l.b16 %v200
      %v318 = vunpack.c.h.b16 %v200
      %v319 = vunpack.c.l.b16 %v201
      %v320 = vunpack.c.h.b16 %v201
      %v321 = vunpack.c.l.b16 %v202
      %v322 = vunpack.c.h.b16 %v202
      %v323 = vunpack.c.l.b16 %v203
      %v324 = vunpack.c.h.b16 %v203
      %v325 = vunpack.c.l.b16 %v204
      %v326 = vunpack.c.h.b16 %v204
      %v327 = vunpack.c.l.b16 %v205
      %v328 = vunpack.c.h.b16 %v205
      %v329 = vunpack.c.l.b16 %v206
      %v330 = vunpack.c.h.b16 %v206
      %v331 = vunpack.c.l.b16 %v207
      %v332 = vunpack.c.h.b16 %v207
      %v333 = vunpack.c.l.b16 %v208
      %v334 = vunpack.c.h.b16 %v208
      %v335 = vunpack.c.l.b16 %v209
      %v336 = vunpack.c.h.b16 %v209
      %v337 = vpack.c.b16 %v275, %v273
      %v338 = vpack.c.b16 %v276, %v274
      %v339 = vpack.c.b16 %v279, %v277
      %v340 = vpack.c.b16 %v280, %v278
      %v341 = vpack.c.b16 %v283, %v281
      %v342 = vpack.c.b16 %v284, %v282
      %v343 = vpack.c.b16 %v287, %v285
      %v344 = vpack.c.b16 %v288, %v286
      %v345 = vpack.c.b16 %v291, %v289
      %v346 = vpack.c.b16 %v292, %v290
      %v347 = vpack.c.b16 %v295, %v293
      %v348 = vpack.c.b16 %v296, %v294
      %v349 = vpack.c.b16 %v299, %v297
      %v350 = vpack.c.b16 %v300, %v298
      %v351 = vpack.c.b16 %v303, %v301
      %v352 = vpack.c.b16 %v304, %v302
      %v353 = vpack.c.b16 %v307, %v305
      %v354 = vpack.c.b16 %v308, %v306
      %v355 = vpack.c.b16 %v311, %v309
      %v356 = vpack.c.b16 %v312, %v310
      %v357 = vpack.c.b16 %v315, %v313
      %v358 = vpack.c.b16 %v316, %v314
      %v359 = vpack.c.b16 %v319, %v317
      %v360 = vpack.c.b16 %v320, %v318
      %v361 = vpack.c.b16 %v323, %v321
      %v362 = vpack.c.b16 %v324, %v322
      %v363 = vpack.c.b16 %v327, %v325
      %v364 = vpack.c.b16 %v328, %v326
      %v365 = vpack.c.b16 %v331, %v329
      %v366 = vpack.c.b16 %v332, %v330
      %v367 = vpack.c.b16 %v335, %v333
      %v368 = vpack.c.b16 %v336, %v334
      %v409 = vunpack.c.l.b16 %v210
      %v410 = vunpack.c.l.b16 %v211
      %v411 = vunpack.c.l.b16 %v212
      %v412 = vunpack.c.l.b16 %v213
      %v413 = vunpack.c.l.b16 %v214
      %v414 = vunpack.c.l.b16 %v215
      %v415 = vunpack.c.l.b16 %v216
      %v416 = vunpack.c.l.b16 %v217
      %v417 = vunpack.c.l.b16 %v218
      %v418 = vunpack.c.l.b16 %v219
      %v419 = vunpack.c.l.b16 %v220
      %v420 = vunpack.c.l.b16 %v221
      %v421 = vunpack.c.l.b16 %v222
      %v422 = vunpack.c.l.b16 %v223
      %v423 = vunpack.c.l.b16 %v224
      %v424 = vunpack.c.l.b16 %v225
      %v425 = vunpack.c.l.b16 %v226
      %v426 = vunpack.c.l.b16 %v227
      %v427 = vunpack.c.l.b16 %v228
      %v428 = vunpack.c.l.b16 %v229
      %v429 = vunpack.c.l.b16 %v230
      %v430 = vunpack.c.l.b16 %v231
      %v431 = vunpack.c.l.b16 %v232
      %v432 = vunpack.c.l.b16 %v233
      %v433 = vpack.c.b16 %v410, %v409
      %v434 = vpack.c.b16 %v412, %v411
      %v435 = vpack.c.b16 %v414, %v413
      %v436 = vpack.c.b16 %v416, %v415
      %v437 = vpack.c.b16 %v418, %v417
      %v438 = vpack.c.b16 %v420, %v419
      %v439 = vpack.c.b16 %v422, %v421
      %v440 = vpack.c.b16 %v424, %v423
      %v441 = vpack.c.b16 %v426, %v425
      %v442 = vpack.c.b16 %v428, %v427
      %v443 = vpack.c.b16 %v430, %v429
      %v444 = vpack.c.b16 %v432, %v431
      %vm457 = vcmask 523264
      %v459 = vsel %vm457, %v338, 0
      %v462 = vsel %vm457, %v340, 0
      %v465 = vsel %vm457, %v342, 0
      %v468 = vsel %vm457, %v344, 0
      %v471 = vsel %vm457, %v346, 0
      %v474 = vsel %vm457, %v348, 0
      %v477 = vsel %vm457, %v350, 0
      %v480 = vsel %vm457, %v352, 0
      %v483 = vsel %vm457, %v354, 0
      %v486 = vsel %vm457, %v356, 0
      %v489 = vsel %vm457, %v358, 0
      %v492 = vsel %vm457, %v360, 0
      %v495 = vsel %vm457, %v362, 0
      %v498 = vsel %vm457, %v364, 0
      %v501 = vsel %vm457, %v366, 0
      %v504 = vsel %vm457, %v368, 0
      %506 = vmatprep.subr.bf16.mxu0 0
      %507 = vmatpush1.bf16.msra.mxu0 %v440
      %508 = vmatprep.subr.bf16.mxu0 0
      %509 = vmatpush1.bf16.msra.mxu0 %v439
      %510 = vmatprep.subr.bf16.mxu0 0
      %511 = vmatpush1.bf16.msra.mxu0 %v438
      %512 = vmatprep.subr.bf16.mxu0 0
      %513 = vmatpush1.bf16.msra.mxu0 %v437
      %514 = vmatprep.subr.bf16.mxu0 0
      %515 = vmatpush1.bf16.msra.mxu0 %v436
      %516 = vmatprep.subr.bf16.mxu0 0
      %517 = vmatpush1.bf16.msra.mxu0 %v435
      %518 = vmatprep.subr.bf16.mxu0 0
      %519 = vmatpush1.bf16.msra.mxu0 %v434
      %520 = vmatprep.subr.bf16.mxu0 0
      %521 = vmatpush1.bf16.msra.mxu0 %v433
      %522 = vmatprep.subr.bf16.mxu0 0
      %523 = vmatpush2.bf16.msra.mxu0 0
      %524 = vmatprep.subr.bf16.mxu0 0
      %525 = vmatpush2.bf16.msra.mxu0 0
      %526 = vmatprep.subr.bf16.mxu0 0
      %527 = vmatpush2.bf16.msra.mxu0 0
      %528 = vmatprep.subr.bf16.mxu0 0
      %529 = vmatpush2.bf16.msra.mxu0 0
      %530 = vmatprep.subr.bf16.mxu0 0
      %531 = vmatpush2.bf16.msra.mxu0 %v444
      %532 = vmatprep.subr.bf16.mxu0 0
      %533 = vmatpush2.bf16.msra.mxu0 %v443
      %534 = vmatprep.subr.bf16.mxu0 0
      %535 = vmatpush2.bf16.msra.mxu0 %v442
      %536 = vmatprep.subr.bf16.mxu0 0
      %537 = vmatpush2.bf16.msra.mxu0 %v441
      %538 = vmatprep.mubr.bf16.mxu0 %v459
      %539 = vmatmul.mubr.bf16.gmra.mxu0 %v337
      %v540 = vpop.f32.mrf.mxu0
      %v541 = vadd.f32 %v239, %v540
      %v542 = vpop.f32.mrf.mxu0
      %v543 = vpop.f32.mrf.mxu0
      %v544 = vadd.f32 %v239, %v543
      %v545 = vpop.f32.mrf.mxu0
      %546 = vmatprep.mubr.bf16.mxu0 %v462
      %547 = vmatmul.mubr.bf16.gmra.mxu0 %v339
      %v548 = vpop.f32.mrf.mxu0
      %v549 = vadd.f32 %v239, %v548
      %v550 = vpop.f32.mrf.mxu0
      %v551 = vpop.f32.mrf.mxu0
      %v552 = vadd.f32 %v239, %v551
      %v553 = vpop.f32.mrf.mxu0
      %554 = vmatprep.mubr.bf16.mxu0 %v465
      %555 = vmatmul.mubr.bf16.gmra.mxu0 %v341
      %v556 = vpop.f32.mrf.mxu0
      %v557 = vadd.f32 %v239, %v556
      %v558 = vpop.f32.mrf.mxu0
      %v559 = vpop.f32.mrf.mxu0
      %v560 = vadd.f32 %v239, %v559
      %v561 = vpop.f32.mrf.mxu0
      %562 = vmatprep.mubr.bf16.mxu0 %v468
      %563 = vmatmul.mubr.bf16.gmra.mxu0 %v343
      %v564 = vpop.f32.mrf.mxu0
      %v565 = vadd.f32 %v239, %v564
      %v566 = vpop.f32.mrf.mxu0
      %v567 = vpop.f32.mrf.mxu0
      %v568 = vadd.f32 %v239, %v567
      %v569 = vpop.f32.mrf.mxu0
      %570 = vmatprep.mubr.bf16.mxu0 %v471
      %571 = vmatmul.mubr.bf16.gmra.mxu0 %v345
      %v572 = vpop.f32.mrf.mxu0
      %v573 = vadd.f32 %v239, %v572
      %v574 = vpop.f32.mrf.mxu0
      %v575 = vpop.f32.mrf.mxu0
      %v576 = vadd.f32 %v239, %v575
      %v577 = vpop.f32.mrf.mxu0
      %578 = vmatprep.mubr.bf16.mxu0 %v474
      %579 = vmatmul.mubr.bf16.gmra.mxu0 %v347
      %v580 = vpop.f32.mrf.mxu0
      %v581 = vadd.f32 %v239, %v580
      %v582 = vpop.f32.mrf.mxu0
      %v583 = vpop.f32.mrf.mxu0
      %v584 = vadd.f32 %v239, %v583
      %v585 = vpop.f32.mrf.mxu0
      %586 = vmatprep.mubr.bf16.mxu0 %v477
      %587 = vmatmul.mubr.bf16.gmra.mxu0 %v349
      %v588 = vpop.f32.mrf.mxu0
      %v589 = vadd.f32 %v239, %v588
      %v590 = vpop.f32.mrf.mxu0
      %v591 = vpop.f32.mrf.mxu0
      %v592 = vadd.f32 %v239, %v591
      %v593 = vpop.f32.mrf.mxu0
      %594 = vmatprep.mubr.bf16.mxu0 %v480
      %595 = vmatmul.mubr.bf16.gmra.mxu0 %v351
      %v596 = vpop.f32.mrf.mxu0
      %v597 = vadd.f32 %v239, %v596
      %v598 = vpop.f32.mrf.mxu0
      %v599 = vpop.f32.mrf.mxu0
      %v600 = vadd.f32 %v239, %v599
      %v601 = vpop.f32.mrf.mxu0
      %602 = vmatprep.mubr.bf16.mxu0 %v483
      %603 = vmatmul.mubr.bf16.gmra.mxu0 %v353
      %v604 = vpop.f32.mrf.mxu0
      %v605 = vadd.f32 %v239, %v604
      %v606 = vpop.f32.mrf.mxu0
      %v607 = vpop.f32.mrf.mxu0
      %v608 = vadd.f32 %v239, %v607
      %v609 = vpop.f32.mrf.mxu0
      %610 = vmatprep.mubr.bf16.mxu0 %v486
      %611 = vmatmul.mubr.bf16.gmra.mxu0 %v355
      %v612 = vpop.f32.mrf.mxu0
      %v613 = vadd.f32 %v239, %v612
      %v614 = vpop.f32.mrf.mxu0
      %v615 = vpop.f32.mrf.mxu0
      %v616 = vadd.f32 %v239, %v615
      %v617 = vpop.f32.mrf.mxu0
      %618 = vmatprep.mubr.bf16.mxu0 %v489
      %619 = vmatmul.mubr.bf16.gmra.mxu0 %v357
      %v620 = vpop.f32.mrf.mxu0
      %v621 = vadd.f32 %v239, %v620
      %v622 = vpop.f32.mrf.mxu0
      %v623 = vpop.f32.mrf.mxu0
      %v624 = vadd.f32 %v239, %v623
      %v625 = vpop.f32.mrf.mxu0
      %626 = vmatprep.mubr.bf16.mxu0 %v492
      %627 = vmatmul.mubr.bf16.gmra.mxu0 %v359
      %v628 = vpop.f32.mrf.mxu0
      %v629 = vadd.f32 %v239, %v628
      %v630 = vpop.f32.mrf.mxu0
      %v631 = vpop.f32.mrf.mxu0
      %v632 = vadd.f32 %v239, %v631
      %v633 = vpop.f32.mrf.mxu0
      %634 = vmatprep.mubr.bf16.mxu0 %v495
      %635 = vmatmul.mubr.bf16.gmra.mxu0 %v361
      %v636 = vpop.f32.mrf.mxu0
      %v637 = vadd.f32 %v239, %v636
      %v638 = vpop.f32.mrf.mxu0
      %v639 = vpop.f32.mrf.mxu0
      %v640 = vadd.f32 %v239, %v639
      %v641 = vpop.f32.mrf.mxu0
      %642 = vmatprep.mubr.bf16.mxu0 %v498
      %643 = vmatmul.mubr.bf16.gmra.mxu0 %v363
      %v644 = vpop.f32.mrf.mxu0
      %v645 = vadd.f32 %v239, %v644
      %v646 = vpop.f32.mrf.mxu0
      %v647 = vpop.f32.mrf.mxu0
      %v648 = vadd.f32 %v239, %v647
      %v649 = vpop.f32.mrf.mxu0
      %650 = vmatprep.mubr.bf16.mxu0 %v501
      %651 = vmatmul.mubr.bf16.gmra.mxu0 %v365
      %v652 = vpop.f32.mrf.mxu0
      %v653 = vadd.f32 %v239, %v652
      %v654 = vpop.f32.mrf.mxu0
      %v655 = vpop.f32.mrf.mxu0
      %v656 = vadd.f32 %v239, %v655
      %v657 = vpop.f32.mrf.mxu0
      %658 = vmatprep.mubr.bf16.mxu0 %v504
      %659 = vmatmul.mubr.bf16.gmra.mxu0 %v367
      %v660 = vpop.f32.mrf.mxu0
      %v661 = vadd.f32 %v239, %v660
      %v662 = vpop.f32.mrf.mxu0
      %v663 = vpop.f32.mrf.mxu0
      %v664 = vadd.f32 %v239, %v663
      %v665 = vpop.f32.mrf.mxu0
      %666 = vdwg.mxu0
      %v667 = vmax.f32 %v541, 0.0
      %v668 = vmax.f32 %v544, 0.0
      %v669 = vmax.f32 %v549, 0.0
      %v670 = vmax.f32 %v552, 0.0
      %v671 = vmax.f32 %v557, 0.0
      %v672 = vmax.f32 %v560, 0.0
      %v673 = vmax.f32 %v565, 0.0
      %v674 = vmax.f32 %v568, 0.0
      %v675 = vmax.f32 %v573, 0.0
      %v676 = vmax.f32 %v576, 0.0
      %v677 = vmax.f32 %v581, 0.0
      %v678 = vmax.f32 %v584, 0.0
      %v679 = vmax.f32 %v589, 0.0
      %v680 = vmax.f32 %v592, 0.0
      %v681 = vmax.f32 %v597, 0.0
      %v682 = vmax.f32 %v600, 0.0
      %v683 = vmax.f32 %v605, 0.0
      %v684 = vmax.f32 %v608, 0.0
      %v685 = vmax.f32 %v613, 0.0
      %v686 = vmax.f32 %v616, 0.0
      %v687 = vmax.f32 %v621, 0.0
      %v688 = vmax.f32 %v624, 0.0
      %v689 = vmax.f32 %v629, 0.0
      %v690 = vmax.f32 %v632, 0.0
      %v691 = vmax.f32 %v637, 0.0
      %v692 = vmax.f32 %v640, 0.0
      %v693 = vmax.f32 %v645, 0.0
      %v694 = vmax.f32 %v648, 0.0
      %v695 = vmax.f32 %v653, 0.0
      %v696 = vmax.f32 %v656, 0.0
      %v697 = vmax.f32 %v661, 0.0
      %v698 = vmax.f32 %v664, 0.0
      %v699 = vpack.c.bf16 %v668, %v667
      %v700 = vpack.c.bf16 %v670, %v669
      %v701 = vpack.c.bf16 %v672, %v671
      %v702 = vpack.c.bf16 %v674, %v673
      %v703 = vpack.c.bf16 %v676, %v675
      %v704 = vpack.c.bf16 %v678, %v677
      %v705 = vpack.c.bf16 %v680, %v679
      %v706 = vpack.c.bf16 %v682, %v681
      %v707 = vpack.c.bf16 %v684, %v683
      %v708 = vpack.c.bf16 %v686, %v685
      %v709 = vpack.c.bf16 %v688, %v687
      %v710 = vpack.c.bf16 %v690, %v689
      %v711 = vpack.c.bf16 %v692, %v691
      %v712 = vpack.c.bf16 %v694, %v693
      %v713 = vpack.c.bf16 %v696, %v695
      %v714 = vpack.c.bf16 %v698, %v697
      %v731 = vunpack.c.l.b16 %v699
      %v732 = vunpack.c.h.b16 %v699
      %v733 = vunpack.c.l.b16 %v700
      %v734 = vunpack.c.h.b16 %v700
      %v735 = vunpack.c.l.b16 %v701
      %v736 = vunpack.c.h.b16 %v701
      %v737 = vunpack.c.l.b16 %v702
      %v738 = vunpack.c.h.b16 %v702
      %v739 = vunpack.c.l.b16 %v703
      %v740 = vunpack.c.h.b16 %v703
      %v741 = vunpack.c.l.b16 %v704
      %v742 = vunpack.c.h.b16 %v704
      %v743 = vunpack.c.l.b16 %v705
      %v744 = vunpack.c.h.b16 %v705
      %v745 = vunpack.c.l.b16 %v706
      %v746 = vunpack.c.h.b16 %v706
      %v747 = vunpack.c.l.b16 %v707
      %v748 = vunpack.c.h.b16 %v707
      %v749 = vunpack.c.l.b16 %v708
      %v750 = vunpack.c.h.b16 %v708
      %v751 = vunpack.c.l.b16 %v709
      %v752 = vunpack.c.h.b16 %v709
      %v753 = vunpack.c.l.b16 %v710
      %v754 = vunpack.c.h.b16 %v710
      %v755 = vunpack.c.l.b16 %v711
      %v756 = vunpack.c.h.b16 %v711
      %v757 = vunpack.c.l.b16 %v712
      %v758 = vunpack.c.h.b16 %v712
      %v759 = vunpack.c.l.b16 %v713
      %v760 = vunpack.c.h.b16 %v713
      %v761 = vunpack.c.l.b16 %v714
      %v762 = vunpack.c.h.b16 %v714
      %v763 = vpack.c.b16 %v731, %v731
      %v764 = vpack.c.b16 %v732, %v732
      %v765 = vpack.c.b16 %v733, %v733
      %v766 = vpack.c.b16 %v734, %v734
      %v767 = vpack.c.b16 %v735, %v735
      %v768 = vpack.c.b16 %v736, %v736
      %v769 = vpack.c.b16 %v737, %v737
      %v770 = vpack.c.b16 %v738, %v738
      %v771 = vpack.c.b16 %v739, %v739
      %v772 = vpack.c.b16 %v740, %v740
      %v773 = vpack.c.b16 %v741, %v741
      %v774 = vpack.c.b16 %v742, %v742
      %v775 = vpack.c.b16 %v743, %v743
      %v776 = vpack.c.b16 %v744, %v744
      %v777 = vpack.c.b16 %v745, %v745
      %v778 = vpack.c.b16 %v746, %v746
      %v779 = vpack.c.b16 %v747, %v747
      %v780 = vpack.c.b16 %v748, %v748
      %v781 = vpack.c.b16 %v749, %v749
      %v782 = vpack.c.b16 %v750, %v750
      %v783 = vpack.c.b16 %v751, %v751
      %v784 = vpack.c.b16 %v752, %v752
      %v785 = vpack.c.b16 %v753, %v753
      %v786 = vpack.c.b16 %v754, %v754
      %v787 = vpack.c.b16 %v755, %v755
      %v788 = vpack.c.b16 %v756, %v756
      %v789 = vpack.c.b16 %v757, %v757
      %v790 = vpack.c.b16 %v758, %v758
      %v791 = vpack.c.b16 %v759, %v759
      %v792 = vpack.c.b16 %v760, %v760
      %v793 = vpack.c.b16 %v761, %v761
      %v794 = vpack.c.b16 %v762, %v762
      %827 = vst [vmem:[%s175] sm:$0xf] %v763
      %828 = vst [vmem:[%s175 + $0x4] sm:$0xf] %v764
      %829 = vst [vmem:[%s175 + $0x8] sm:$0xf] %v765
      %830 = vst [vmem:[%s175 + $0xc] sm:$0xf] %v766
      %831 = vst [vmem:[%s175 + $0x10] sm:$0xf] %v767
      %832 = vst [vmem:[%s175 + $0x14] sm:$0xf] %v768
      %833 = vst [vmem:[%s175 + $0x18] sm:$0xf] %v769
      %834 = vst [vmem:[%s175 + $0x1c] sm:$0xf] %v770
      %835 = vst [vmem:[%s175 + $0x20] sm:$0xf] %v771
      %836 = vst [vmem:[%s175 + $0x24] sm:$0xf] %v772
      %837 = vst [vmem:[%s175 + $0x28] sm:$0xf] %v773
      %838 = vst [vmem:[%s175 + $0x2c] sm:$0xf] %v774
      %839 = vst [vmem:[%s175 + $0x30] sm:$0xf] %v775
      %840 = vst [vmem:[%s175 + $0x34] sm:$0xf] %v776
      %841 = vst [vmem:[%s175 + $0x38] sm:$0xf] %v777
      %842 = vst [vmem:[%s175 + $0x3c] sm:$0xf] %v778
      %843 = vst [vmem:[%s175 + $0x40] sm:$0xf] %v779
      %844 = vst [vmem:[%s175 + $0x44] sm:$0xf] %v780
      %845 = vst [vmem:[%s175 + $0x48] sm:$0xf] %v781
      %846 = vst [vmem:[%s175 + $0x4c] sm:$0xf] %v782
      %847 = vst [vmem:[%s175 + $0x50] sm:$0xf] %v783
      %848 = vst [vmem:[%s175 + $0x54] sm:$0xf] %v784
      %849 = vst [vmem:[%s175 + $0x58] sm:$0xf] %v785
      %850 = vst [vmem:[%s175 + $0x5c] sm:$0xf] %v786
      %851 = vst [vmem:[%s175 + $0x60] sm:$0xf] %v787
      %852 = vst [vmem:[%s175 + $0x64] sm:$0xf] %v788
      %853 = vst [vmem:[%s175 + $0x68] sm:$0xf] %v789
      %854 = vst [vmem:[%s175 + $0x6c] sm:$0xf] %v790
      %855 = vst [vmem:[%s175 + $0x70] sm:$0xf] %v791
      %856 = vst [vmem:[%s175 + $0x74] sm:$0xf] %v792
      %857 = vst [vmem:[%s175 + $0x78] sm:$0xf] %v793
      %858 = vst [vmem:[%s175 + $0x7c] sm:$0xf] %v794
      %s859 = smul.u32 32, %s14
      %p860 = scmp.lt.s32.totalorder %s859, 63
      %s861 = scalar_select %p860, %s859, 63
      %s862 = smul.addr %s861, 4
      %s863 = scalar_lea.vmem %s3, %s862
      // Predicated region
      $region33: #{encoder_forward.3} parent=31 // pred_check
        %p864 = pneg %p100
      $region34: #{encoder_forward.3} parent=31 // pred_check_branch
        %866 = sbr.rel (%p864) target = $region36
      $region35: #{encoder_forward.3} parent=31 // pred_region
        %s867 = smul.u32 32, %s14
      $region36: #{encoder_forward.3} parent=31 // pred_fallthru
        _
    $region32: #{encoder_forward.3} parent=5 // pred_fallthru
      _
    %p868 = scmp.le.s32.totalorder 2, %s9
    // Predicated region
    $region37: #{encoder_forward.3} parent=5 // pred_check
      %p869 = pneg %p868
    $region38: #{encoder_forward.3} parent=5 // pred_check_branch
      %871 = sbr.rel (%p869) target = $region40
    $region39: #{encoder_forward.3} parent=5 // pred_region
      %s872 = ssub.s32 %s9, 2
      // Predicated region
      $region41: #{encoder_forward.3} parent=39 // pred_check
        %p873 = pneg %p106
      $region42: #{encoder_forward.3} parent=39 // pred_check_branch
        %875 = sbr.rel (%p873) target = $region44
      $region43: #{encoder_forward.3} parent=39 // pred_region
        %s876 = smul.u32 32, %s15
        %p877 = scmp.lt.s32.totalorder %s876, 63
        %s878 = scalar_select %p877, %s876, 63
        %s879 = smul.addr %s878, 4
        %s880 = scalar_lea.vmem %s3, %s879
      $region44: #{encoder_forward.3} parent=39 // pred_fallthru
        _
    $region40: #{encoder_forward.3} parent=5 // pred_fallthru
      _
  $region6: #{encoder_forward.3} parent=0 // loop_footer
    %s13 = sadd.s32 1, %s9
  $region7: #{encoder_forward.3} parent=0 // loop_footer_branch
    %8 = sbr.rel target = $region3
  $region8: #{encoder_forward.3} parent=0 // loop_exit
    _

// kernel: encoder_forward.4
$region0: #{encoder_forward.4}
  #allocation0 [shape = 'u32[]', space=smem, size = 0x4, offset = 0x4, fixed_abs, tag = 'smem constant byte address 0x4 - core index']
  #allocation1 [shape = 'u32[144,128]{1,0:T(1,128)}', space=vmem, size = 0x12000, scoped, tag = 'internal scratch']
  %s0 = inlined_call_operand.vmem [shape: bf16[72,512], index: 0, kind: input, shape index: {}]
  %s1 = inlined_call_operand.vmem [shape: bf16[512,128], index: 1, kind: input, shape index: {}]
  %s2 = inlined_call_operand.vmem [shape: f32[1,128], index: 2, kind: input, shape index: {}]
  %s3 = inlined_call_operand.vmem [shape: bf16[72,128], index: 3, kind: output, shape index: {}]
  %s4 = sld [smem:[#allocation0]]
  $region22: #{encoder_forward.4} parent=0
    _
  %s6 = ssub.s32 1, %s4
  %s7 = scalar_select 0, %s6, %s4
  // Predicated region
  $region2: #{encoder_forward.4} parent=0 // pred_check
    _
  $region3: #{encoder_forward.4} parent=0 // pred_check_branch
    %9 = sbr.rel (0) target = $region5
  $region4: #{encoder_forward.4} parent=0 // pred_region
    _
  $region5: #{encoder_forward.4} parent=0 // pred_fallthru
    _
  // Predicated region
  $region6: #{encoder_forward.4} parent=0 // pred_check
    _
  $region7: #{encoder_forward.4} parent=0 // pred_check_branch
    %11 = sbr.rel (0) target = $region9
  $region8: #{encoder_forward.4} parent=0 // pred_region
    _
  $region9: #{encoder_forward.4} parent=0 // pred_fallthru
    _
  // Predicated region
  $region10: #{encoder_forward.4} parent=0 // pred_check
    _
  $region11: #{encoder_forward.4} parent=0 // pred_check_branch
    %13 = sbr.rel (0) target = $region13
  $region12: #{encoder_forward.4} parent=0 // pred_region
    _
  $region13: #{encoder_forward.4} parent=0 // pred_fallthru
    _
  %v15 = vld [vmem:[%s0] sm:$0xff]
  %v16 = vld [vmem:[%s0 + $0x8] sm:$0xff]
  %v17 = vld [vmem:[%s0 + $0x10] sm:$0xff]
  %v18 = vld [vmem:[%s0 + $0x18] sm:$0xff]
  %v19 = vld [vmem:[%s0 + $0x20] sm:$0xff]
  %v20 = vld [vmem:[%s0 + $0x28] sm:$0xff]
  %v21 = vld [vmem:[%s0 + $0x30] sm:$0xff]
  %v22 = vld [vmem:[%s0 + $0x38] sm:$0xff]
  %v23 = vld [vmem:[%s0 + $0x40] sm:$0xff]
  %v24 = vld [vmem:[%s0 + $0x48] sm:$0xff]
  %v25 = vld [vmem:[%s0 + $0x50] sm:$0xff]
  %v26 = vld [vmem:[%s0 + $0x58] sm:$0xff]
  %v27 = vld [vmem:[%s0 + $0x60] sm:$0xff]
  %v28 = vld [vmem:[%s0 + $0x68] sm:$0xff]
  %v29 = vld [vmem:[%s0 + $0x70] sm:$0xff]
  %v30 = vld [vmem:[%s0 + $0x78] sm:$0xff]
  %v31 = vld [vmem:[%s0 + $0x80] sm:$0xff]
  %v32 = vld [vmem:[%s0 + $0x88] sm:$0xff]
  %v33 = vld [vmem:[%s1] sm:$0xf]
  %v34 = vld [vmem:[%s1 + $0x4] sm:$0xf]
  %v35 = vld [vmem:[%s1 + $0x8] sm:$0xf]
  %v36 = vld [vmem:[%s1 + $0xc] sm:$0xf]
  %v37 = vld [vmem:[%s1 + $0x10] sm:$0xf]
  %v38 = vld [vmem:[%s1 + $0x14] sm:$0xf]
  %v39 = vld [vmem:[%s1 + $0x18] sm:$0xf]
  %v40 = vld [vmem:[%s1 + $0x1c] sm:$0xf]
  %v41 = vld [vmem:[%s1 + $0x20] sm:$0xf]
  %v42 = vld [vmem:[%s1 + $0x24] sm:$0xf]
  %v43 = vld [vmem:[%s1 + $0x28] sm:$0xf]
  %v44 = vld [vmem:[%s1 + $0x2c] sm:$0xf]
  %v45 = vld [vmem:[%s1 + $0x30] sm:$0xf]
  %v46 = vld [vmem:[%s1 + $0x34] sm:$0xf]
  %v47 = vld [vmem:[%s1 + $0x38] sm:$0xf]
  %v48 = vld [vmem:[%s1 + $0x3c] sm:$0xf]
  %v49 = vld [vmem:[%s1 + $0x40] sm:$0xf]
  %v50 = vld [vmem:[%s1 + $0x44] sm:$0xf]
  %v51 = vld [vmem:[%s1 + $0x48] sm:$0xf]
  %v52 = vld [vmem:[%s1 + $0x4c] sm:$0xf]
  %v53 = vld [vmem:[%s1 + $0x50] sm:$0xf]
  %v54 = vld [vmem:[%s1 + $0x54] sm:$0xf]
  %v55 = vld [vmem:[%s1 + $0x58] sm:$0xf]
  %v56 = vld [vmem:[%s1 + $0x5c] sm:$0xf]
  %v57 = vld [vmem:[%s1 + $0x60] sm:$0xf]
  %v58 = vld [vmem:[%s1 + $0x64] sm:$0xf]
  %v59 = vld [vmem:[%s1 + $0x68] sm:$0xf]
  %v60 = vld [vmem:[%s1 + $0x6c] sm:$0xf]
  %v61 = vld [vmem:[%s1 + $0x70] sm:$0xf]
  %v62 = vld [vmem:[%s1 + $0x74] sm:$0xf]
  %v63 = vld [vmem:[%s1 + $0x78] sm:$0xf]
  %v64 = vld [vmem:[%s1 + $0x7c] sm:$0xf]
  %v65 = vld [vmem:[%s1 + $0x80] sm:$0xf]
  %v66 = vld [vmem:[%s1 + $0x84] sm:$0xf]
  %v67 = vld [vmem:[%s1 + $0x88] sm:$0xf]
  %v68 = vld [vmem:[%s1 + $0x8c] sm:$0xf]
  %v69 = vld [vmem:[%s1 + $0x90] sm:$0xf]
  %v70 = vld [vmem:[%s1 + $0x94] sm:$0xf]
  %v71 = vld [vmem:[%s1 + $0x98] sm:$0xf]
  %v72 = vld [vmem:[%s1 + $0x9c] sm:$0xf]
  %v73 = vld [vmem:[%s1 + $0xa0] sm:$0xf]
  %v74 = vld [vmem:[%s1 + $0xa4] sm:$0xf]
  %v75 = vld [vmem:[%s1 + $0xa8] sm:$0xf]
  %v76 = vld [vmem:[%s1 + $0xac] sm:$0xf]
  %v77 = vld [vmem:[%s1 + $0xb0] sm:$0xf]
  %v78 = vld [vmem:[%s1 + $0xb4] sm:$0xf]
  %v79 = vld [vmem:[%s1 + $0xb8] sm:$0xf]
  %v80 = vld [vmem:[%s1 + $0xbc] sm:$0xf]
  %v81 = vld [vmem:[%s1 + $0xc0] sm:$0xf]
  %v82 = vld [vmem:[%s1 + $0xc4] sm:$0xf]
  %v83 = vld [vmem:[%s1 + $0xc8] sm:$0xf]
  %v84 = vld [vmem:[%s1 + $0xcc] sm:$0xf]
  %v85 = vld [vmem:[%s1 + $0xd0] sm:$0xf]
  %v86 = vld [vmem:[%s1 + $0xd4] sm:$0xf]
  %v87 = vld [vmem:[%s1 + $0xd8] sm:$0xf]
  %v88 = vld [vmem:[%s1 + $0xdc] sm:$0xf]
  %v89 = vld [vmem:[%s1 + $0xe0] sm:$0xf]
  %v90 = vld [vmem:[%s1 + $0xe4] sm:$0xf]
  %v91 = vld [vmem:[%s1 + $0xe8] sm:$0xf]
  %v92 = vld [vmem:[%s1 + $0xec] sm:$0xf]
  %v93 = vld [vmem:[%s1 + $0xf0] sm:$0xf]
  %v94 = vld [vmem:[%s1 + $0xf4] sm:$0xf]
  %v95 = vld [vmem:[%s1 + $0xf8] sm:$0xf]
  %v96 = vld [vmem:[%s1 + $0xfc] sm:$0xf]
  %v97 = vld [vmem:[%s2] sm:$0x1]
  %v99 = vlaneseq
  %v100 = vshrl.u32 %v99, 7
  %v101 = vsub.s32 0, %v100
  %v102 = vrot.slane %v97, %v101
  %v122 = vunpack.c.l.b16 %v15
  %v123 = vunpack.c.h.b16 %v15
  %v124 = vunpack.c.l.b16 %v16
  %v125 = vunpack.c.h.b16 %v16
  %v126 = vunpack.c.l.b16 %v17
  %v127 = vunpack.c.h.b16 %v17
  %v128 = vunpack.c.l.b16 %v18
  %v129 = vunpack.c.h.b16 %v18
  %v130 = vunpack.c.l.b16 %v19
  %v131 = vunpack.c.h.b16 %v19
  %v132 = vunpack.c.l.b16 %v20
  %v133 = vunpack.c.h.b16 %v20
  %v134 = vunpack.c.l.b16 %v21
  %v135 = vunpack.c.h.b16 %v21
  %v136 = vunpack.c.l.b16 %v22
  %v137 = vunpack.c.h.b16 %v22
  %v138 = vunpack.c.l.b16 %v23
  %v139 = vunpack.c.h.b16 %v23
  %v140 = vunpack.c.l.b16 %v24
  %v141 = vunpack.c.h.b16 %v24
  %v142 = vunpack.c.l.b16 %v25
  %v143 = vunpack.c.h.b16 %v25
  %v144 = vunpack.c.l.b16 %v26
  %v145 = vunpack.c.h.b16 %v26
  %v146 = vunpack.c.l.b16 %v27
  %v147 = vunpack.c.h.b16 %v27
  %v148 = vunpack.c.l.b16 %v28
  %v149 = vunpack.c.h.b16 %v28
  %v150 = vunpack.c.l.b16 %v29
  %v151 = vunpack.c.h.b16 %v29
  %v152 = vunpack.c.l.b16 %v30
  %v153 = vunpack.c.h.b16 %v30
  %v154 = vunpack.c.l.b16 %v31
  %v155 = vunpack.c.h.b16 %v31
  %v156 = vunpack.c.l.b16 %v32
  %v157 = vunpack.c.h.b16 %v32
  %v158 = vpack.c.b16 %v126, %v122
  %v159 = vpack.c.b16 %v127, %v123
  %v160 = vpack.c.b16 %v128, %v124
  %v161 = vpack.c.b16 %v129, %v125
  %v162 = vpack.c.b16 %v134, %v130
  %v163 = vpack.c.b16 %v135, %v131
  %v164 = vpack.c.b16 %v136, %v132
  %v165 = vpack.c.b16 %v137, %v133
  %v166 = vpack.c.b16 %v142, %v138
  %v167 = vpack.c.b16 %v143, %v139
  %v168 = vpack.c.b16 %v144, %v140
  %v169 = vpack.c.b16 %v145, %v141
  %v170 = vpack.c.b16 %v150, %v146
  %v171 = vpack.c.b16 %v151, %v147
  %v172 = vpack.c.b16 %v152, %v148
  %v173 = vpack.c.b16 %v153, %v149
  %v174 = vpack.c.b16 %v154, %v154
  %v175 = vpack.c.b16 %v155, %v155
  %v176 = vpack.c.b16 %v156, %v156
  %v177 = vpack.c.b16 %v157, %v157
  %v262 = vunpack.c.l.b16 %v33
  %v263 = vunpack.c.l.b16 %v34
  %v264 = vunpack.c.l.b16 %v35
  %v265 = vunpack.c.l.b16 %v36
  %v266 = vunpack.c.l.b16 %v37
  %v267 = vunpack.c.l.b16 %v38
  %v268 = vunpack.c.l.b16 %v39
  %v269 = vunpack.c.l.b16 %v40
  %v270 = vunpack.c.l.b16 %v41
  %v271 = vunpack.c.l.b16 %v42
  %v272 = vunpack.c.l.b16 %v43
  %v273 = vunpack.c.l.b16 %v44
  %v274 = vunpack.c.l.b16 %v45
  %v275 = vunpack.c.l.b16 %v46
  %v276 = vunpack.c.l.b16 %v47
  %v277 = vunpack.c.l.b16 %v48
  %v278 = vunpack.c.l.b16 %v49
  %v279 = vunpack.c.l.b16 %v50
  %v280 = vunpack.c.l.b16 %v51
  %v281 = vunpack.c.l.b16 %v52
  %v282 = vunpack.c.l.b16 %v53
  %v283 = vunpack.c.l.b16 %v54
  %v284 = vunpack.c.l.b16 %v55
  %v285 = vunpack.c.l.b16 %v56
  %v286 = vunpack.c.l.b16 %v57
  %v287 = vunpack.c.l.b16 %v58
  %v288 = vunpack.c.l.b16 %v59
  %v289 = vunpack.c.l.b16 %v60
  %v290 = vunpack.c.l.b16 %v61
  %v291 = vunpack.c.l.b16 %v62
  %v292 = vunpack.c.l.b16 %v63
  %v293 = vunpack.c.l.b16 %v64
  %v294 = vunpack.c.l.b16 %v65
  %v295 = vunpack.c.l.b16 %v66
  %v296 = vunpack.c.l.b16 %v67
  %v297 = vunpack.c.l.b16 %v68
  %v298 = vunpack.c.l.b16 %v69
  %v299 = vunpack.c.l.b16 %v70
  %v300 = vunpack.c.l.b16 %v71
  %v301 = vunpack.c.l.b16 %v72
  %v302 = vunpack.c.l.b16 %v73
  %v303 = vunpack.c.l.b16 %v74
  %v304 = vunpack.c.l.b16 %v75
  %v305 = vunpack.c.l.b16 %v76
  %v306 = vunpack.c.l.b16 %v77
  %v307 = vunpack.c.l.b16 %v78
  %v308 = vunpack.c.l.b16 %v79
  %v309 = vunpack.c.l.b16 %v80
  %v310 = vunpack.c.l.b16 %v81
  %v311 = vunpack.c.l.b16 %v82
  %v312 = vunpack.c.l.b16 %v83
  %v313 = vunpack.c.l.b16 %v84
  %v314 = vunpack.c.l.b16 %v85
  %v315 = vunpack.c.l.b16 %v86
  %v316 = vunpack.c.l.b16 %v87
  %v317 = vunpack.c.l.b16 %v88
  %v318 = vunpack.c.l.b16 %v89
  %v319 = vunpack.c.l.b16 %v90
  %v320 = vunpack.c.l.b16 %v91
  %v321 = vunpack.c.l.b16 %v92
  %v322 = vunpack.c.l.b16 %v93
  %v323 = vunpack.c.l.b16 %v94
  %v324 = vunpack.c.l.b16 %v95
  %v325 = vunpack.c.l.b16 %v96
  %v326 = vpack.c.b16 %v263, %v262
  %v327 = vpack.c.b16 %v265, %v264
  %v328 = vpack.c.b16 %v267, %v266
  %v329 = vpack.c.b16 %v269, %v268
  %v330 = vpack.c.b16 %v271, %v270
  %v331 = vpack.c.b16 %v273, %v272
  %v332 = vpack.c.b16 %v275, %v274
  %v333 = vpack.c.b16 %v277, %v276
  %v334 = vpack.c.b16 %v279, %v278
  %v335 = vpack.c.b16 %v281, %v280
  %v336 = vpack.c.b16 %v283, %v282
  %v337 = vpack.c.b16 %v285, %v284
  %v338 = vpack.c.b16 %v287, %v286
  %v339 = vpack.c.b16 %v289, %v288
  %v340 = vpack.c.b16 %v291, %v290
  %v341 = vpack.c.b16 %v293, %v292
  %v342 = vpack.c.b16 %v295, %v294
  %v343 = vpack.c.b16 %v297, %v296
  %v344 = vpack.c.b16 %v299, %v298
  %v345 = vpack.c.b16 %v301, %v300
  %v346 = vpack.c.b16 %v303, %v302
  %v347 = vpack.c.b16 %v305, %v304
  %v348 = vpack.c.b16 %v307, %v306
  %v349 = vpack.c.b16 %v309, %v308
  %v350 = vpack.c.b16 %v311, %v310
  %v351 = vpack.c.b16 %v313, %v312
  %v352 = vpack.c.b16 %v315, %v314
  %v353 = vpack.c.b16 %v317, %v316
  %v354 = vpack.c.b16 %v319, %v318
  %v355 = vpack.c.b16 %v321, %v320
  %v356 = vpack.c.b16 %v323, %v322
  %v357 = vpack.c.b16 %v325, %v324
  %390 = vmatprep.subr.bf16.mxu0 0
  %391 = vmatpush1.bf16.msra.mxu0 %v333
  %392 = vmatprep.subr.bf16.mxu0 0
  %393 = vmatpush1.bf16.msra.mxu0 %v332
  %394 = vmatprep.subr.bf16.mxu0 0
  %395 = vmatpush1.bf16.msra.mxu0 %v331
  %396 = vmatprep.subr.bf16.mxu0 0
  %397 = vmatpush1.bf16.msra.mxu0 %v330
  %398 = vmatprep.subr.bf16.mxu0 0
  %399 = vmatpush1.bf16.msra.mxu0 %v329
  %400 = vmatprep.subr.bf16.mxu0 0
  %401 = vmatpush1.bf16.msra.mxu0 %v328
  %402 = vmatprep.subr.bf16.mxu0 0
  %403 = vmatpush1.bf16.msra.mxu0 %v327
  %404 = vmatprep.subr.bf16.mxu0 0
  %405 = vmatpush1.bf16.msra.mxu0 %v326
  %406 = vmatprep.subr.bf16.mxu0 0
  %407 = vmatpush2.bf16.msra.mxu0 %v341
  %408 = vmatprep.subr.bf16.mxu0 0
  %409 = vmatpush2.bf16.msra.mxu0 %v340
  %410 = vmatprep.subr.bf16.mxu0 0
  %411 = vmatpush2.bf16.msra.mxu0 %v339
  %412 = vmatprep.subr.bf16.mxu0 0
  %413 = vmatpush2.bf16.msra.mxu0 %v338
  %414 = vmatprep.subr.bf16.mxu0 0
  %415 = vmatpush2.bf16.msra.mxu0 %v337
  %416 = vmatprep.subr.bf16.mxu0 0
  %417 = vmatpush2.bf16.msra.mxu0 %v336
  %418 = vmatprep.subr.bf16.mxu0 0
  %419 = vmatpush2.bf16.msra.mxu0 %v335
  %420 = vmatprep.subr.bf16.mxu0 0
  %421 = vmatpush2.bf16.msra.mxu0 %v334
  %422 = vmatprep.mubr.bf16.mxu0 %v159
  %423 = vmatmul.mubr.bf16.gmra.mxu0 %v158
  %v424 = vpop.f32.mrf.mxu0
  %v425 = vadd.f32 %v102, %v424
  %v426 = vpop.f32.mrf.mxu0
  %v427 = vpop.f32.mrf.mxu0
  %v428 = vadd.f32 %v102, %v427
  %v429 = vpop.f32.mrf.mxu0
  %430 = vmatprep.mubr.bf16.mxu0 %v163
  %431 = vmatmul.mubr.bf16.gmra.mxu0 %v162
  %v432 = vpop.f32.mrf.mxu0
  %v433 = vadd.f32 %v102, %v432
  %v434 = vpop.f32.mrf.mxu0
  %v435 = vpop.f32.mrf.mxu0
  %v436 = vadd.f32 %v102, %v435
  %v437 = vpop.f32.mrf.mxu0
  %438 = vmatprep.mubr.bf16.mxu0 %v167
  %439 = vmatmul.mubr.bf16.gmra.mxu0 %v166
  %v440 = vpop.f32.mrf.mxu0
  %v441 = vadd.f32 %v102, %v440
  %v442 = vpop.f32.mrf.mxu0
  %v443 = vpop.f32.mrf.mxu0
  %v444 = vadd.f32 %v102, %v443
  %v445 = vpop.f32.mrf.mxu0
  %446 = vmatprep.mubr.bf16.mxu0 %v171
  %447 = vmatmul.mubr.bf16.gmra.mxu0 %v170
  %v448 = vpop.f32.mrf.mxu0
  %v449 = vadd.f32 %v102, %v448
  %v450 = vpop.f32.mrf.mxu0
  %v451 = vpop.f32.mrf.mxu0
  %v452 = vadd.f32 %v102, %v451
  %v453 = vpop.f32.mrf.mxu0
  %454 = vmatprep.mubr.bf16.mxu0 %v175
  %455 = vmatmul.mubr.bf16.gmra.mxu0 %v174
  %v456 = vpop.f32.mrf.mxu0
  %v457 = vadd.f32 %v102, %v456
  %v458 = vpop.f32.mrf.mxu0
  %v459 = vpop.f32.mrf.mxu0
  %v460 = vpop.f32.mrf.mxu0
  %461 = vdwg.mxu0
  %462 = vmatprep.subr.bf16.mxu0 0
  %463 = vmatpush1.bf16.msra.mxu0 %v349
  %464 = vmatprep.subr.bf16.mxu0 0
  %465 = vmatpush1.bf16.msra.mxu0 %v348
  %466 = vmatprep.subr.bf16.mxu0 0
  %467 = vmatpush1.bf16.msra.mxu0 %v347
  %468 = vmatprep.subr.bf16.mxu0 0
  %469 = vmatpush1.bf16.msra.mxu0 %v346
  %470 = vmatprep.subr.bf16.mxu0 0
  %471 = vmatpush1.bf16.msra.mxu0 %v345
  %472 = vmatprep.subr.bf16.mxu0 0
  %473 = vmatpush1.bf16.msra.mxu0 %v344
  %474 = vmatprep.subr.bf16.mxu0 0
  %475 = vmatpush1.bf16.msra.mxu0 %v343
  %476 = vmatprep.subr.bf16.mxu0 0
  %477 = vmatpush1.bf16.msra.mxu0 %v342
  %478 = vmatprep.subr.bf16.mxu0 0
  %479 = vmatpush2.bf16.msra.mxu0 %v357
  %480 = vmatprep.subr.bf16.mxu0 0
  %481 = vmatpush2.bf16.msra.mxu0 %v356
  %482 = vmatprep.subr.bf16.mxu0 0
  %483 = vmatpush2.bf16.msra.mxu0 %v355
  %484 = vmatprep.subr.bf16.mxu0 0
  %485 = vmatpush2.bf16.msra.mxu0 %v354
  %486 = vmatprep.subr.bf16.mxu0 0
  %487 = vmatpush2.bf16.msra.mxu0 %v353
  %488 = vmatprep.subr.bf16.mxu0 0
  %489 = vmatpush2.bf16.msra.mxu0 %v352
  %490 = vmatprep.subr.bf16.mxu0 0
  %491 = vmatpush2.bf16.msra.mxu0 %v351
  %492 = vmatprep.subr.bf16.mxu0 0
  %493 = vmatpush2.bf16.msra.mxu0 %v350
  %494 = vmatprep.mubr.bf16.mxu0 %v161
  %495 = vmatmul.mubr.bf16.gmra.mxu0 %v160
  %v496 = vpop.f32.mrf.mxu0
  %v497 = vadd.f32 %v425, %v496
  %v498 = vpop.f32.mrf.mxu0
  %v499 = vpop.f32.mrf.mxu0
  %v500 = vadd.f32 %v428, %v499
  %v501 = vpop.f32.mrf.mxu0
  %502 = vmatprep.mubr.bf16.mxu0 %v165
  %503 = vmatmul.mubr.bf16.gmra.mxu0 %v164
  %v504 = vpop.f32.mrf.mxu0
  %v505 = vadd.f32 %v433, %v504
  %v506 = vpop.f32.mrf.mxu0
  %v507 = vpop.f32.mrf.mxu0
  %v508 = vadd.f32 %v436, %v507
  %v509 = vpop.f32.mrf.mxu0
  %510 = vmatprep.mubr.bf16.mxu0 %v169
  %511 = vmatmul.mubr.bf16.gmra.mxu0 %v168
  %v512 = vpop.f32.mrf.mxu0
  %v513 = vadd.f32 %v441, %v512
  %v514 = vpop.f32.mrf.mxu0
  %v515 = vpop.f32.mrf.mxu0
  %v516 = vadd.f32 %v444, %v515
  %v517 = vpop.f32.mrf.mxu0
  %518 = vmatprep.mubr.bf16.mxu0 %v173
  %519 = vmatmul.mubr.bf16.gmra.mxu0 %v172
  %v520 = vpop.f32.mrf.mxu0
  %v521 = vadd.f32 %v449, %v520
  %v522 = vpop.f32.mrf.mxu0
  %v523 = vpop.f32.mrf.mxu0
  %v524 = vadd.f32 %v452, %v523
  %v525 = vpop.f32.mrf.mxu0
  %526 = vmatprep.mubr.bf16.mxu0 %v177
  %527 = vmatmul.mubr.bf16.gmra.mxu0 %v176
  %v528 = vpop.f32.mrf.mxu0
  %v529 = vadd.f32 %v457, %v528
  %v530 = vpop.f32.mrf.mxu0
  %v531 = vpop.f32.mrf.mxu0
  %v532 = vpop.f32.mrf.mxu0
  %533 = vdwg.mxu0
  %v534 = vmax.f32 %v497, 0.0
  %v535 = vmax.f32 %v500, 0.0
  %v536 = vmax.f32 %v505, 0.0
  %v537 = vmax.f32 %v508, 0.0
  %v538 = vmax.f32 %v513, 0.0
  %v539 = vmax.f32 %v516, 0.0
  %v540 = vmax.f32 %v521, 0.0
  %v541 = vmax.f32 %v524, 0.0
  %v542 = vmax.f32 %v529, 0.0
  %v543 = vpack.c.bf16 %v535, %v534
  %v544 = vpack.c.bf16 %v537, %v536
  %v545 = vpack.c.bf16 %v539, %v538
  %v546 = vpack.c.bf16 %v541, %v540
  %v547 = vpack.c.bf16 %v542, %v542
  %v553 = vunpack.c.l.b16 %v543
  %v554 = vunpack.c.h.b16 %v543
  %v555 = vunpack.c.l.b16 %v544
  %v556 = vunpack.c.h.b16 %v544
  %v557 = vunpack.c.l.b16 %v545
  %v558 = vunpack.c.h.b16 %v545
  %v559 = vunpack.c.l.b16 %v546
  %v560 = vunpack.c.h.b16 %v546
  %v561 = vunpack.c.l.b16 %v547
  %v562 = vpack.c.b16 %v553, %v553
  %v563 = vpack.c.b16 %v554, %v554
  %v564 = vpack.c.b16 %v555, %v555
  %v565 = vpack.c.b16 %v556, %v556
  %v566 = vpack.c.b16 %v557, %v557
  %v567 = vpack.c.b16 %v558, %v558
  %v568 = vpack.c.b16 %v559, %v559
  %v569 = vpack.c.b16 %v560, %v560
  %v570 = vpack.c.b16 %v561, %v561
  %580 = vst [vmem:[%s3] sm:$0xf] %v562
  %581 = vst [vmem:[%s3 + $0x4] sm:$0xf] %v563
  %582 = vst [vmem:[%s3 + $0x8] sm:$0xf] %v564
  %583 = vst [vmem:[%s3 + $0xc] sm:$0xf] %v565
  %584 = vst [vmem:[%s3 + $0x10] sm:$0xf] %v566
  %585 = vst [vmem:[%s3 + $0x14] sm:$0xf] %v567
  %586 = vst [vmem:[%s3 + $0x18] sm:$0xf] %v568
  %587 = vst [vmem:[%s3 + $0x1c] sm:$0xf] %v569
  %588 = vst [vmem:[%s3 + $0x20] sm:$0xf] %v570
  // Predicated region
  $region14: #{encoder_forward.4} parent=0 // pred_check
    _
  $region15: #{encoder_forward.4} parent=0 // pred_check_branch
    %590 = sbr.rel (0) target = $region17
  $region16: #{encoder_forward.4} parent=0 // pred_region
    _
  $region17: #{encoder_forward.4} parent=0 // pred_fallthru
    _
  // Predicated region
  $region18: #{encoder_forward.4} parent=0 // pred_check
    _
  $region19: #{encoder_forward.4} parent=0 // pred_check_branch
    %592 = sbr.rel (0) target = $region21
  $region20: #{encoder_forward.4} parent=0 // pred_region
    _
  $region21: #{encoder_forward.4} parent=0 // pred_fallthru
    _

// kernel: encoder_forward.5
$region0: #{encoder_forward.5}
  #allocation0 [shape = 'u32[]', space=smem, size = 0x4, offset = 0x4, fixed_abs, tag = 'smem constant byte address 0x4 - core index']
  #allocation1 [shape = 'u32[144,128]{1,0:T(1,128)}', space=vmem, size = 0x12000, scoped, tag = 'internal scratch']
  #allocation2 [shape = 'f32[16,64]{1,0:T(8,128)}', space=vmem, size = 0x2000, scoped, tag = 'scratch operand']
  #allocation3 [shape = 'bf16[32,64]{1,0:T(8,128)(2,1)}', space=vmem, size = 0x2000, scoped, tag = 'scratch operand']
  %s0 = inlined_call_operand.vmem [shape: bf16[2,8,288], index: 0, kind: input, shape index: {}]
  %s1 = inlined_call_operand.vmem [shape: bf16[288,64], index: 1, kind: input, shape index: {}]
  %s2 = inlined_call_operand.vmem [shape: f32[1,64], index: 2, kind: input, shape index: {}]
  %s3 = inlined_call_operand.vmem [shape: f32[16,1], index: 3, kind: input, shape index: {}]
  %s4 = inlined_call_operand.vmem [shape: bf16[576,32], index: 4, kind: input, shape index: {}]
  %s5 = inlined_call_operand.vmem [shape: bf16[32,64], index: 5, kind: input, shape index: {}]
  %s6 = inlined_call_operand.hbm [shape: f32[2,4,64], index: 6, kind: output, shape index: {}]
  %s7 = sld [smem:[#allocation0]]
  $region57: #{encoder_forward.5} parent=0
    _
  %s9 = ssub.s32 1, %s7
  %s10 = scalar_select 0, %s9, %s7
  $region1: #{encoder_forward.5} parent=0
    #allocation4 [shape = 'u8[4096]{0}', space=vmem, size = 0x1000, scoped, tag = 'output window, operand 0']
    #allocation5 [shape = 's32[2]{0}', space=sflag, size = 0x8, scoped, tag = 'scoped memory for encoder_forward.5']
    %11 = vsyncpa [#allocation5], 0
    %s12 = scalar_lea.sflag [#allocation5], 1
    %13 = vsyncpa %s12, 0
    loop: start=0, step=1, limit=4
    $region2: #{encoder_forward.5} parent=1 // loop_pre_header
      _
    $region3: #{encoder_forward.5} parent=1 // loop_header
      %s15 = sphi 0, %s19
      %p16 = scmp.ge.s32.totalorder %s15, 4
      %s25 = sphi 0, %s27
      %s28 = sphi 0, %s25
      %s29 = sphi 0, %s28
      %s45 = sphi 0, %s29
      %s49 = sphi 0, %s49
      %s51 = sphi 0, %s49
      %s52 = sphi 0, %s51
      %s66 = sphi 0, %s52
      %s70 = sphi 0, %s70
      %s72 = sphi 0, %s70
      %s73 = sphi 0, %s72
      %s87 = sphi 0, %s73
      %s91 = sphi 0, %s91
      %s93 = sphi 0, %s91
      %s94 = sphi 0, %s93
      %s108 = sphi 0, %s94
      %s112 = sphi 0, %s112
      %s114 = sphi 0, %s112
      %s115 = sphi 0, %s114
      %s129 = sphi 0, %s115
      %s133 = sphi 0, %s133
      %s135 = sphi 0, %s133
      %s136 = sphi 0, %s135
      %s150 = sphi 0, %s136
      %s156 = sphi 0, %s158
      %s159 = sphi 0, %s156
      %s160 = sphi 0, %s159
      %s176 = sphi 0, %s160
    $region4: #{encoder_forward.5} parent=1 // loop_header_branch
      %18 = sbr.rel (%p16) target = $region8
    $region5: #{encoder_forward.5} parent=1 // loop_body
      %s20 = ssub.s32 %s15, 1
      %s21 = ssub.s32 %s15, 2
      %s22 = sadd.s32 %s15, 1
      %s23 = ssub.s32 %s15, %s22
      %p24 = scmp.eq.s32.totalorder %s23, 0
      %s26 = sadd.s32 %s25, 1
      %s27 = scalar_select %p24, %s25, %s26
      %p30 = pneg %p24
      %p31 = scmp.eq.s32.totalorder %s15, 1
      %p32 = por %p30, %p31
      %p33 = scmp.ne.s32.totalorder %s25, %s28
      %p34 = scmp.eq.s32.totalorder %s15, 0
      %p35 = por %p33, %p34
      %p36 = scmp.ne.s32.totalorder %s25, %s28
      %p37 = scmp.eq.s32.totalorder %s20, 1
      %p38 = por %p36, %p37
      %p39 = scmp.ne.s32.totalorder %s28, %s29
      %p40 = scmp.eq.s32.totalorder %s20, 0
      %p41 = por %p39, %p40
      %p42 = scmp.ne.s32.totalorder %s28, %s29
      %p43 = scmp.eq.s32.totalorder %s21, 1
      %p44 = por %p42, %p43
      %p46 = scmp.ne.s32.totalorder %s29, %s45
      %p47 = scmp.eq.s32.totalorder %s21, 0
      %p48 = por %p46, %p47
      %s50 = sadd.s32 %s49, 1
      %p53 = scmp.eq.s32.totalorder %s15, 1
      %p54 = scmp.ne.s32.totalorder %s49, %s51
      %p55 = scmp.eq.s32.totalorder %s15, 0
      %p56 = por %p54, %p55
      %p57 = scmp.ne.s32.totalorder %s49, %s51
      %p58 = scmp.eq.s32.totalorder %s20, 1
      %p59 = por %p57, %p58
      %p60 = scmp.ne.s32.totalorder %s51, %s52
      %p61 = scmp.eq.s32.totalorder %s20, 0
      %p62 = por %p60, %p61
      %p63 = scmp.ne.s32.totalorder %s51, %s52
      %p64 = scmp.eq.s32.totalorder %s21, 1
      %p65 = por %p63, %p64
      %p67 = scmp.ne.s32.totalorder %s52, %s66
      %p68 = scmp.eq.s32.totalorder %s21, 0
      %p69 = por %p67, %p68
      %s71 = sadd.s32 %s70, 1
      %p74 = scmp.eq.s32.totalorder %s15, 1
      %p75 = scmp.ne.s32.totalorder %s70, %s72
      %p76 = scmp.eq.s32.totalorder %s15, 0
      %p77 = por %p75, %p76
      %p78 = scmp.ne.s32.totalorder %s70, %s72
      %p79 = scmp.eq.s32.totalorder %s20, 1
      %p80 = por %p78, %p79
      %p81 = scmp.ne.s32.totalorder %s72, %s73
      %p82 = scmp.eq.s32.totalorder %s20, 0
      %p83 = por %p81, %p82
      %p84 = scmp.ne.s32.totalorder %s72, %s73
      %p85 = scmp.eq.s32.totalorder %s21, 1
      %p86 = por %p84, %p85
      %p88 = scmp.ne.s32.totalorder %s73, %s87
      %p89 = scmp.eq.s32.totalorder %s21, 0
      %p90 = por %p88, %p89
      %s92 = sadd.s32 %s91, 1
      %p95 = scmp.eq.s32.totalorder %s15, 1
      %p96 = scmp.ne.s32.totalorder %s91, %s93
      %p97 = scmp.eq.s32.totalorder %s15, 0
      %p98 = por %p96, %p97
      %p99 = scmp.ne.s32.totalorder %s91, %s93
      %p100 = scmp.eq.s32.totalorder %s20, 1
      %p101 = por %p99, %p100
      %p102 = scmp.ne.s32.totalorder %s93, %s94
      %p103 = scmp.eq.s32.totalorder %s20, 0
      %p104 = por %p102, %p103
      %p105 = scmp.ne.s32.totalorder %s93, %s94
      %p106 = scmp.eq.s32.totalorder %s21, 1
      %p107 = por %p105, %p106
      %p109 = scmp.ne.s32.totalorder %s94, %s108
      %p110 = scmp.eq.s32.totalorder %s21, 0
      %p111 = por %p109, %p110
      %s113 = sadd.s32 %s112, 1
      %p116 = scmp.eq.s32.totalorder %s15, 1
      %p117 = scmp.ne.s32.totalorder %s112, %s114
      %p118 = scmp.eq.s32.totalorder %s15, 0
      %p119 = por %p117, %p118
      %p120 = scmp.ne.s32.totalorder %s112, %s114
      %p121 = scmp.eq.s32.totalorder %s20, 1
      %p122 = por %p120, %p121
      %p123 = scmp.ne.s32.totalorder %s114, %s115
      %p124 = scmp.eq.s32.totalorder %s20, 0
      %p125 = por %p123, %p124
      %p126 = scmp.ne.s32.totalorder %s114, %s115
      %p127 = scmp.eq.s32.totalorder %s21, 1
      %p128 = por %p126, %p127
      %p130 = scmp.ne.s32.totalorder %s115, %s129
      %p131 = scmp.eq.s32.totalorder %s21, 0
      %p132 = por %p130, %p131
      %s134 = sadd.s32 %s133, 1
      %p137 = scmp.eq.s32.totalorder %s15, 1
      %p138 = scmp.ne.s32.totalorder %s133, %s135
      %p139 = scmp.eq.s32.totalorder %s15, 0
      %p140 = por %p138, %p139
      %p141 = scmp.ne.s32.totalorder %s133, %s135
      %p142 = scmp.eq.s32.totalorder %s20, 1
      %p143 = por %p141, %p142
      %p144 = scmp.ne.s32.totalorder %s135, %s136
      %p145 = scmp.eq.s32.totalorder %s20, 0
      %p146 = por %p144, %p145
      %p147 = scmp.ne.s32.totalorder %s135, %s136
      %p148 = scmp.eq.s32.totalorder %s21, 1
      %p149 = por %p147, %p148
      %p151 = scmp.ne.s32.totalorder %s136, %s150
      %p152 = scmp.eq.s32.totalorder %s21, 0
      %p153 = por %p151, %p152
      %s154 = ssub.s32 %s15, %s22
      %p155 = scmp.eq.s32.totalorder %s154, 0
      %s157 = sadd.s32 %s156, 1
      %s158 = scalar_select %p155, %s156, %s157
      %p161 = pneg %p155
      %p162 = scmp.eq.s32.totalorder %s15, 1
      %p163 = por %p161, %p162
      %p164 = scmp.ne.s32.totalorder %s156, %s159
      %p165 = scmp.eq.s32.totalorder %s15, 0
      %p166 = por %p164, %p165
      %p167 = scmp.ne.s32.totalorder %s156, %s159
      %p168 = scmp.eq.s32.totalorder %s20, 1
      %p169 = por %p167, %p168
      %p170 = scmp.ne.s32.totalorder %s159, %s160
      %p171 = scmp.eq.s32.totalorder %s20, 0
      %p172 = por %p170, %p171
      %p173 = scmp.ne.s32.totalorder %s159, %s160
      %p174 = scmp.eq.s32.totalorder %s21, 1
      %p175 = por %p173, %p174
      %p177 = scmp.ne.s32.totalorder %s160, %s176
      %p178 = scmp.eq.s32.totalorder %s21, 0
      %p179 = por %p177, %p178
      %p180 = scmp.le.s32.totalorder 1, %s15
      %p181 = scmp.lt.s32.totalorder %s15, 3
      %p182 = pnand %p180, %p181
      %p183 = pneg %p182
      // Predicated region
      $region9: #{encoder_forward.5} parent=5 // pred_check
        _
      $region10: #{encoder_forward.5} parent=5 // pred_check_branch
        %185 = sbr.rel (%p182) target = $region12
      $region11: #{encoder_forward.5} parent=5 // pred_region
        %s186 = ssub.s32 %s15, 1
        // Predicated region
        $region13: #{encoder_forward.5} parent=11 // pred_check
          %p187 = pneg %p62
        $region14: #{encoder_forward.5} parent=11 // pred_check_branch
          %189 = sbr.rel (%p187) target = $region16
        $region15: #{encoder_forward.5} parent=11 // pred_region
          _
        $region16: #{encoder_forward.5} parent=11 // pred_fallthru
          _
        // Predicated region
        $region17: #{encoder_forward.5} parent=11 // pred_check
          %p190 = pneg %p83
        $region18: #{encoder_forward.5} parent=11 // pred_check_branch
          %192 = sbr.rel (%p190) target = $region20
        $region19: #{encoder_forward.5} parent=11 // pred_region
          _
        $region20: #{encoder_forward.5} parent=11 // pred_fallthru
          _
        // Predicated region
        $region21: #{encoder_forward.5} parent=11 // pred_check
          %p193 = pneg %p104
        $region22: #{encoder_forward.5} parent=11 // pred_check_branch
          %195 = sbr.rel (%p193) target = $region24
        $region23: #{encoder_forward.5} parent=11 // pred_region
          _
        $region24: #{encoder_forward.5} parent=11 // pred_fallthru
          _
        // Predicated region
        $region25: #{encoder_forward.5} parent=11 // pred_check
          %p196 = pneg %p125
        $region26: #{encoder_forward.5} parent=11 // pred_check_branch
          %198 = sbr.rel (%p196) target = $region28
        $region27: #{encoder_forward.5} parent=11 // pred_region
          _
        $region28: #{encoder_forward.5} parent=11 // pred_fallthru
          _
        // Predicated region
        $region29: #{encoder_forward.5} parent=11 // pred_check
          %p199 = pneg %p146
        $region30: #{encoder_forward.5} parent=11 // pred_check_branch
          %201 = sbr.rel (%p199) target = $region32
        $region31: #{encoder_forward.5} parent=11 // pred_region
          _
        $region32: #{encoder_forward.5} parent=11 // pred_fallthru
          _
      $region12: #{encoder_forward.5} parent=5 // pred_fallthru
        _
      %p202 = scmp.lt.s32.totalorder %s15, 2
      // Predicated region
      $region33: #{encoder_forward.5} parent=5 // pred_check
        %p203 = pneg %p202
      $region34: #{encoder_forward.5} parent=5 // pred_check_branch
        %205 = sbr.rel (%p203) target = $region36
      $region35: #{encoder_forward.5} parent=5 // pred_region
        // Predicated region
        $region37: #{encoder_forward.5} parent=35 // pred_check
          %p206 = pneg %p35
        $region38: #{encoder_forward.5} parent=35 // pred_check_branch
          %208 = sbr.rel (%p206) target = $region40
        $region39: #{encoder_forward.5} parent=35 // pred_region
          %p209 = scmp.lt.s32.totalorder %s15, 1
          %s210 = scalar_select %p209, %s15, 1
          %s211 = smul.addr %s210, 3
          %s212 = smul.addr %s211, 4
          %s213 = scalar_lea.vmem %s0, %s212
        $region40: #{encoder_forward.5} parent=35 // pred_fallthru
          _
      $region36: #{encoder_forward.5} parent=5 // pred_fallthru
        _
      %p214 = scmp.le.s32.totalorder 1, %s15
      %p215 = scmp.lt.s32.totalorder %s15, 3
      %p216 = pnand %p214, %p215
      %p217 = pneg %p216
      // Predicated region
      $region41: #{encoder_forward.5} parent=5 // pred_check
        _
      $region42: #{encoder_forward.5} parent=5 // pred_check_branch
        %219 = sbr.rel (%p216) target = $region44
      $region43: #{encoder_forward.5} parent=5 // pred_region
        %s220 = ssub.s32 %s15, 1
        %p221 = scmp.lt.s32.totalorder %s20, 1
        %s222 = scalar_select %p221, %s20, 1
        %s223 = smul.addr %s222, 3
        %s224 = smul.addr %s223, 4
        %s225 = scalar_lea.vmem %s0, %s224
        %p226 = pneg %p41
        %p227 = pneg %p38
        %p228 = pneg %p62
        %p229 = pneg %p59
        %p230 = pneg %p83
        %p231 = pneg %p80
        %p232 = pneg %p104
        %p233 = pneg %p101
        %p234 = pneg %p125
        %p235 = pneg %p122
        %p236 = pneg %p146
        %p237 = pneg %p143
        %p238 = pneg %p172
        %p239 = pneg %p169
        %s240 = sand.u32 %s159, 1
        %s241 = scalar_lea.sflag [#allocation5], %s240
        %s242 = sand.u32 %s159, 1
        %s243 = smul.addr %s242, 4
        %s244 = scalar_lea.vmem [#allocation4], %s243
        %p245 = scmp.lt.s32.totalorder %s20, 1
        %s246 = scalar_select %p245, %s20, 1
        %s247 = smul.addr %s246, 3
        %s248 = smul.addr %s247, 4
        %s249 = scalar_lea.vmem %s0, %s248
        %v251 = vld [vmem:[%s249] sm:$0xff]
        %v252 = vld [vmem:[%s249 + $0x8] sm:$0xf]
        %v253 = vld [vmem:[%s1] sm:$0xf]
        %v254 = vld [vmem:[%s1 + $0x4] sm:$0xf]
        %v255 = vld [vmem:[%s1 + $0x8] sm:$0xf]
        %v256 = vld [vmem:[%s1 + $0xc] sm:$0xf]
        %v257 = vld [vmem:[%s1 + $0x10] sm:$0xf]
        %v258 = vld [vmem:[%s1 + $0x14] sm:$0xf]
        %v259 = vld [vmem:[%s1 + $0x18] sm:$0xf]
        %v260 = vld [vmem:[%s1 + $0x1c] sm:$0xf]
        %v261 = vld [vmem:[%s1 + $0x20] sm:$0xf]
        %v262 = vld [vmem:[%s1 + $0x24] sm:$0xf]
        %v263 = vld [vmem:[%s1 + $0x28] sm:$0xf]
        %v264 = vld [vmem:[%s1 + $0x2c] sm:$0xf]
        %v265 = vld [vmem:[%s1 + $0x30] sm:$0xf]
        %v266 = vld [vmem:[%s1 + $0x34] sm:$0xf]
        %v267 = vld [vmem:[%s1 + $0x38] sm:$0xf]
        %v268 = vld [vmem:[%s1 + $0x3c] sm:$0xf]
        %v269 = vld [vmem:[%s1 + $0x40] sm:$0xf]
        %v270 = vld [vmem:[%s1 + $0x44] sm:$0xf]
        %v271 = vld [vmem:[%s1 + $0x48] sm:$0xf]
        %v272 = vld [vmem:[%s1 + $0x4c] sm:$0xf]
        %v273 = vld [vmem:[%s1 + $0x50] sm:$0xf]
        %v274 = vld [vmem:[%s1 + $0x54] sm:$0xf]
        %v275 = vld [vmem:[%s1 + $0x58] sm:$0xf]
        %v276 = vld [vmem:[%s1 + $0x5c] sm:$0xf]
        %v277 = vld [vmem:[%s1 + $0x60] sm:$0xf]
        %v278 = vld [vmem:[%s1 + $0x64] sm:$0xf]
        %v279 = vld [vmem:[%s1 + $0x68] sm:$0xf]
        %v280 = vld [vmem:[%s1 + $0x6c] sm:$0xf]
        %v281 = vld [vmem:[%s1 + $0x70] sm:$0xf]
        %v282 = vld [vmem:[%s1 + $0x74] sm:$0xf]
        %v283 = vld [vmem:[%s1 + $0x78] sm:$0xf]
        %v284 = vld [vmem:[%s1 + $0x7c] sm:$0xf]
        %v285 = vld [vmem:[%s1 + $0x80] sm:$0xf]
        %v286 = vld [vmem:[%s1 + $0x84] sm:$0xf]
        %v287 = vld [vmem:[%s1 + $0x88] sm:$0xf]
        %v288 = vld [vmem:[%s1 + $0x8c] sm:$0xf]
        %v289 = vld [vmem:[%s2] sm:$0x1]
        %v291 = vlaneseq
        %v292 = vshrl.u32 %v291, 7
        %v293 = vsub.s32 0, %v292
        %v294 = vrot.slane %v289, %v293
        %v298 = vunpack.c.l.b16 %v251
        %v299 = vunpack.c.h.b16 %v251
        %v300 = vunpack.c.l.b16 %v252
        %v301 = vpack.c.b16 %v298, %v298
        %v302 = vpack.c.b16 %v299, %v299
        %v303 = vpack.c.b16 %v300, %v300
        %v342 = vunpack.c.l.b16 %v253
        %v343 = vunpack.c.l.b16 %v254
        %v344 = vunpack.c.l.b16 %v255
        %v345 = vunpack.c.l.b16 %v256
        %v346 = vunpack.c.l.b16 %v257
        %v347 = vunpack.c.l.b16 %v258
        %v348 = vunpack.c.l.b16 %v259
        %v349 = vunpack.c.l.b16 %v260
        %v350 = vunpack.c.l.b16 %v261
        %v351 = vunpack.c.l.b16 %v262
        %v352 = vunpack.c.l.b16 %v263
        %v353 = vunpack.c.l.b16 %v264
        %v354 = vunpack.c.l.b16 %v265
        %v355 = vunpack.c.l.b16 %v266
        %v356 = vunpack.c.l.b16 %v267
        %v357 = vunpack.c.l.b16 %v268
        %v358 = vunpack.c.l.b16 %v269
        %v359 = vunpack.c.l.b16 %v270
        %v360 = vunpack.c.l.b16 %v271
        %v361 = vunpack.c.l.b16 %v272
        %v362 = vunpack.c.l.b16 %v273
        %v363 = vunpack.c.l.b16 %v274
        %v364 = vunpack.c.l.b16 %v275
        %v365 = vunpack.c.l.b16 %v276
        %v366 = vunpack.c.l.b16 %v277
        %v367 = vunpack.c.l.b16 %v278
        %v368 = vunpack.c.l.b16 %v279
        %v369 = vunpack.c.l.b16 %v280
        %v370 = vunpack.c.l.b16 %v281
        %v371 = vunpack.c.l.b16 %v282
        %v372 = vunpack.c.l.b16 %v283
        %v373 = vunpack.c.l.b16 %v284
        %v374 = vunpack.c.l.b16 %v285
        %v375 = vunpack.c.l.b16 %v286
        %v376 = vunpack.c.l.b16 %v287
        %v377 = vunpack.c.l.b16 %v288
        %v378 = vpack.c.b16 %v343, %v342
        %v379 = vpack.c.b16 %v345, %v344
        %v380 = vpack.c.b16 %v347, %v346
        %v381 = vpack.c.b16 %v349, %v348
        %v382 = vpack.c.b16 %v351, %v350
        %v383 = vpack.c.b16 %v353, %v352
        %v384 = vpack.c.b16 %v355, %v354
        %v385 = vpack.c.b16 %v357, %v356
        %v386 = vpack.c.b16 %v359, %v358
        %v387 = vpack.c.b16 %v361, %v360
        %v388 = vpack.c.b16 %v363, %v362
        %v389 = vpack.c.b16 %v365, %v364
        %v390 = vpack.c.b16 %v367, %v366
        %v391 = vpack.c.b16 %v369, %v368
        %v392 = vpack.c.b16 %v371, %v370
        %v393 = vpack.c.b16 %v373, %v372
        %v394 = vpack.c.b16 %v375, %v374
        %v395 = vpack.c.b16 %v377, %v376
        %vm414 = vcmask 261120
        %v416 = vsel %vm414, %v303, 0
        %418 = vmatprep.subr.bf16.mxu0 0
        %419 = vmatpush1.bf16.msra.mxu0 %v385
        %420 = vmatprep.subr.bf16.mxu0 0
        %421 = vmatpush1.bf16.msra.mxu0 %v384
        %422 = vmatprep.subr.bf16.mxu0 0
        %423 = vmatpush1.bf16.msra.mxu0 %v383
        %424 = vmatprep.subr.bf16.mxu0 0
        %425 = vmatpush1.bf16.msra.mxu0 %v382
        %426 = vmatprep.subr.bf16.mxu0 0
        %427 = vmatpush1.bf16.msra.mxu0 %v381
        %428 = vmatprep.subr.bf16.mxu0 0
        %429 = vmatpush1.bf16.msra.mxu0 %v380
        %430 = vmatprep.subr.bf16.mxu0 0
        %431 = vmatpush1.bf16.msra.mxu0 %v379
        %432 = vmatprep.subr.bf16.mxu0 0
        %433 = vmatpush1.bf16.msra.mxu0 %v378
        %434 = vmatprep.subr.bf16.mxu0 0
        %435 = vmatpush2.bf16.msra.mxu0 %v393
        %436 = vmatprep.subr.bf16.mxu0 0
        %437 = vmatpush2.bf16.msra.mxu0 %v392
        %438 = vmatprep.subr.bf16.mxu0 0
        %439 = vmatpush2.bf16.msra.mxu0 %v391
        %440 = vmatprep.subr.bf16.mxu0 0
        %441 = vmatpush2.bf16.msra.mxu0 %v390
        %442 = vmatprep.subr.bf16.mxu0 0
        %443 = vmatpush2.bf16.msra.mxu0 %v389
        %444 = vmatprep.subr.bf16.mxu0 0
        %445 = vmatpush2.bf16.msra.mxu0 %v388
        %446 = vmatprep.subr.bf16.mxu0 0
        %447 = vmatpush2.bf16.msra.mxu0 %v387
        %448 = vmatprep.subr.bf16.mxu0 0
        %449 = vmatpush2.bf16.msra.mxu0 %v386
        %450 = vmatprep.mubr.bf16.mxu0 %v302
        %451 = vmatmul.mubr.bf16.gmra.mxu0 %v301
        %v452 = vpop.f32.mrf.mxu0
        %v453 = vadd.f32 %v294, %v452
        %v454 = vpop.f32.mrf.mxu0
        %v455 = vpop.f32.mrf.mxu0
        %v456 = vpop.f32.mrf.mxu0
        %457 = vdwg.mxu0
        %458 = vmatprep.subr.bf16.mxu0 0
        %459 = vmatpush1.bf16.msra.mxu0 0
        %460 = vmatprep.subr.bf16.mxu0 0
        %461 = vmatpush1.bf16.msra.mxu0 0
        %462 = vmatprep.subr.bf16.mxu0 0
        %463 = vmatpush1.bf16.msra.mxu0 0
        %464 = vmatprep.subr.bf16.mxu0 0
        %465 = vmatpush1.bf16.msra.mxu0 0
        %466 = vmatprep.subr.bf16.mxu0 0
        %467 = vmatpush1.bf16.msra.mxu0 0
        %468 = vmatprep.subr.bf16.mxu0 0
        %469 = vmatpush1.bf16.msra.mxu0 0
        %470 = vmatprep.subr.bf16.mxu0 0
        %471 = vmatpush1.bf16.msra.mxu0 %v395
        %472 = vmatprep.subr.bf16.mxu0 0
        %473 = vmatpush1.bf16.msra.mxu0 %v394
        %474 = vmatprep.subr.bf16.mxu0 0
        %475 = vmatpush2.bf16.msra.mxu0 0
        %476 = vmatprep.subr.bf16.mxu0 0
        %477 = vmatpush2.bf16.msra.mxu0 0
        %478 = vmatprep.subr.bf16.mxu0 0
        %479 = vmatpush2.bf16.msra.mxu0 0
        %480 = vmatprep.subr.bf16.mxu0 0
        %481 = vmatpush2.bf16.msra.mxu0 0
        %482 = vmatprep.subr.bf16.mxu0 0
        %483 = vmatpush2.bf16.msra.mxu0 0
        %484 = vmatprep.subr.bf16.mxu0 0
        %485 = vmatpush2.bf16.msra.mxu0 0
        %486 = vmatprep.subr.bf16.mxu0 0
        %487 = vmatpush2.bf16.msra.mxu0 0
        %488 = vmatprep.subr.bf16.mxu0 0
        %489 = vmatpush2.bf16.msra.mxu0 0
        %490 = vmatprep.mubr.bf16.mxu0 0
        %491 = vmatmul.mubr.bf16.gmra.mxu0 %v416
        %v492 = vpop.f32.mrf.mxu0
        %v493 = vadd.f32 %v453, %v492
        %v494 = vpop.f32.mrf.mxu0
        %v495 = vpop.f32.mrf.mxu0
        %v496 = vpop.f32.mrf.mxu0
        %497 = vdwg.mxu0
        %vm498 = vcmask 523264
        %499 = vst.msk [vmem:[#allocation2] sm:$0xff] %vm498, 0.0
        %500 = vst.msk [vmem:[#allocation2 + $0x8] sm:$0xff] %vm498, 0.0
        %vm501 = vcmask 517120
        %502 = vst.msk [vmem:[#allocation2 + $0x5] sm:$0x3] %vm501, %v493
        %vm503 = vcmask 519170
        %504 = vst.msk [vmem:[#allocation2 + $0x7] sm:$0xc] %vm503, %v493
        %vm505 = vcmask 519168
        %506 = vst.msk [vmem:[#allocation3] sm:$0xf] %vm505, 0
        %507 = vst.msk [vmem:[#allocation3 + $0x4] sm:$0xf] %vm505, 0
        %508 = vst.msk [vmem:[#allocation3 + $0x8] sm:$0xf] %vm505, 0
        %509 = vst.msk [vmem:[#allocation3 + $0xc] sm:$0xf] %vm505, 0
        %v510 = vld [vmem:[%s3] sm:$0xff]
        %v511 = vld [vmem:[%s3 + $0x8] sm:$0xff]
        %513 = vset.pattern.permute.xlu0 0
        %514 = vperm.xlu0 %513, %v510
        %v515 = vpop.permute.xlu0 %514
        %518 = vset.pattern.permute.xlu0 0
        %519 = vperm.xlu0 %518, %v511
        %v520 = vpop.permute.xlu0 %519
        %v522 = vpack.c.bf16 %v520, %v515
        %v523 = vld [vmem:[#allocation2] sm:$0xff]
        %v524 = vld [vmem:[#allocation2 + $0x8] sm:$0xff]
        %v525 = vmax.f32 %v523, 0.0
        %v526 = vmax.f32 %v524, 0.0
        %v527 = vpack.c.bf16 %v526, %v525
        %v528 = vmul.bf16 %v527, %v522
        %v530 = vunpack.c.l.b16 %v528
        %v531 = vunpack.c.h.b16 %v528
        %v532 = vpack.c.b16 %v530, %v530
        %v533 = vpack.c.b16 %v531, %v531
        %536 = vst.msk [vmem:[#allocation3 + $0x4] sm:$0xf] %vm505, %v532
        %537 = vst.msk [vmem:[#allocation3 + $0x8] sm:$0xf] %vm505, %v533
        %v538 = vld [vmem:[#allocation3] sm:$0xe]
        %v539 = vld [vmem:[#allocation3 + $0x4] sm:$0xf]
        %v540 = vld [vmem:[#allocation3 + $0x8] sm:$0x3]
        %v541 = vld [vmem:[#allocation3] sm:$0xc]
        %v542 = vld [vmem:[#allocation3 + $0x8] sm:$0x7]
        %v543 = vld [vmem:[#allocation3] sm:$0x8]
        %v544 = vld [vmem:[#allocation3 + $0x8] sm:$0xf]
        %v545 = vld [vmem:[#allocation3 + $0xc] sm:$0x1]
        %v546 = vld [vmem:[#allocation3 + $0x4] sm:$0xe]
        %v547 = vld [vmem:[#allocation3 + $0xc] sm:$0x3]
        %v548 = vld [vmem:[#allocation3 + $0x4] sm:$0xc]
        %v549 = vld [vmem:[#allocation3 + $0xc] sm:$0x7]
        %v553 = vunpack.c.l.b16 %v538
        %v554 = vunpack.c.l.b16 %v539
        %v555 = vunpack.c.l.b16 %v540
        %v556 = vpack.c.b16 %v554, %v553
        %v557 = vpack.c.b16 %v555, %v555
        %v559 = vunpack.c.l.b16 %v541
        %v560 = vpack.c.b16 %v554, %v559
        %vm561 = vsmask.f32 7424
        %v563 = vshrl.u32 %v560, 16
        %v565 = vshll.u32 %v560, 16
        %v567 = vrot.slane %v565, 1
        %v568 = vor.u32 %v563, %v567
        %v570 = vshll.u32 %v557, 16
        %v572 = vrot.slane %v570, 1
        %v573 = vsel %vm561, %v568, %v572
        %v574 = vshrl.u32 %v557, 16
        %v576 = vor.u32 %v574, %v572
        %577 = vrot.lane.b32.xlu0 %v573, 64
        %v578 = vpop.permute.xlu0 %577
        %579 = vrot.lane.b32.xlu0 %v576, 64
        %v580 = vpop.permute.xlu0 %579
        %v582 = vunpack.c.l.b16 %v542
        %v583 = vpack.c.b16 %v582, %v582
        %vm584 = vcmask 1046528
        %v585 = vrot.slane %v560, 1
        %v586 = vrot.slane %v583, 1
        %v587 = vsel %vm584, %v585, %v586
        %v590 = vunpack.c.l.b16 %v543
        %v591 = vunpack.c.l.b16 %v544
        %v592 = vpack.c.b16 %v554, %v590
        %v593 = vpack.c.b16 %v591, %v591
        %vm594 = vcmask 1045504
        %v595 = vrot.slane %v592, 2
        %v596 = vrot.slane %v593, 2
        %v597 = vsel %vm594, %v595, %v596
        %598 = vrot.lane.b32.xlu0 %v597, 64
        %v599 = vpop.permute.xlu0 %598
        %600 = vrot.lane.b32.xlu0 %v596, 64
        %v601 = vpop.permute.xlu0 %600
        %v602 = vpack.c.b16 %v591, %v554
        %v604 = vshrl.u32 %v602, 16
        %v606 = vrot.slane %v604, 6
        %v607 = vshll.u32 %v602, 16
        %v609 = vrot.slane %v607, 7
        %v610 = vor.u32 %v606, %v609
        %v612 = vunpack.c.l.b16 %v545
        %v613 = vpack.c.b16 %v612, %v612
        %vm614 = vcmask 1040384
        %v615 = vrot.slane %v602, 7
        %v616 = vrot.slane %v613, 7
        %v617 = vsel %vm614, %v615, %v616
        %618 = vrot.lane.b32.xlu0 %v615, 64
        %v619 = vpop.permute.xlu0 %618
        %620 = vrot.lane.b32.xlu0 %v617, 64
        %v621 = vpop.permute.xlu0 %620
        %v624 = vunpack.c.l.b16 %v546
        %v625 = vunpack.c.l.b16 %v547
        %v626 = vpack.c.b16 %v591, %v624
        %v627 = vpack.c.b16 %v625, %v625
        %v629 = vunpack.c.l.b16 %v548
        %v630 = vpack.c.b16 %v591, %v629
        %v632 = vshrl.u32 %v630, 16
        %v634 = vshll.u32 %v630, 16
        %v636 = vrot.slane %v634, 1
        %v637 = vor.u32 %v632, %v636
        %v639 = vshll.u32 %v627, 16
        %v641 = vrot.slane %v639, 1
        %v642 = vsel %vm561, %v637, %v641
        %v643 = vshrl.u32 %v627, 16
        %v645 = vor.u32 %v643, %v641
        %646 = vrot.lane.b32.xlu0 %v642, 64
        %v647 = vpop.permute.xlu0 %646
        %648 = vrot.lane.b32.xlu0 %v645, 64
        %v649 = vpop.permute.xlu0 %648
        %v651 = vunpack.c.l.b16 %v549
        %v652 = vpack.c.b16 %v651, %v651
        %v653 = vrot.slane %v630, 1
        %v654 = vrot.slane %v652, 1
        %v655 = vsel %vm584, %v653, %v654
        %v658 = vsel %vm498, %v556, %v578
        %v660 = vsel %vm498, %v557, %v580
        %v663 = vsel %vm498, %v587, %v599
        %v666 = vsel %vm498, %v586, %v601
        %v669 = vsel %vm498, %v610, %v619
        %v671 = vsel %vm498, %v610, %v621
        %v674 = vsel %vm498, %v626, %v647
        %v676 = vsel %vm498, %v627, %v649
        %v677 = vld [vmem:[%s4] sm:$0xf]
        %v678 = vld [vmem:[%s4 + $0x4] sm:$0xf]
        %v679 = vld [vmem:[%s4 + $0x8] sm:$0xf]
        %v680 = vld [vmem:[%s4 + $0xc] sm:$0xf]
        %v681 = vld [vmem:[%s4 + $0x10] sm:$0xf]
        %v682 = vld [vmem:[%s4 + $0x14] sm:$0xf]
        %v683 = vld [vmem:[%s4 + $0x18] sm:$0xf]
        %v684 = vld [vmem:[%s4 + $0x1c] sm:$0xf]
        %v685 = vld [vmem:[%s4 + $0x20] sm:$0xf]
        %v686 = vld [vmem:[%s4 + $0x24] sm:$0xf]
        %v687 = vld [vmem:[%s4 + $0x28] sm:$0xf]
        %v688 = vld [vmem:[%s4 + $0x2c] sm:$0xf]
        %v689 = vld [vmem:[%s4 + $0x30] sm:$0xf]
        %v690 = vld [vmem:[%s4 + $0x34] sm:$0xf]
        %v691 = vld [vmem:[%s4 + $0x38] sm:$0xf]
        %v692 = vld [vmem:[%s4 + $0x3c] sm:$0xf]
        %v693 = vld [vmem:[%s4 + $0x40] sm:$0xf]
        %v694 = vld [vmem:[%s4 + $0x44] sm:$0xf]
        %v695 = vld [vmem:[%s4 + $0x48] sm:$0xf]
        %v696 = vld [vmem:[%s4 + $0x4c] sm:$0xf]
        %v697 = vld [vmem:[%s4 + $0x50] sm:$0xf]
        %v698 = vld [vmem:[%s4 + $0x54] sm:$0xf]
        %v699 = vld [vmem:[%s4 + $0x58] sm:$0xf]
        %v700 = vld [vmem:[%s4 + $0x5c] sm:$0xf]
        %v701 = vld [vmem:[%s4 + $0x60] sm:$0xf]
        %v702 = vld [vmem:[%s4 + $0x64] sm:$0xf]
        %v703 = vld [vmem:[%s4 + $0x68] sm:$0xf]
        %v704 = vld [vmem:[%s4 + $0x6c] sm:$0xf]
        %v705 = vld [vmem:[%s4 + $0x70] sm:$0xf]
        %v706 = vld [vmem:[%s4 + $0x74] sm:$0xf]
        %v707 = vld [vmem:[%s4 + $0x78] sm:$0xf]
        %v708 = vld [vmem:[%s4 + $0x7c] sm:$0xf]
        %v709 = vld [vmem:[%s4 + $0x80] sm:$0xf]
        %v710 = vld [vmem:[%s4 + $0x84] sm:$0xf]
        %v711 = vld [vmem:[%s4 + $0x88] sm:$0xf]
        %v712 = vld [vmem:[%s4 + $0x8c] sm:$0xf]
        %v713 = vld [vmem:[%s4 + $0x90] sm:$0xf]
        %v714 = vld [vmem:[%s4 + $0x94] sm:$0xf]
        %v715 = vld [vmem:[%s4 + $0x98] sm:$0xf]
        %v716 = vld [vmem:[%s4 + $0x9c] sm:$0xf]
        %v717 = vld [vmem:[%s4 + $0xa0] sm:$0xf]
        %v718 = vld [vmem:[%s4 + $0xa4] sm:$0xf]
        %v719 = vld [vmem:[%s4 + $0xa8] sm:$0xf]
        %v720 = vld [vmem:[%s4 + $0xac] sm:$0xf]
        %v721 = vld [vmem:[%s4 + $0xb0] sm:$0xf]
        %v722 = vld [vmem:[%s4 + $0xb4] sm:$0xf]
        %v723 = vld [vmem:[%s4 + $0xb8] sm:$0xf]
        %v724 = vld [vmem:[%s4 + $0xbc] sm:$0xf]
        %v725 = vld [vmem:[%s4 + $0xc0] sm:$0xf]
        %v726 = vld [vmem:[%s4 + $0xc4] sm:$0xf]
        %v727 = vld [vmem:[%s4 + $0xc8] sm:$0xf]
        %v728 = vld [vmem:[%s4 + $0xcc] sm:$0xf]
        %v729 = vld [vmem:[%s4 + $0xd0] sm:$0xf]
        %v730 = vld [vmem:[%s4 + $0xd4] sm:$0xf]
        %v731 = vld [vmem:[%s4 + $0xd8] sm:$0xf]
        %v732 = vld [vmem:[%s4 + $0xdc] sm:$0xf]
        %v733 = vld [vmem:[%s4 + $0xe0] sm:$0xf]
        %v734 = vld [vmem:[%s4 + $0xe4] sm:$0xf]
        %v735 = vld [vmem:[%s4 + $0xe8] sm:$0xf]
        %v736 = vld [vmem:[%s4 + $0xec] sm:$0xf]
        %v737 = vld [vmem:[%s4 + $0xf0] sm:$0xf]
        %v738 = vld [vmem:[%s4 + $0xf4] sm:$0xf]
        %v739 = vld [vmem:[%s4 + $0xf8] sm:$0xf]
        %v740 = vld [vmem:[%s4 + $0xfc] sm:$0xf]
        %v741 = vld [vmem:[%s4 + $0x100] sm:$0xf]
        %v742 = vld [vmem:[%s4 + $0x104] sm:$0xf]
        %v743 = vld [vmem:[%s4 + $0x108] sm:$0xf]
        %v744 = vld [vmem:[%s4 + $0x10c] sm:$0xf]
        %v745 = vld [vmem:[%s4 + $0x110] sm:$0xf]
        %v746 = vld [vmem:[%s4 + $0x114] sm:$0xf]
        %v747 = vld [vmem:[%s4 + $0x118] sm:$0xf]
        %v748 = vld [vmem:[%s4 + $0x11c] sm:$0xf]
        %vm749 = vsmask.f32 6400
        %v750 = vshrl.u32 %v658, 16
        %v752 = vrot.slane %v750, 1
        %v753 = vshll.u32 %v658, 16
        %v755 = vrot.slane %v753, 2
        %v756 = vor.u32 %v752, %v755
        %v757 = vshrl.u32 %v660, 16
        %v759 = vrot.slane %v757, 1
        %v760 = vshll.u32 %v660, 16
        %v762 = vrot.slane %v760, 2
        %v763 = vor.u32 %v759, %v762
        %v764 = vsel %vm749, %v756, %v763
        %v765 = vshrl.u32 %v663, 16
        %v767 = vrot.slane %v765, 1
        %v768 = vshll.u32 %v663, 16
        %v770 = vrot.slane %v768, 2
        %v771 = vor.u32 %v767, %v770
        %v772 = vshrl.u32 %v666, 16
        %v774 = vrot.slane %v772, 1
        %v775 = vshll.u32 %v666, 16
        %v777 = vrot.slane %v775, 2
        %v778 = vor.u32 %v774, %v777
        %v779 = vsel %vm749, %v771, %v778
        %v780 = vshrl.u32 %v669, 16
        %v782 = vrot.slane %v780, 1
        %v783 = vshll.u32 %v669, 16
        %v785 = vrot.slane %v783, 2
        %v786 = vor.u32 %v782, %v785
        %v787 = vshrl.u32 %v671, 16
        %v789 = vrot.slane %v787, 1
        %v790 = vshll.u32 %v671, 16
        %v792 = vrot.slane %v790, 2
        %v793 = vor.u32 %v789, %v792
        %v794 = vsel %vm749, %v786, %v793
        %v795 = vshrl.u32 %v674, 16
        %v797 = vrot.slane %v795, 1
        %v798 = vshll.u32 %v674, 16
        %v800 = vrot.slane %v798, 2
        %v801 = vor.u32 %v797, %v800
        %v802 = vshrl.u32 %v676, 16
        %v804 = vrot.slane %v802, 1
        %v805 = vshll.u32 %v676, 16
        %v807 = vrot.slane %v805, 2
        %v808 = vor.u32 %v804, %v807
        %v809 = vsel %vm749, %v801, %v808
        %v811 = vshrl.u32 %v655, 16
        %v813 = vrot.slane %v811, 1
        %v814 = vshll.u32 %v655, 16
        %v816 = vrot.slane %v814, 2
        %v817 = vor.u32 %v813, %v816
        %v819 = vshrl.u32 %v654, 16
        %v821 = vrot.slane %v819, 1
        %v822 = vshll.u32 %v654, 16
        %v824 = vrot.slane %v822, 2
        %v825 = vor.u32 %v821, %v824
        %v826 = vsel %vm749, %v817, %v825
        %v903 = vunpack.c.l.b16 %v677
        %v904 = vunpack.c.l.b16 %v678
        %v905 = vunpack.c.l.b16 %v679
        %v906 = vunpack.c.l.b16 %v680
        %v907 = vunpack.c.l.b16 %v681
        %v908 = vunpack.c.l.b16 %v682
        %v909 = vunpack.c.l.b16 %v683
        %v910 = vunpack.c.l.b16 %v684
        %v911 = vunpack.c.l.b16 %v685
        %v912 = vunpack.c.l.b16 %v686
        %v913 = vunpack.c.l.b16 %v687
        %v914 = vunpack.c.l.b16 %v688
        %v915 = vunpack.c.l.b16 %v689
        %v916 = vunpack.c.l.b16 %v690
        %v917 = vunpack.c.l.b16 %v691
        %v918 = vunpack.c.l.b16 %v692
        %v919 = vunpack.c.l.b16 %v693
        %v920 = vunpack.c.l.b16 %v694
        %v921 = vunpack.c.l.b16 %v695
        %v922 = vunpack.c.l.b16 %v696
        %v923 = vunpack.c.l.b16 %v697
        %v924 = vunpack.c.l.b16 %v698
        %v925 = vunpack.c.l.b16 %v699
        %v926 = vunpack.c.l.b16 %v700
        %v927 = vunpack.c.l.b16 %v701
        %v928 = vunpack.c.l.b16 %v702
        %v929 = vunpack.c.l.b16 %v703
        %v930 = vunpack.c.l.b16 %v704
        %v931 = vunpack.c.l.b16 %v705
        %v932 = vunpack.c.l.b16 %v706
        %v933 = vunpack.c.l.b16 %v707
        %v934 = vunpack.c.l.b16 %v708
        %v935 = vunpack.c.l.b16 %v709
        %v936 = vunpack.c.l.b16 %v710
        %v937 = vunpack.c.l.b16 %v711
        %v938 = vunpack.c.l.b16 %v712
        %v939 = vunpack.c.l.b16 %v713
        %v940 = vunpack.c.l.b16 %v714
        %v941 = vunpack.c.l.b16 %v715
        %v942 = vunpack.c.l.b16 %v716
        %v943 = vunpack.c.l.b16 %v717
        %v944 = vunpack.c.l.b16 %v718
        %v945 = vunpack.c.l.b16 %v719
        %v946 = vunpack.c.l.b16 %v720
        %v947 = vunpack.c.l.b16 %v721
        %v948 = vunpack.c.l.b16 %v722
        %v949 = vunpack.c.l.b16 %v723
        %v950 = vunpack.c.l.b16 %v724
        %v951 = vunpack.c.l.b16 %v725
        %v952 = vunpack.c.l.b16 %v726
        %v953 = vunpack.c.l.b16 %v727
        %v954 = vunpack.c.l.b16 %v728
        %v955 = vunpack.c.l.b16 %v729
        %v956 = vunpack.c.l.b16 %v730
        %v957 = vunpack.c.l.b16 %v731
        %v958 = vunpack.c.l.b16 %v732
        %v959 = vunpack.c.l.b16 %v733
        %v960 = vunpack.c.l.b16 %v734
        %v961 = vunpack.c.l.b16 %v735
        %v962 = vunpack.c.l.b16 %v736
        %v963 = vunpack.c.l.b16 %v737
        %v964 = vunpack.c.l.b16 %v738
        %v965 = vunpack.c.l.b16 %v739
        %v966 = vunpack.c.l.b16 %v740
        %v967 = vunpack.c.l.b16 %v741
        %v968 = vunpack.c.l.b16 %v742
        %v969 = vunpack.c.l.b16 %v743
        %v970 = vunpack.c.l.b16 %v744
        %v971 = vunpack.c.l.b16 %v745
        %v972 = vunpack.c.l.b16 %v746
        %v973 = vunpack.c.l.b16 %v747
        %v974 = vunpack.c.l.b16 %v748
        %v975 = vpack.c.b16 %v904, %v903
        %v976 = vpack.c.b16 %v906, %v905
        %v977 = vpack.c.b16 %v908, %v907
        %v978 = vpack.c.b16 %v910, %v909
        %v979 = vpack.c.b16 %v912, %v911
        %v980 = vpack.c.b16 %v914, %v913
        %v981 = vpack.c.b16 %v916, %v915
        %v982 = vpack.c.b16 %v918, %v917
        %v983 = vpack.c.b16 %v920, %v919
        %v984 = vpack.c.b16 %v922, %v921
        %v985 = vpack.c.b16 %v924, %v923
        %v986 = vpack.c.b16 %v926, %v925
        %v987 = vpack.c.b16 %v928, %v927
        %v988 = vpack.c.b16 %v930, %v929
        %v989 = vpack.c.b16 %v932, %v931
        %v990 = vpack.c.b16 %v934, %v933
        %v991 = vpack.c.b16 %v936, %v935
        %v992 = vpack.c.b16 %v938, %v937
        %v993 = vpack.c.b16 %v940, %v939
        %v994 = vpack.c.b16 %v942, %v941
        %v995 = vpack.c.b16 %v944, %v943
        %v996 = vpack.c.b16 %v946, %v945
        %v997 = vpack.c.b16 %v948, %v947
        %v998 = vpack.c.b16 %v950, %v949
        %v999 = vpack.c.b16 %v952, %v951
        %v1000 = vpack.c.b16 %v954, %v953
        %v1001 = vpack.c.b16 %v956, %v955
        %v1002 = vpack.c.b16 %v958, %v957
        %v1003 = vpack.c.b16 %v960, %v959
        %v1004 = vpack.c.b16 %v962, %v961
        %v1005 = vpack.c.b16 %v964, %v963
        %v1006 = vpack.c.b16 %v966, %v965
        %v1007 = vpack.c.b16 %v968, %v967
        %v1008 = vpack.c.b16 %v970, %v969
        %v1009 = vpack.c.b16 %v972, %v971
        %v1010 = vpack.c.b16 %v974, %v973
        %v1048 = vsel %vm498, %v826, 0
        %1050 = vmatprep.subr.bf16.mxu0 0
        %1051 = vmatpush1.bf16.msra.mxu0 %v982
        %1052 = vmatprep.subr.bf16.mxu0 0
        %1053 = vmatpush1.bf16.msra.mxu0 %v981
        %1054 = vmatprep.subr.bf16.mxu0 0
        %1055 = vmatpush1.bf16.msra.mxu0 %v980
        %1056 = vmatprep.subr.bf16.mxu0 0
        %1057 = vmatpush1.bf16.msra.mxu0 %v979
        %1058 = vmatprep.subr.bf16.mxu0 0
        %1059 = vmatpush1.bf16.msra.mxu0 %v978
        %1060 = vmatprep.subr.bf16.mxu0 0
        %1061 = vmatpush1.bf16.msra.mxu0 %v977
        %1062 = vmatprep.subr.bf16.mxu0 0
        %1063 = vmatpush1.bf16.msra.mxu0 %v976
        %1064 = vmatprep.subr.bf16.mxu0 0
        %1065 = vmatpush1.bf16.msra.mxu0 %v975
        %1066 = vmatprep.subr.bf16.mxu0 0
        %1067 = vmatpush2.bf16.msra.mxu0 %v990
        %1068 = vmatprep.subr.bf16.mxu0 0
        %1069 = vmatpush2.bf16.msra.mxu0 %v989
        %1070 = vmatprep.subr.bf16.mxu0 0
        %1071 = vmatpush2.bf16.msra.mxu0 %v988
        %1072 = vmatprep.subr.bf16.mxu0 0
        %1073 = vmatpush2.bf16.msra.mxu0 %v987
        %1074 = vmatprep.subr.bf16.mxu0 0
        %1075 = vmatpush2.bf16.msra.mxu0 %v986
        %1076 = vmatprep.subr.bf16.mxu0 0
        %1077 = vmatpush2.bf16.msra.mxu0 %v985
        %1078 = vmatprep.subr.bf16.mxu0 0
        %1079 = vmatpush2.bf16.msra.mxu0 %v984
        %1080 = vmatprep.subr.bf16.mxu0 0
        %1081 = vmatpush2.bf16.msra.mxu0 %v983
        %1082 = vmatprep.mubr.bf16.mxu0 %v779
        %1083 = vmatmul.mubr.bf16.gmra.mxu0 %v764
        %v1084 = vpop.f32.mrf.mxu0
        %v1085 = vadd.f32 0.0, %v1084
        %v1086 = vpop.f32.mrf.mxu0
        %v1087 = vpop.f32.mrf.mxu0
        %v1088 = vadd.f32 0.0, %v1087
        %v1089 = vpop.f32.mrf.mxu0
        %1090 = vdwg.mxu0
        %1091 = vmatprep.subr.bf16.mxu0 0
        %1092 = vmatpush1.bf16.msra.mxu0 %v998
        %1093 = vmatprep.subr.bf16.mxu0 0
        %1094 = vmatpush1.bf16.msra.mxu0 %v997
        %1095 = vmatprep.subr.bf16.mxu0 0
        %1096 = vmatpush1.bf16.msra.mxu0 %v996
        %1097 = vmatprep.subr.bf16.mxu0 0
        %1098 = vmatpush1.bf16.msra.mxu0 %v995
        %1099 = vmatprep.subr.bf16.mxu0 0
        %1100 = vmatpush1.bf16.msra.mxu0 %v994
        %1101 = vmatprep.subr.bf16.mxu0 0
        %1102 = vmatpush1.bf16.msra.mxu0 %v993
        %1103 = vmatprep.subr.bf16.mxu0 0
        %1104 = vmatpush1.bf16.msra.mxu0 %v992
        %1105 = vmatprep.subr.bf16.mxu0 0
        %1106 = vmatpush1.bf16.msra.mxu0 %v991
        %1107 = vmatprep.subr.bf16.mxu0 0
        %1108 = vmatpush2.bf16.msra.mxu0 %v1006
        %1109 = vmatprep.subr.bf16.mxu0 0
        %1110 = vmatpush2.bf16.msra.mxu0 %v1005
        %1111 = vmatprep.subr.bf16.mxu0 0
        %1112 = vmatpush2.bf16.msra.mxu0 %v1004
        %1113 = vmatprep.subr.bf16.mxu0 0
        %1114 = vmatpush2.bf16.msra.mxu0 %v1003
        %1115 = vmatprep.subr.bf16.mxu0 0
        %1116 = vmatpush2.bf16.msra.mxu0 %v1002
        %1117 = vmatprep.subr.bf16.mxu0 0
        %1118 = vmatpush2.bf16.msra.mxu0 %v1001
        %1119 = vmatprep.subr.bf16.mxu0 0
        %1120 = vmatpush2.bf16.msra.mxu0 %v1000
        %1121 = vmatprep.subr.bf16.mxu0 0
        %1122 = vmatpush2.bf16.msra.mxu0 %v999
        %1123 = vmatprep.mubr.bf16.mxu0 %v809
        %1124 = vmatmul.mubr.bf16.gmra.mxu0 %v794
        %v1125 = vpop.f32.mrf.mxu0
        %v1126 = vadd.f32 %v1085, %v1125
        %v1127 = vpop.f32.mrf.mxu0
        %v1128 = vpop.f32.mrf.mxu0
        %v1129 = vadd.f32 %v1088, %v1128
        %v1130 = vpop.f32.mrf.mxu0
        %1131 = vdwg.mxu0
        %1132 = vmatprep.subr.bf16.mxu0 0
        %1133 = vmatpush1.bf16.msra.mxu0 0
        %1134 = vmatprep.subr.bf16.mxu0 0
        %1135 = vmatpush1.bf16.msra.mxu0 0
        %1136 = vmatprep.subr.bf16.mxu0 0
        %1137 = vmatpush1.bf16.msra.mxu0 0
        %1138 = vmatprep.subr.bf16.mxu0 0
        %1139 = vmatpush1.bf16.msra.mxu0 0
        %1140 = vmatprep.subr.bf16.mxu0 0
        %1141 = vmatpush1.bf16.msra.mxu0 %v1010
        %1142 = vmatprep.subr.bf16.mxu0 0
        %1143 = vmatpush1.bf16.msra.mxu0 %v1009
        %1144 = vmatprep.subr.bf16.mxu0 0
        %1145 = vmatpush1.bf16.msra.mxu0 %v1008
        %1146 = vmatprep.subr.bf16.mxu0 0
        %1147 = vmatpush1.bf16.msra.mxu0 %v1007
        %1148 = vmatprep.subr.bf16.mxu0 0
        %1149 = vmatpush2.bf16.msra.mxu0 0
        %1150 = vmatprep.subr.bf16.mxu0 0
        %1151 = vmatpush2.bf16.msra.mxu0 0
        %1152 = vmatprep.subr.bf16.mxu0 0
        %1153 = vmatpush2.bf16.msra.mxu0 0
        %1154 = vmatprep.subr.bf16.mxu0 0
        %1155 = vmatpush2.bf16.msra.mxu0 0
        %1156 = vmatprep.subr.bf16.mxu0 0
        %1157 = vmatpush2.bf16.msra.mxu0 0
        %1158 = vmatprep.subr.bf16.mxu0 0
        %1159 = vmatpush2.bf16.msra.mxu0 0
        %1160 = vmatprep.subr.bf16.mxu0 0
        %1161 = vmatpush2.bf16.msra.mxu0 0
        %1162 = vmatprep.subr.bf16.mxu0 0
        %1163 = vmatpush2.bf16.msra.mxu0 0
        %1164 = vmatprep.mubr.bf16.mxu0 0
        %1165 = vmatmul.mubr.bf16.gmra.mxu0 %v1048
        %v1166 = vpop.f32.mrf.mxu0
        %v1167 = vadd.f32 %v1126, %v1166
        %v1168 = vpop.f32.mrf.mxu0
        %v1169 = vpop.f32.mrf.mxu0
        %v1170 = vadd.f32 %v1129, %v1169
        %v1171 = vpop.f32.mrf.mxu0
        %1172 = vdwg.mxu0
        %v1173 = vmax.f32 %v1167, 0.0
        %v1174 = vmax.f32 %v1170, 0.0
        %v1175 = vpack.c.bf16 %v1174, %v1173
        %v1176 = vld [vmem:[#allocation2] sm:$0xff]
        %v1177 = vld [vmem:[#allocation2 + $0x8] sm:$0xff]
        %v1178 = vld [vmem:[%s5] sm:$0xf]
        %v1179 = vld [vmem:[%s5 + $0x4] sm:$0xf]
        %v1180 = vld [vmem:[%s5 + $0x8] sm:$0xf]
        %v1181 = vld [vmem:[%s5 + $0xc] sm:$0xf]
        %v1186 = vunpack.c.l.b16 %v1178
        %v1187 = vunpack.c.l.b16 %v1179
        %v1188 = vunpack.c.l.b16 %v1180
        %v1189 = vunpack.c.l.b16 %v1181
        %v1190 = vpack.c.b16 %v1187, %v1186
        %v1191 = vpack.c.b16 %v1189, %v1188
        %v1195 = vsel %vm414, %v1175, 0
        %1197 = vmatprep.subr.bf16.mxu0 0
        %1198 = vmatpush1.bf16.msra.mxu0 0
        %1199 = vmatprep.subr.bf16.mxu0 0
        %1200 = vmatpush1.bf16.msra.mxu0 0
        %1201 = vmatprep.subr.bf16.mxu0 0
        %1202 = vmatpush1.bf16.msra.mxu0 0
        %1203 = vmatprep.subr.bf16.mxu0 0
        %1204 = vmatpush1.bf16.msra.mxu0 0
        %1205 = vmatprep.subr.bf16.mxu0 0
        %1206 = vmatpush1.bf16.msra.mxu0 0
        %1207 = vmatprep.subr.bf16.mxu0 0
        %1208 = vmatpush1.bf16.msra.mxu0 0
        %1209 = vmatprep.subr.bf16.mxu0 0
        %1210 = vmatpush1.bf16.msra.mxu0 %v1191
        %1211 = vmatprep.subr.bf16.mxu0 0
        %1212 = vmatpush1.bf16.msra.mxu0 %v1190
        %1213 = vmatprep.subr.bf16.mxu0 0
        %1214 = vmatpush2.bf16.msra.mxu0 0
        %1215 = vmatprep.subr.bf16.mxu0 0
        %1216 = vmatpush2.bf16.msra.mxu0 0
        %1217 = vmatprep.subr.bf16.mxu0 0
        %1218 = vmatpush2.bf16.msra.mxu0 0
        %1219 = vmatprep.subr.bf16.mxu0 0
        %1220 = vmatpush2.bf16.msra.mxu0 0
        %1221 = vmatprep.subr.bf16.mxu0 0
        %1222 = vmatpush2.bf16.msra.mxu0 0
        %1223 = vmatprep.subr.bf16.mxu0 0
        %1224 = vmatpush2.bf16.msra.mxu0 0
        %1225 = vmatprep.subr.bf16.mxu0 0
        %1226 = vmatpush2.bf16.msra.mxu0 0
        %1227 = vmatprep.subr.bf16.mxu0 0
        %1228 = vmatpush2.bf16.msra.mxu0 0
        %1229 = vmatprep.mubr.bf16.mxu0 0
        %1230 = vmatmul.mubr.bf16.gmra.mxu0 %v1195
        %v1231 = vpop.f32.mrf.mxu0
        %v1232 = vadd.f32 0.0, %v1231
        %v1233 = vpop.f32.mrf.mxu0
        %v1234 = vpop.f32.mrf.mxu0
        %v1235 = vadd.f32 0.0, %v1234
        %v1236 = vpop.f32.mrf.mxu0
        %1237 = vdwg.mxu0
        %v1238 = vadd.f32 %v1176, %v1232
        %v1239 = vadd.f32 %v1177, %v1235
        %1240 = vst.msk [vmem:[#allocation2] sm:$0xff] %vm498, %v1238
        %1241 = vst.msk [vmem:[#allocation2 + $0x8] sm:$0xff] %vm498, %v1239
        %v1242 = vld [vmem:[#allocation2] sm:$0xff]
        %v1243 = vld [vmem:[#allocation2 + $0x8] sm:$0xff]
        %v1244 = vmax.f32 %v1242, 0.0
        %v1245 = vmax.f32 %v1243, 0.0
        %v1246 = vpack.c.bf16 %v1245, %v1244
        %v1247 = vmul.bf16 %v1246, %v522
        %v1249 = vunpack.c.l.b16 %v1247
        %v1250 = vunpack.c.h.b16 %v1247
        %v1251 = vpack.c.b16 %v1249, %v1249
        %v1252 = vpack.c.b16 %v1250, %v1250
        %1255 = vst.msk [vmem:[#allocation3 + $0x4] sm:$0xf] %vm505, %v1251
        %1256 = vst.msk [vmem:[#allocation3 + $0x8] sm:$0xf] %vm505, %v1252
        %v1257 = vld [vmem:[#allocation3] sm:$0xe]
        %v1258 = vld [vmem:[#allocation3 + $0x4] sm:$0xf]
        %v1259 = vld [vmem:[#allocation3 + $0x8] sm:$0x3]
        %v1260 = vld [vmem:[#allocation3] sm:$0xc]
        %v1261 = vld [vmem:[#allocation3 + $0x8] sm:$0x7]
        %v1262 = vld [vmem:[#allocation3] sm:$0x8]
        %v1263 = vld [vmem:[#allocation3 + $0x8] sm:$0xf]
        %v1264 = vld [vmem:[#allocation3 + $0xc] sm:$0x1]
        %v1265 = vld [vmem:[#allocation3 + $0x4] sm:$0xe]
        %v1266 = vld [vmem:[#allocation3 + $0xc] sm:$0x3]
        %v1267 = vld [vmem:[#allocation3 + $0x4] sm:$0xc]
        %v1268 = vld [vmem:[#allocation3 + $0xc] sm:$0x7]
        %v1272 = vunpack.c.l.b16 %v1257
        %v1273 = vunpack.c.l.b16 %v1258
        %v1274 = vunpack.c.l.b16 %v1259
        %v1275 = vpack.c.b16 %v1273, %v1272
        %v1276 = vpack.c.b16 %v1274, %v1274
        %v1278 = vunpack.c.l.b16 %v1260
        %v1279 = vpack.c.b16 %v1273, %v1278
        %v1281 = vshrl.u32 %v1279, 16
        %v1283 = vshll.u32 %v1279, 16
        %v1285 = vrot.slane %v1283, 1
        %v1286 = vor.u32 %v1281, %v1285
        %v1288 = vshll.u32 %v1276, 16
        %v1290 = vrot.slane %v1288, 1
        %v1291 = vsel %vm561, %v1286, %v1290
        %v1292 = vshrl.u32 %v1276, 16
        %v1294 = vor.u32 %v1292, %v1290
        %1295 = vrot.lane.b32.xlu0 %v1291, 64
        %v1296 = vpop.permute.xlu0 %1295
        %1297 = vrot.lane.b32.xlu0 %v1294, 64
        %v1298 = vpop.permute.xlu0 %1297
        %v1300 = vunpack.c.l.b16 %v1261
        %v1301 = vpack.c.b16 %v1300, %v1300
        %v1302 = vrot.slane %v1279, 1
        %v1303 = vrot.slane %v1301, 1
        %v1304 = vsel %vm584, %v1302, %v1303
        %v1307 = vunpack.c.l.b16 %v1262
        %v1308 = vunpack.c.l.b16 %v1263
        %v1309 = vpack.c.b16 %v1273, %v1307
        %v1310 = vpack.c.b16 %v1308, %v1308
        %v1311 = vrot.slane %v1309, 2
        %v1312 = vrot.slane %v1310, 2
        %v1313 = vsel %vm594, %v1311, %v1312
        %1314 = vrot.lane.b32.xlu0 %v1313, 64
        %v1315 = vpop.permute.xlu0 %1314
        %1316 = vrot.lane.b32.xlu0 %v1312, 64
        %v1317 = vpop.permute.xlu0 %1316
        %v1318 = vpack.c.b16 %v1308, %v1273
        %v1320 = vshrl.u32 %v1318, 16
        %v1322 = vrot.slane %v1320, 6
        %v1323 = vshll.u32 %v1318, 16
        %v1325 = vrot.slane %v1323, 7
        %v1326 = vor.u32 %v1322, %v1325
        %v1328 = vunpack.c.l.b16 %v1264
        %v1329 = vpack.c.b16 %v1328, %v1328
        %v1330 = vrot.slane %v1318, 7
        %v1331 = vrot.slane %v1329, 7
        %v1332 = vsel %vm614, %v1330, %v1331
        %1333 = vrot.lane.b32.xlu0 %v1330, 64
        %v1334 = vpop.permute.xlu0 %1333
        %1335 = vrot.lane.b32.xlu0 %v1332, 64
        %v1336 = vpop.permute.xlu0 %1335
        %v1339 = vunpack.c.l.b16 %v1265
        %v1340 = vunpack.c.l.b16 %v1266
        %v1341 = vpack.c.b16 %v1308, %v1339
        %v1342 = vpack.c.b16 %v1340, %v1340
        %v1344 = vunpack.c.l.b16 %v1267
        %v1345 = vpack.c.b16 %v1308, %v1344
        %v1347 = vshrl.u32 %v1345, 16
        %v1349 = vshll.u32 %v1345, 16
        %v1351 = vrot.slane %v1349, 1
        %v1352 = vor.u32 %v1347, %v1351
        %v1354 = vshll.u32 %v1342, 16
        %v1356 = vrot.slane %v1354, 1
        %v1357 = vsel %vm561, %v1352, %v1356
        %v1358 = vshrl.u32 %v1342, 16
        %v1360 = vor.u32 %v1358, %v1356
        %1361 = vrot.lane.b32.xlu0 %v1357, 64
        %v1362 = vpop.permute.xlu0 %1361
        %1363 = vrot.lane.b32.xlu0 %v1360, 64
        %v1364 = vpop.permute.xlu0 %1363
        %v1366 = vunpack.c.l.b16 %v1268
        %v1367 = vpack.c.b16 %v1366, %v1366
        %v1368 = vrot.slane %v1345, 1
        %v1369 = vrot.slane %v1367, 1
        %v1370 = vsel %vm584, %v1368, %v1369
        %v1373 = vsel %vm498, %v1275, %v1296
        %v1375 = vsel %vm498, %v1276, %v1298
        %v1378 = vsel %vm498, %v1304, %v1315
        %v1381 = vsel %vm498, %v1303, %v1317
        %v1384 = vsel %vm498, %v1326, %v1334
        %v1386 = vsel %vm498, %v1326, %v1336
        %v1389 = vsel %vm498, %v1341, %v1362
        %v1391 = vsel %vm498, %v1342, %v1364
        %v1392 = vld [vmem:[%s4] sm:$0xf]
        %v1393 = vld [vmem:[%s4 + $0x4] sm:$0xf]
        %v1394 = vld [vmem:[%s4 + $0x8] sm:$0xf]
        %v1395 = vld [vmem:[%s4 + $0xc] sm:$0xf]
        %v1396 = vld [vmem:[%s4 + $0x10] sm:$0xf]
        %v1397 = vld [vmem:[%s4 + $0x14] sm:$0xf]
        %v1398 = vld [vmem:[%s4 + $0x18] sm:$0xf]
        %v1399 = vld [vmem:[%s4 + $0x1c] sm:$0xf]
        %v1400 = vld [vmem:[%s4 + $0x20] sm:$0xf]
        %v1401 = vld [vmem:[%s4 + $0x24] sm:$0xf]
        %v1402 = vld [vmem:[%s4 + $0x28] sm:$0xf]
        %v1403 = vld [vmem:[%s4 + $0x2c] sm:$0xf]
        %v1404 = vld [vmem:[%s4 + $0x30] sm:$0xf]
        %v1405 = vld [vmem:[%s4 + $0x34] sm:$0xf]
        %v1406 = vld [vmem:[%s4 + $0x38] sm:$0xf]
        %v1407 = vld [vmem:[%s4 + $0x3c] sm:$0xf]
        %v1408 = vld [vmem:[%s4 + $0x40] sm:$0xf]
        %v1409 = vld [vmem:[%s4 + $0x44] sm:$0xf]
        %v1410 = vld [vmem:[%s4 + $0x48] sm:$0xf]
        %v1411 = vld [vmem:[%s4 + $0x4c] sm:$0xf]
        %v1412 = vld [vmem:[%s4 + $0x50] sm:$0xf]
        %v1413 = vld [vmem:[%s4 + $0x54] sm:$0xf]
        %v1414 = vld [vmem:[%s4 + $0x58] sm:$0xf]
        %v1415 = vld [vmem:[%s4 + $0x5c] sm:$0xf]
        %v1416 = vld [vmem:[%s4 + $0x60] sm:$0xf]
        %v1417 = vld [vmem:[%s4 + $0x64] sm:$0xf]
        %v1418 = vld [vmem:[%s4 + $0x68] sm:$0xf]
        %v1419 = vld [vmem:[%s4 + $0x6c] sm:$0xf]
        %v1420 = vld [vmem:[%s4 + $0x70] sm:$0xf]
        %v1421 = vld [vmem:[%s4 + $0x74] sm:$0xf]
        %v1422 = vld [vmem:[%s4 + $0x78] sm:$0xf]
        %v1423 = vld [vmem:[%s4 + $0x7c] sm:$0xf]
        %v1424 = vld [vmem:[%s4 + $0x80] sm:$0xf]
        %v1425 = vld [vmem:[%s4 + $0x84] sm:$0xf]
        %v1426 = vld [vmem:[%s4 + $0x88] sm:$0xf]
        %v1427 = vld [vmem:[%s4 + $0x8c] sm:$0xf]
        %v1428 = vld [vmem:[%s4 + $0x90] sm:$0xf]
        %v1429 = vld [vmem:[%s4 + $0x94] sm:$0xf]
        %v1430 = vld [vmem:[%s4 + $0x98] sm:$0xf]
        %v1431 = vld [vmem:[%s4 + $0x9c] sm:$0xf]
        %v1432 = vld [vmem:[%s4 + $0xa0] sm:$0xf]
        %v1433 = vld [vmem:[%s4 + $0xa4] sm:$0xf]
        %v1434 = vld [vmem:[%s4 + $0xa8] sm:$0xf]
        %v1435 = vld [vmem:[%s4 + $0xac] sm:$0xf]
        %v1436 = vld [vmem:[%s4 + $0xb0] sm:$0xf]
        %v1437 = vld [vmem:[%s4 + $0xb4] sm:$0xf]
        %v1438 = vld [vmem:[%s4 + $0xb8] sm:$0xf]
        %v1439 = vld [vmem:[%s4 + $0xbc] sm:$0xf]
        %v1440 = vld [vmem:[%s4 + $0xc0] sm:$0xf]
        %v1441 = vld [vmem:[%s4 + $0xc4] sm:$0xf]
        %v1442 = vld [vmem:[%s4 + $0xc8] sm:$0xf]
        %v1443 = vld [vmem:[%s4 + $0xcc] sm:$0xf]
        %v1444 = vld [vmem:[%s4 + $0xd0] sm:$0xf]
        %v1445 = vld [vmem:[%s4 + $0xd4] sm:$0xf]
        %v1446 = vld [vmem:[%s4 + $0xd8] sm:$0xf]
        %v1447 = vld [vmem:[%s4 + $0xdc] sm:$0xf]
        %v1448 = vld [vmem:[%s4 + $0xe0] sm:$0xf]
        %v1449 = vld [vmem:[%s4 + $0xe4] sm:$0xf]
        %v1450 = vld [vmem:[%s4 + $0xe8] sm:$0xf]
        %v1451 = vld [vmem:[%s4 + $0xec] sm:$0xf]
        %v1452 = vld [vmem:[%s4 + $0xf0] sm:$0xf]
        %v1453 = vld [vmem:[%s4 + $0xf4] sm:$0xf]
        %v1454 = vld [vmem:[%s4 + $0xf8] sm:$0xf]
        %v1455 = vld [vmem:[%s4 + $0xfc] sm:$0xf]
        %v1456 = vld [vmem:[%s4 + $0x100] sm:$0xf]
        %v1457 = vld [vmem:[%s4 + $0x104] sm:$0xf]
        %v1458 = vld [vmem:[%s4 + $0x108] sm:$0xf]
        %v1459 = vld [vmem:[%s4 + $0x10c] sm:$0xf]
        %v1460 = vld [vmem:[%s4 + $0x110] sm:$0xf]
        %v1461 = vld [vmem:[%s4 + $0x114] sm:$0xf]
        %v1462 = vld [vmem:[%s4 + $0x118] sm:$0xf]
        %v1463 = vld [vmem:[%s4 + $0x11c] sm:$0xf]
        %v1464 = vshrl.u32 %v1373, 16
        %v1466 = vrot.slane %v1464, 1
        %v1467 = vshll.u32 %v1373, 16
        %v1469 = vrot.slane %v1467, 2
        %v1470 = vor.u32 %v1466, %v1469
        %v1471 = vshrl.u32 %v1375, 16
        %v1473 = vrot.slane %v1471, 1
        %v1474 = vshll.u32 %v1375, 16
        %v1476 = vrot.slane %v1474, 2
        %v1477 = vor.u32 %v1473, %v1476
        %v1478 = vsel %vm749, %v1470, %v1477
        %v1479 = vshrl.u32 %v1378, 16
        %v1481 = vrot.slane %v1479, 1
        %v1482 = vshll.u32 %v1378, 16
        %v1484 = vrot.slane %v1482, 2
        %v1485 = vor.u32 %v1481, %v1484
        %v1486 = vshrl.u32 %v1381, 16
        %v1488 = vrot.slane %v1486, 1
        %v1489 = vshll.u32 %v1381, 16
        %v1491 = vrot.slane %v1489, 2
        %v1492 = vor.u32 %v1488, %v1491
        %v1493 = vsel %vm749, %v1485, %v1492
        %v1494 = vshrl.u32 %v1384, 16
        %v1496 = vrot.slane %v1494, 1
        %v1497 = vshll.u32 %v1384, 16
        %v1499 = vrot.slane %v1497, 2
        %v1500 = vor.u32 %v1496, %v1499
        %v1501 = vshrl.u32 %v1386, 16
        %v1503 = vrot.slane %v1501, 1
        %v1504 = vshll.u32 %v1386, 16
        %v1506 = vrot.slane %v1504, 2
        %v1507 = vor.u32 %v1503, %v1506
        %v1508 = vsel %vm749, %v1500, %v1507
        %v1509 = vshrl.u32 %v1389, 16
        %v1511 = vrot.slane %v1509, 1
        %v1512 = vshll.u32 %v1389, 16
        %v1514 = vrot.slane %v1512, 2
        %v1515 = vor.u32 %v1511, %v1514
        %v1516 = vshrl.u32 %v1391, 16
        %v1518 = vrot.slane %v1516, 1
        %v1519 = vshll.u32 %v1391, 16
        %v1521 = vrot.slane %v1519, 2
        %v1522 = vor.u32 %v1518, %v1521
        %v1523 = vsel %vm749, %v1515, %v1522
        %v1525 = vshrl.u32 %v1370, 16
        %v1527 = vrot.slane %v1525, 1
        %v1528 = vshll.u32 %v1370, 16
        %v1530 = vrot.slane %v1528, 2
        %v1531 = vor.u32 %v1527, %v1530
        %v1533 = vshrl.u32 %v1369, 16
        %v1535 = vrot.slane %v1533, 1
        %v1536 = vshll.u32 %v1369, 16
        %v1538 = vrot.slane %v1536, 2
        %v1539 = vor.u32 %v1535, %v1538
        %v1540 = vsel %vm749, %v1531, %v1539
        %v1617 = vunpack.c.l.b16 %v1392
        %v1618 = vunpack.c.l.b16 %v1393
        %v1619 = vunpack.c.l.b16 %v1394
        %v1620 = vunpack.c.l.b16 %v1395
        %v1621 = vunpack.c.l.b16 %v1396
        %v1622 = vunpack.c.l.b16 %v1397
        %v1623 = vunpack.c.l.b16 %v1398
        %v1624 = vunpack.c.l.b16 %v1399
        %v1625 = vunpack.c.l.b16 %v1400
        %v1626 = vunpack.c.l.b16 %v1401
        %v1627 = vunpack.c.l.b16 %v1402
        %v1628 = vunpack.c.l.b16 %v1403
        %v1629 = vunpack.c.l.b16 %v1404
        %v1630 = vunpack.c.l.b16 %v1405
        %v1631 = vunpack.c.l.b16 %v1406
        %v1632 = vunpack.c.l.b16 %v1407
        %v1633 = vunpack.c.l.b16 %v1408
        %v1634 = vunpack.c.l.b16 %v1409
        %v1635 = vunpack.c.l.b16 %v1410
        %v1636 = vunpack.c.l.b16 %v1411
        %v1637 = vunpack.c.l.b16 %v1412
        %v1638 = vunpack.c.l.b16 %v1413
        %v1639 = vunpack.c.l.b16 %v1414
        %v1640 = vunpack.c.l.b16 %v1415
        %v1641 = vunpack.c.l.b16 %v1416
        %v1642 = vunpack.c.l.b16 %v1417
        %v1643 = vunpack.c.l.b16 %v1418
        %v1644 = vunpack.c.l.b16 %v1419
        %v1645 = vunpack.c.l.b16 %v1420
        %v1646 = vunpack.c.l.b16 %v1421
        %v1647 = vunpack.c.l.b16 %v1422
        %v1648 = vunpack.c.l.b16 %v1423
        %v1649 = vunpack.c.l.b16 %v1424
        %v1650 = vunpack.c.l.b16 %v1425
        %v1651 = vunpack.c.l.b16 %v1426
        %v1652 = vunpack.c.l.b16 %v1427
        %v1653 = vunpack.c.l.b16 %v1428
        %v1654 = vunpack.c.l.b16 %v1429
        %v1655 = vunpack.c.l.b16 %v1430
        %v1656 = vunpack.c.l.b16 %v1431
        %v1657 = vunpack.c.l.b16 %v1432
        %v1658 = vunpack.c.l.b16 %v1433
        %v1659 = vunpack.c.l.b16 %v1434
        %v1660 = vunpack.c.l.b16 %v1435
        %v1661 = vunpack.c.l.b16 %v1436
        %v1662 = vunpack.c.l.b16 %v1437
        %v1663 = vunpack.c.l.b16 %v1438
        %v1664 = vunpack.c.l.b16 %v1439
        %v1665 = vunpack.c.l.b16 %v1440
        %v1666 = vunpack.c.l.b16 %v1441
        %v1667 = vunpack.c.l.b16 %v1442
        %v1668 = vunpack.c.l.b16 %v1443
        %v1669 = vunpack.c.l.b16 %v1444
        %v1670 = vunpack.c.l.b16 %v1445
        %v1671 = vunpack.c.l.b16 %v1446
        %v1672 = vunpack.c.l.b16 %v1447
        %v1673 = vunpack.c.l.b16 %v1448
        %v1674 = vunpack.c.l.b16 %v1449
        %v1675 = vunpack.c.l.b16 %v1450
        %v1676 = vunpack.c.l.b16 %v1451
        %v1677 = vunpack.c.l.b16 %v1452
        %v1678 = vunpack.c.l.b16 %v1453
        %v1679 = vunpack.c.l.b16 %v1454
        %v1680 = vunpack.c.l.b16 %v1455
        %v1681 = vunpack.c.l.b16 %v1456
        %v1682 = vunpack.c.l.b16 %v1457
        %v1683 = vunpack.c.l.b16 %v1458
        %v1684 = vunpack.c.l.b16 %v1459
        %v1685 = vunpack.c.l.b16 %v1460
        %v1686 = vunpack.c.l.b16 %v1461
        %v1687 = vunpack.c.l.b16 %v1462
        %v1688 = vunpack.c.l.b16 %v1463
        %v1689 = vpack.c.b16 %v1618, %v1617
        %v1690 = vpack.c.b16 %v1620, %v1619
        %v1691 = vpack.c.b16 %v1622, %v1621
        %v1692 = vpack.c.b16 %v1624, %v1623
        %v1693 = vpack.c.b16 %v1626, %v1625
        %v1694 = vpack.c.b16 %v1628, %v1627
        %v1695 = vpack.c.b16 %v1630, %v1629
        %v1696 = vpack.c.b16 %v1632, %v1631
        %v1697 = vpack.c.b16 %v1634, %v1633
        %v1698 = vpack.c.b16 %v1636, %v1635
        %v1699 = vpack.c.b16 %v1638, %v1637
        %v1700 = vpack.c.b16 %v1640, %v1639
        %v1701 = vpack.c.b16 %v1642, %v1641
        %v1702 = vpack.c.b16 %v1644, %v1643
        %v1703 = vpack.c.b16 %v1646, %v1645
        %v1704 = vpack.c.b16 %v1648, %v1647
        %v1705 = vpack.c.b16 %v1650, %v1649
        %v1706 = vpack.c.b16 %v1652, %v1651
        %v1707 = vpack.c.b16 %v1654, %v1653
        %v1708 = vpack.c.b16 %v1656, %v1655
        %v1709 = vpack.c.b16 %v1658, %v1657
        %v1710 = vpack.c.b16 %v1660, %v1659
        %v1711 = vpack.c.b16 %v1662, %v1661
        %v1712 = vpack.c.b16 %v1664, %v1663
        %v1713 = vpack.c.b16 %v1666, %v1665
        %v1714 = vpack.c.b16 %v1668, %v1667
        %v1715 = vpack.c.b16 %v1670, %v1669
        %v1716 = vpack.c.b16 %v1672, %v1671
        %v1717 = vpack.c.b16 %v1674, %v1673
        %v1718 = vpack.c.b16 %v1676, %v1675
        %v1719 = vpack.c.b16 %v1678, %v1677
        %v1720 = vpack.c.b16 %v1680, %v1679
        %v1721 = vpack.c.b16 %v1682, %v1681
        %v1722 = vpack.c.b16 %v1684, %v1683
        %v1723 = vpack.c.b16 %v1686, %v1685
        %v1724 = vpack.c.b16 %v1688, %v1687
        %v1762 = vsel %vm498, %v1540, 0
        %1764 = vmatprep.subr.bf16.mxu0 0
        %1765 = vmatpush1.bf16.msra.mxu0 %v1696
        %1766 = vmatprep.subr.bf16.mxu0 0
        %1767 = vmatpush1.bf16.msra.mxu0 %v1695
        %1768 = vmatprep.subr.bf16.mxu0 0
        %1769 = vmatpush1.bf16.msra.mxu0 %v1694
        %1770 = vmatprep.subr.bf16.mxu0 0
        %1771 = vmatpush1.bf16.msra.mxu0 %v1693
        %1772 = vmatprep.subr.bf16.mxu0 0
        %1773 = vmatpush1.bf16.msra.mxu0 %v1692
        %1774 = vmatprep.subr.bf16.mxu0 0
        %1775 = vmatpush1.bf16.msra.mxu0 %v1691
        %1776 = vmatprep.subr.bf16.mxu0 0
        %1777 = vmatpush1.bf16.msra.mxu0 %v1690
        %1778 = vmatprep.subr.bf16.mxu0 0
        %1779 = vmatpush1.bf16.msra.mxu0 %v1689
        %1780 = vmatprep.subr.bf16.mxu0 0
        %1781 = vmatpush2.bf16.msra.mxu0 %v1704
        %1782 = vmatprep.subr.bf16.mxu0 0
        %1783 = vmatpush2.bf16.msra.mxu0 %v1703
        %1784 = vmatprep.subr.bf16.mxu0 0
        %1785 = vmatpush2.bf16.msra.mxu0 %v1702
        %1786 = vmatprep.subr.bf16.mxu0 0
        %1787 = vmatpush2.bf16.msra.mxu0 %v1701
        %1788 = vmatprep.subr.bf16.mxu0 0
        %1789 = vmatpush2.bf16.msra.mxu0 %v1700
        %1790 = vmatprep.subr.bf16.mxu0 0
        %1791 = vmatpush2.bf16.msra.mxu0 %v1699
        %1792 = vmatprep.subr.bf16.mxu0 0
        %1793 = vmatpush2.bf16.msra.mxu0 %v1698
        %1794 = vmatprep.subr.bf16.mxu0 0
        %1795 = vmatpush2.bf16.msra.mxu0 %v1697
        %1796 = vmatprep.mubr.bf16.mxu0 %v1493
        %1797 = vmatmul.mubr.bf16.gmra.mxu0 %v1478
        %v1798 = vpop.f32.mrf.mxu0
        %v1799 = vadd.f32 0.0, %v1798
        %v1800 = vpop.f32.mrf.mxu0
        %v1801 = vpop.f32.mrf.mxu0
        %v1802 = vadd.f32 0.0, %v1801
        %v1803 = vpop.f32.mrf.mxu0
        %1804 = vdwg.mxu0
        %1805 = vmatprep.subr.bf16.mxu0 0
        %1806 = vmatpush1.bf16.msra.mxu0 %v1712
        %1807 = vmatprep.subr.bf16.mxu0 0
        %1808 = vmatpush1.bf16.msra.mxu0 %v1711
        %1809 = vmatprep.subr.bf16.mxu0 0
        %1810 = vmatpush1.bf16.msra.mxu0 %v1710
        %1811 = vmatprep.subr.bf16.mxu0 0
        %1812 = vmatpush1.bf16.msra.mxu0 %v1709
        %1813 = vmatprep.subr.bf16.mxu0 0
        %1814 = vmatpush1.bf16.msra.mxu0 %v1708
        %1815 = vmatprep.subr.bf16.mxu0 0
        %1816 = vmatpush1.bf16.msra.mxu0 %v1707
        %1817 = vmatprep.subr.bf16.mxu0 0
        %1818 = vmatpush1.bf16.msra.mxu0 %v1706
        %1819 = vmatprep.subr.bf16.mxu0 0
        %1820 = vmatpush1.bf16.msra.mxu0 %v1705
        %1821 = vmatprep.subr.bf16.mxu0 0
        %1822 = vmatpush2.bf16.msra.mxu0 %v1720
        %1823 = vmatprep.subr.bf16.mxu0 0
        %1824 = vmatpush2.bf16.msra.mxu0 %v1719
        %1825 = vmatprep.subr.bf16.mxu0 0
        %1826 = vmatpush2.bf16.msra.mxu0 %v1718
        %1827 = vmatprep.subr.bf16.mxu0 0
        %1828 = vmatpush2.bf16.msra.mxu0 %v1717
        %1829 = vmatprep.subr.bf16.mxu0 0
        %1830 = vmatpush2.bf16.msra.mxu0 %v1716
        %1831 = vmatprep.subr.bf16.mxu0 0
        %1832 = vmatpush2.bf16.msra.mxu0 %v1715
        %1833 = vmatprep.subr.bf16.mxu0 0
        %1834 = vmatpush2.bf16.msra.mxu0 %v1714
        %1835 = vmatprep.subr.bf16.mxu0 0
        %1836 = vmatpush2.bf16.msra.mxu0 %v1713
        %1837 = vmatprep.mubr.bf16.mxu0 %v1523
        %1838 = vmatmul.mubr.bf16.gmra.mxu0 %v1508
        %v1839 = vpop.f32.mrf.mxu0
        %v1840 = vadd.f32 %v1799, %v1839
        %v1841 = vpop.f32.mrf.mxu0
        %v1842 = vpop.f32.mrf.mxu0
        %v1843 = vadd.f32 %v1802, %v1842
        %v1844 = vpop.f32.mrf.mxu0
        %1845 = vdwg.mxu0
        %1846 = vmatprep.subr.bf16.mxu0 0
        %1847 = vmatpush1.bf16.msra.mxu0 0
        %1848 = vmatprep.subr.bf16.mxu0 0
        %1849 = vmatpush1.bf16.msra.mxu0 0
        %1850 = vmatprep.subr.bf16.mxu0 0
        %1851 = vmatpush1.bf16.msra.mxu0 0
        %1852 = vmatprep.subr.bf16.mxu0 0
        %1853 = vmatpush1.bf16.msra.mxu0 0
        %1854 = vmatprep.subr.bf16.mxu0 0
        %1855 = vmatpush1.bf16.msra.mxu0 %v1724
        %1856 = vmatprep.subr.bf16.mxu0 0
        %1857 = vmatpush1.bf16.msra.mxu0 %v1723
        %1858 = vmatprep.subr.bf16.mxu0 0
        %1859 = vmatpush1.bf16.msra.mxu0 %v1722
        %1860 = vmatprep.subr.bf16.mxu0 0
        %1861 = vmatpush1.bf16.msra.mxu0 %v1721
        %1862 = vmatprep.subr.bf16.mxu0 0
        %1863 = vmatpush2.bf16.msra.mxu0 0
        %1864 = vmatprep.subr.bf16.mxu0 0
        %1865 = vmatpush2.bf16.msra.mxu0 0
        %1866 = vmatprep.subr.bf16.mxu0 0
        %1867 = vmatpush2.bf16.msra.mxu0 0
        %1868 = vmatprep.subr.bf16.mxu0 0
        %1869 = vmatpush2.bf16.msra.mxu0 0
        %1870 = vmatprep.subr.bf16.mxu0 0
        %1871 = vmatpush2.bf16.msra.mxu0 0
        %1872 = vmatprep.subr.bf16.mxu0 0
        %1873 = vmatpush2.bf16.msra.mxu0 0
        %1874 = vmatprep.subr.bf16.mxu0 0
        %1875 = vmatpush2.bf16.msra.mxu0 0
        %1876 = vmatprep.subr.bf16.mxu0 0
        %1877 = vmatpush2.bf16.msra.mxu0 0
        %1878 = vmatprep.mubr.bf16.mxu0 0
        %1879 = vmatmul.mubr.bf16.gmra.mxu0 %v1762
        %v1880 = vpop.f32.mrf.mxu0
        %v1881 = vadd.f32 %v1840, %v1880
        %v1882 = vpop.f32.mrf.mxu0
        %v1883 = vpop.f32.mrf.mxu0
        %v1884 = vadd.f32 %v1843, %v1883
        %v1885 = vpop.f32.mrf.mxu0
        %1886 = vdwg.mxu0
        %v1887 = vmax.f32 %v1881, 0.0
        %v1888 = vmax.f32 %v1884, 0.0
        %v1889 = vpack.c.bf16 %v1888, %v1887
        %v1890 = vld [vmem:[#allocation2] sm:$0xff]
        %v1891 = vld [vmem:[#allocation2 + $0x8] sm:$0xff]
        %v1892 = vld [vmem:[%s5] sm:$0xf]
        %v1893 = vld [vmem:[%s5 + $0x4] sm:$0xf]
        %v1894 = vld [vmem:[%s5 + $0x8] sm:$0xf]
        %v1895 = vld [vmem:[%s5 + $0xc] sm:$0xf]
        %v1900 = vunpack.c.l.b16 %v1892
        %v1901 = vunpack.c.l.b16 %v1893
        %v1902 = vunpack.c.l.b16 %v1894
        %v1903 = vunpack.c.l.b16 %v1895
        %v1904 = vpack.c.b16 %v1901, %v1900
        %v1905 = vpack.c.b16 %v1903, %v1902
        %v1909 = vsel %vm414, %v1889, 0
        %1911 = vmatprep.subr.bf16.mxu0 0
        %1912 = vmatpush1.bf16.msra.mxu0 0
        %1913 = vmatprep.subr.bf16.mxu0 0
        %1914 = vmatpush1.bf16.msra.mxu0 0
        %1915 = vmatprep.subr.bf16.mxu0 0
        %1916 = vmatpush1.bf16.msra.mxu0 0
        %1917 = vmatprep.subr.bf16.mxu0 0
        %1918 = vmatpush1.bf16.msra.mxu0 0
        %1919 = vmatprep.subr.bf16.mxu0 0
        %1920 = vmatpush1.bf16.msra.mxu0 0
        %1921 = vmatprep.subr.bf16.mxu0 0
        %1922 = vmatpush1.bf16.msra.mxu0 0
        %1923 = vmatprep.subr.bf16.mxu0 0
        %1924 = vmatpush1.bf16.msra.mxu0 %v1905
        %1925 = vmatprep.subr.bf16.mxu0 0
        %1926 = vmatpush1.bf16.msra.mxu0 %v1904
        %1927 = vmatprep.subr.bf16.mxu0 0
        %1928 = vmatpush2.bf16.msra.mxu0 0
        %1929 = vmatprep.subr.bf16.mxu0 0
        %1930 = vmatpush2.bf16.msra.mxu0 0
        %1931 = vmatprep.subr.bf16.mxu0 0
        %1932 = vmatpush2.bf16.msra.mxu0 0
        %1933 = vmatprep.subr.bf16.mxu0 0
        %1934 = vmatpush2.bf16.msra.mxu0 0
        %1935 = vmatprep.subr.bf16.mxu0 0
        %1936 = vmatpush2.bf16.msra.mxu0 0
        %1937 = vmatprep.subr.bf16.mxu0 0
        %1938 = vmatpush2.bf16.msra.mxu0 0
        %1939 = vmatprep.subr.bf16.mxu0 0
        %1940 = vmatpush2.bf16.msra.mxu0 0
        %1941 = vmatprep.subr.bf16.mxu0 0
        %1942 = vmatpush2.bf16.msra.mxu0 0
        %1943 = vmatprep.mubr.bf16.mxu0 0
        %1944 = vmatmul.mubr.bf16.gmra.mxu0 %v1909
        %v1945 = vpop.f32.mrf.mxu0
        %v1946 = vadd.f32 0.0, %v1945
        %v1947 = vpop.f32.mrf.mxu0
        %v1948 = vpop.f32.mrf.mxu0
        %v1949 = vadd.f32 0.0, %v1948
        %v1950 = vpop.f32.mrf.mxu0
        %1951 = vdwg.mxu0
        %v1952 = vadd.f32 %v1890, %v1946
        %v1953 = vadd.f32 %v1891, %v1949
        %1954 = vst.msk [vmem:[#allocation2] sm:$0xff] %vm498, %v1952
        %1955 = vst.msk [vmem:[#allocation2 + $0x8] sm:$0xff] %vm498, %v1953
        %v1956 = vld [vmem:[#allocation2] sm:$0xff]
        %v1957 = vld [vmem:[#allocation2 + $0x8] sm:$0xff]
        %v1958 = vmax.f32 %v1956, 0.0
        %v1959 = vmax.f32 %v1957, 0.0
        %v1961 = vrot.slane %v1958, 5
        %v1964 = vrot.slane %v1959, 7
        %vm1966 = vcmask 1041408
        %v1967 = vsel %vm1966, %v1961, %v1964
        %1968 = vst.msk [vmem:[%s244] sm:$0xf] %vm505, %v1967
        %s1969 = sand.u32 %s159, 1
        %s1970 = scalar_lea.sflag [#allocation5], %s1969
        %s1971 = sand.u32 %s159, 1
        %s1972 = smul.addr %s1971, 4
        %s1973 = scalar_lea.vmem [#allocation4], %s1972
        // Predicated region
        $region45: #{encoder_forward.5} parent=43 // pred_check
          %p1974 = pneg %p169
        $region46: #{encoder_forward.5} parent=43 // pred_check_branch
          %1976 = sbr.rel (%p1974) target = $region48
        $region47: #{encoder_forward.5} parent=43 // pred_region
          %s1978 = ssub.s32 64, 64
          %1979 = vsyncadd %s1970, %s1978
          %s1980 = smul.addr %s20, 64
          %s1981 = scalar_lea.hbm %s6, %s1980
          %s1983 = sshll.u32 %s1973, 4
          %s1984 = int_to_ptr.vmem [resolvable:$true] %s1983
          %1986 = dma.vmem_to_hbm [thread:$0]  %s1984, 64, %s1981, %s1970
        $region48: #{encoder_forward.5} parent=43 // pred_fallthru
          _
      $region44: #{encoder_forward.5} parent=5 // pred_fallthru
        _
      %p1987 = scmp.le.s32.totalorder 2, %s15
      // Predicated region
      $region49: #{encoder_forward.5} parent=5 // pred_check
        %p1988 = pneg %p1987
      $region50: #{encoder_forward.5} parent=5 // pred_check_branch
        %1990 = sbr.rel (%p1988) target = $region52
      $region51: #{encoder_forward.5} parent=5 // pred_region
        %s1991 = ssub.s32 %s15, 2
        // Predicated region
        $region53: #{encoder_forward.5} parent=51 // pred_check
          %p1992 = pneg %p175
        $region54: #{encoder_forward.5} parent=51 // pred_check_branch
          %1994 = sbr.rel (%p1992) target = $region56
        $region55: #{encoder_forward.5} parent=51 // pred_region
          %s1995 = sand.u32 %s160, 1
          %s1996 = scalar_lea.sflag [#allocation5], %s1995
          %s1997 = sand.u32 %s160, 1
          %s1998 = smul.addr %s1997, 4
          %s1999 = scalar_lea.vmem [#allocation4], %s1998
          %2000 = dma.done %s1996, 64
        $region56: #{encoder_forward.5} parent=51 // pred_fallthru
          _
      $region52: #{encoder_forward.5} parent=5 // pred_fallthru
        _
    $region6: #{encoder_forward.5} parent=1 // loop_footer
      %s19 = sadd.s32 1, %s15
    $region7: #{encoder_forward.5} parent=1 // loop_footer_branch
      %14 = sbr.rel target = $region3
    $region8: #{encoder_forward.5} parent=1 // loop_exit
      _
    %2001 = vsyncpa [#allocation5], 1
    %s2002 = scalar_lea.sflag [#allocation5], 1
    %2003 = vsyncpa %s2002, 1

</llo_original>
